<compile_context>
chip_gen: v7x
topology: tpu7x:2x2x1
jax: 0.10.0
libtpu: 0.0.40
codegen_flags: <defaults>
</compile_context>

<pallas_src>
import functools

import jax
import jax.numpy as jnp
from jax.experimental import pallas as pl
from jax.experimental.pallas import tpu as pltpu

_C = 64      # conv channels
_K = 5       # conv kernel size
_PAD = 2     # "same" padding


def _sigmoid(y):
    # tanh-form sigmoid: identical to 1/(1+exp(-y)), keeps the divide off the VPU.
    return 0.5 * jnp.tanh(0.5 * y) + 0.5


# ----------------------------------------------------------------------------
# Fused Pallas kernel: conv1 + conv2 + flatten + fc1 + fc2 for `bb` batch rows.
# ----------------------------------------------------------------------------
def _cnn_wen_kernel(x_ref, mask_ref, w1_ref, b1_ref, w2_ref, b2_ref,
                    w3_ref, b3_ref, w4_ref, b4_ref, o_ref,
                    h1_ref, h2_ref, flat_ref, *, bb, L):
    """In-kernel layouts (channels on sublanes, slab positions on lanes):
         x_ref   : (1, 1, S)   zero-padded input slab, S = bb*(L+4)
         h1_ref  : (64, S)     zero-padded sigmoid(conv1) slab
         h2_ref  : (64, W)     sigmoid(conv2), W = S - 4
         flat_ref: (bb, 64*L)  torch-order flatten, lane-dense fc1 input
    """
    seg = L + 2 * _PAD          # per-sample segment length inside the slab
    S = bb * seg
    W = S - 2 * _PAD            # conv output width over the whole slab

    xs = x_ref[0]               # (1, S)

    # --- conv1 (C_in = 1): five broadcast multiply-adds over the slab (VPU) --
    acc1 = w1_ref[:, 0:1] * xs[:, 0:W]
    for k in range(1, _K):
        acc1 = acc1 + w1_ref[:, k:k + 1] * xs[:, k:k + W]
    acc1 = acc1 + b1_ref[...]                          # (64,1) broadcast

    # sigmoid, then zero the inter-sample gap columns so conv2's window never
    # mixes neighbouring samples; the slab edges stay zero from the init.
    h1_ref[...] = jnp.zeros_like(h1_ref)
    h1_ref[:, _PAD:_PAD + W] = _sigmoid(acc1) * mask_ref[...]

    # --- conv2 (64->64): five shifted (64,64)@(64,W) MXU matmuls -------------
    acc2 = jnp.dot(w2_ref[0], h1_ref[:, 0:W], preferred_element_type=jnp.float32)
    for k in range(1, _K):
        acc2 = acc2 + jnp.dot(w2_ref[k], h1_ref[:, k:k + W],
                              preferred_element_type=jnp.float32)
    h2_ref[...] = _sigmoid(acc2 + b2_ref[...])         # (64, W)

    # --- flatten == torch x.view(B,-1) on (B,64,L): channel-major rows ------
    # written into the lane-dense flat buffer (VMEM-only copies).
    for b in range(bb):
        src = b * seg
        for c in range(_C):
            flat_ref[b:b + 1, c * L:(c + 1) * L] = h2_ref[c:c + 1, src:src + L]

    # --- fc1 (+ sigmoid) and fc2: two lane-dense MXU matmuls -----------------
    h3 = _sigmoid(jnp.dot(flat_ref[...], w3_ref[...],
                          preferred_element_type=jnp.float32) + b3_ref[...])
    out = jnp.dot(h3, w4_ref[...], preferred_element_type=jnp.float32) + b4_ref[...]
    o_ref[...] = out.astype(o_ref.dtype)


# ----------------------------------------------------------------------------
# Wrapper: grid over batch blocks, whole (small) weights resident in VMEM.
# ----------------------------------------------------------------------------
def cnn_wen_forward(prep, x_ncl):
    """prep: kernel-layout params (prepare_kernel_params); x_ncl: (B, 1, L)."""
    B, c_in, L = x_ncl.shape
    assert c_in == 1
    H = prep["w3"].shape[1]          # fc1 hidden size (128)
    F = prep["w4"].shape[1]          # forecast_step
    x2d = x_ncl.reshape(B, L).astype(jnp.float32)

    # Batch tile: whole batch when small; 8-row blocks (megacore-parallel) when
    # large.  Pad the batch to a multiple of the block and slice the output.
    bb = B if B <= 8 else 8
    Bp = -(-B // bb) * bb
    if Bp != B:
        x2d = jnp.pad(x2d, ((0, Bp - B), (0, 0)))
    nblk = Bp // bb

    seg = L + 2 * _PAD
    S = bb * seg
    W = S - 2 * _PAD

    # Input slab built once in XLA (pad + reshape are free-ish).
    x_slab = jnp.pad(x2d, ((0, 0), (_PAD, _PAD))).reshape(nblk, 1, S)

    # Mask of "interior" conv-output columns (zeros at inter-sample gaps).
    pos = jnp.arange(W, dtype=jnp.int32) + _PAD
    mask = (((pos % seg) >= _PAD) & ((pos % seg) < _PAD + L)).astype(jnp.float32)
    mask = mask.reshape(1, W)

    kernel = functools.partial(_cnn_wen_kernel, bb=bb, L=L)
    out = pl.pallas_call(
        kernel,
        out_shape=jax.ShapeDtypeStruct((Bp, F), jnp.float32),
        grid_spec=pltpu.PrefetchScalarGridSpec(
            num_scalar_prefetch=0,
            grid=(nblk,),
            in_specs=[
                pl.BlockSpec((1, 1, S), lambda i: (i, 0, 0)),       # x slab
                pl.BlockSpec((1, W), lambda i: (0, 0)),             # gap mask
                pl.BlockSpec((_C, _K), lambda i: (0, 0)),           # w1 (o,k)
                pl.BlockSpec((_C, 1), lambda i: (0, 0)),            # b1
                pl.BlockSpec((_K, _C, _C), lambda i: (0, 0, 0)),    # w2 (k,o,c)
                pl.BlockSpec((_C, 1), lambda i: (0, 0)),            # b2
                pl.BlockSpec((_C * L, H), lambda i: (0, 0)),        # w3^T
                pl.BlockSpec((1, H), lambda i: (0, 0)),             # b3
                pl.BlockSpec((H, F), lambda i: (0, 0)),             # w4^T
                pl.BlockSpec((1, F), lambda i: (0, 0)),             # b4
            ],
            out_specs=pl.BlockSpec((bb, F), lambda i: (i, 0)),
            scratch_shapes=[
                pltpu.VMEM((_C, S), jnp.float32),        # h1 slab (padded)
                pltpu.VMEM((_C, W), jnp.float32),        # h2 = sigmoid(conv2)
                pltpu.VMEM((bb, _C * L), jnp.float32),   # torch-order flatten
            ],
        ),
        compiler_params=pltpu.CompilerParams(
            dimension_semantics=("parallel",)),
    )(x_slab, mask, prep["w1"], prep["b1"], prep["w2"], prep["b2"],
      prep["w3"], prep["b3"], prep["w4"], prep["b4"])
    return out[:B]


# ----------------------------------------------------------------------------
# Parameters: PyTorch layout + one-time conversion to kernel layout.
# ----------------------------------------------------------------------------
def init_params(key, forecast_step, windowlen):
    ks = jax.random.split(key, 8)
    scale = 0.1
    return {
        "w1": jax.random.normal(ks[0], (64, 1, 5), jnp.float32) * scale,   # Conv1d(1,64,5)
        "b1": jax.random.normal(ks[1], (64,), jnp.float32) * scale,
        "w2": jax.random.normal(ks[2], (64, 64, 5), jnp.float32) * scale,  # Conv1d(64,64,5)
        "b2": jax.random.normal(ks[3], (64,), jnp.float32) * scale,
        "w3": jax.random.normal(ks[4], (128, 64 * windowlen), jnp.float32) * scale,
        "b3": jax.random.normal(ks[5], (128,), jnp.float32) * scale,
        "w4": jax.random.normal(ks[6], (forecast_step, 128), jnp.float32) * scale,
        "b4": jax.random.normal(ks[7], (forecast_step,), jnp.float32) * scale,
    }


def prepare_kernel_params(params):
    """One-time layout conversion (free at inference time)."""
    return {
        "w1": params["w1"][:, 0, :],                    # (64, 5)      [o, k]
        "b1": params["b1"].reshape(_C, 1),
        "w2": jnp.transpose(params["w2"], (2, 0, 1)),   # (5, 64, 64)  [k, o, c]
        "b2": params["b2"].reshape(_C, 1),
        "w3": params["w3"].T,                           # (64*L, 128)
        "b3": params["b3"].reshape(1, -1),
        "w4": params["w4"].T,                           # (128, F)
        "b4": params["b4"].reshape(1, -1),
    }


# ----------------------------------------------------------------------------
# Pure-JAX reference (sanity check only).
# ----------------------------------------------------------------------------
def cnn_wen_reference(params, x_ncl):
    def conv1d_same(x, w, b):
        y = jax.lax.conv_general_dilated(
            x, w, window_strides=(1,), padding=((2, 2),),
            dimension_numbers=("NCH", "OIH", "NCH"))
        return y + b[None, :, None]

    def sigmoid(z):
        return 1.0 / (1.0 + jnp.exp(-z))

    h1 = sigmoid(conv1d_same(x_ncl, params["w1"], params["b1"]))
    h2 = sigmoid(conv1d_same(h1, params["w2"], params["b2"]))
    flat = h2.reshape(h2.shape[0], -1)
    h3 = sigmoid(flat @ params["w3"].T + params["b3"])
    return h3 @ params["w4"].T + params["b4"]


if __name__ == "__main__":
    forecast_step = 4
    windowlen = 16
    batch = 2

    key = jax.random.PRNGKey(0)
    k_params, k_x = jax.random.split(key)
    params = init_params(k_params, forecast_step, windowlen)
    prep = prepare_kernel_params(params)
    x = jax.random.normal(k_x, (batch, 1, windowlen), jnp.float32)

    out = jax.block_until_ready(jax.jit(cnn_wen_forward)(prep, x))
    ref = jax.block_until_ready(cnn_wen_reference(params, x))

    assert out.shape == (batch, forecast_step)
    assert jnp.allclose(out, ref, atol=1e-3, rtol=1e-3), "mismatch vs reference"
    print("KERNEL_OK")
</pallas_src>

<mosaic_0001>
module attributes {stable_mosaic.version = 11 : i64} {
  func.func @_cnn_wen_kernel(%arg0: i32, %arg1: memref<1x1x40xf32, #tpu.memory_space<vmem>>, %arg2: memref<1x36xf32, #tpu.memory_space<vmem>>, %arg3: memref<64x5xf32, #tpu.memory_space<vmem>>, %arg4: memref<64x1xf32, #tpu.memory_space<vmem>>, %arg5: memref<5x64x64xf32, #tpu.memory_space<vmem>>, %arg6: memref<64x1xf32, #tpu.memory_space<vmem>>, %arg7: memref<1024x128xf32, #tpu.memory_space<vmem>>, %arg8: memref<1x128xf32, #tpu.memory_space<vmem>>, %arg9: memref<128x4xf32, #tpu.memory_space<vmem>>, %arg10: memref<1x4xf32, #tpu.memory_space<vmem>>, %arg11: memref<2x4xf32, #tpu.memory_space<vmem>>, %arg12: memref<64x40xf32, #tpu.memory_space<vmem>>, %arg13: memref<64x36xf32, #tpu.memory_space<vmem>>, %arg14: memref<2x1024xf32, #tpu.memory_space<vmem>>) attributes {dimension_semantics = [#tpu.dimension_semantics<parallel>], iteration_bounds = array<i64: 1>, scalar_prefetch = 0 : i64, scratch_operands = 3 : i64, tpu.core_type = #tpu.core_type<tc>, window_params = [{transform_indices = @transform_0, window_bounds = array<i64: 1, 1, 40>}, {pipeline_mode = #tpu.pipeline_mode<synchronous>, transform_indices = @transform_1, window_bounds = array<i64: 1, 36>}, {pipeline_mode = #tpu.pipeline_mode<synchronous>, transform_indices = @transform_2, window_bounds = array<i64: 64, 5>}, {pipeline_mode = #tpu.pipeline_mode<synchronous>, transform_indices = @transform_3, window_bounds = array<i64: 64, 1>}, {pipeline_mode = #tpu.pipeline_mode<synchronous>, transform_indices = @transform_4, window_bounds = array<i64: 5, 64, 64>}, {pipeline_mode = #tpu.pipeline_mode<synchronous>, transform_indices = @transform_5, window_bounds = array<i64: 64, 1>}, {pipeline_mode = #tpu.pipeline_mode<synchronous>, transform_indices = @transform_6, window_bounds = array<i64: 1024, 128>}, {pipeline_mode = #tpu.pipeline_mode<synchronous>, transform_indices = @transform_7, window_bounds = array<i64: 1, 128>}, {pipeline_mode = #tpu.pipeline_mode<synchronous>, transform_indices = @transform_8, window_bounds = array<i64: 128, 4>}, {pipeline_mode = #tpu.pipeline_mode<synchronous>, transform_indices = @transform_9, window_bounds = array<i64: 1, 4>}, {transform_indices = @transform_10, window_bounds = array<i64: 2, 4>}]} {
    %c0 = arith.constant 0 : index
    %c0_0 = arith.constant 0 : index
    %c0_1 = arith.constant 0 : index
    %0 = vector.load %arg1[%c0, %c0_0, %c0_1] : memref<1x1x40xf32, #tpu.memory_space<vmem>>, vector<1x1x40xf32>
    %1 = vector.shape_cast %0 : vector<1x1x40xf32> to vector<1x40xf32>
    %c0_2 = arith.constant 0 : index
    %c0_3 = arith.constant 0 : index
    %2 = vector.load %arg3[%c0_2, %c0_3] : memref<64x5xf32, #tpu.memory_space<vmem>>, vector<64x1xf32>
    %3 = vector.extract_strided_slice %1 {offsets = [0, 0], sizes = [1, 36], strides = [1, 1]} : vector<1x40xf32> to vector<1x36xf32>
    %4 = vector.broadcast %2 : vector<64x1xf32> to vector<64x36xf32>
    %5 = vector.broadcast %3 : vector<1x36xf32> to vector<64x36xf32>
    %6 = arith.mulf %4, %5 : vector<64x36xf32>
    %c0_4 = arith.constant 0 : index
    %c1 = arith.constant 1 : index
    %7 = vector.load %arg3[%c0_4, %c1] : memref<64x5xf32, #tpu.memory_space<vmem>>, vector<64x1xf32>
    %8 = vector.extract_strided_slice %1 {offsets = [0, 1], sizes = [1, 36], strides = [1, 1]} : vector<1x40xf32> to vector<1x36xf32>
    %9 = vector.broadcast %7 : vector<64x1xf32> to vector<64x36xf32>
    %10 = vector.broadcast %8 : vector<1x36xf32> to vector<64x36xf32>
    %11 = arith.mulf %9, %10 : vector<64x36xf32>
    %12 = arith.addf %6, %11 : vector<64x36xf32>
    %c0_5 = arith.constant 0 : index
    %c2 = arith.constant 2 : index
    %13 = vector.load %arg3[%c0_5, %c2] : memref<64x5xf32, #tpu.memory_space<vmem>>, vector<64x1xf32>
    %14 = vector.extract_strided_slice %1 {offsets = [0, 2], sizes = [1, 36], strides = [1, 1]} : vector<1x40xf32> to vector<1x36xf32>
    %15 = vector.broadcast %13 : vector<64x1xf32> to vector<64x36xf32>
    %16 = vector.broadcast %14 : vector<1x36xf32> to vector<64x36xf32>
    %17 = arith.mulf %15, %16 : vector<64x36xf32>
    %18 = arith.addf %12, %17 : vector<64x36xf32>
    %c0_6 = arith.constant 0 : index
    %c3 = arith.constant 3 : index
    %19 = vector.load %arg3[%c0_6, %c3] : memref<64x5xf32, #tpu.memory_space<vmem>>, vector<64x1xf32>
    %20 = vector.extract_strided_slice %1 {offsets = [0, 3], sizes = [1, 36], strides = [1, 1]} : vector<1x40xf32> to vector<1x36xf32>
    %21 = vector.broadcast %19 : vector<64x1xf32> to vector<64x36xf32>
    %22 = vector.broadcast %20 : vector<1x36xf32> to vector<64x36xf32>
    %23 = arith.mulf %21, %22 : vector<64x36xf32>
    %24 = arith.addf %18, %23 : vector<64x36xf32>
    %c0_7 = arith.constant 0 : index
    %c4 = arith.constant 4 : index
    %25 = vector.load %arg3[%c0_7, %c4] : memref<64x5xf32, #tpu.memory_space<vmem>>, vector<64x1xf32>
    %26 = vector.extract_strided_slice %1 {offsets = [0, 4], sizes = [1, 36], strides = [1, 1]} : vector<1x40xf32> to vector<1x36xf32>
    %27 = vector.broadcast %25 : vector<64x1xf32> to vector<64x36xf32>
    %28 = vector.broadcast %26 : vector<1x36xf32> to vector<64x36xf32>
    %29 = arith.mulf %27, %28 : vector<64x36xf32>
    %30 = arith.addf %24, %29 : vector<64x36xf32>
    %c0_8 = arith.constant 0 : index
    %c0_9 = arith.constant 0 : index
    %31 = vector.load %arg4[%c0_8, %c0_9] : memref<64x1xf32, #tpu.memory_space<vmem>>, vector<64x1xf32>
    %32 = vector.broadcast %31 : vector<64x1xf32> to vector<64x36xf32>
    %33 = arith.addf %30, %32 : vector<64x36xf32>
    %cst = arith.constant 0.000000e+00 : f32
    %34 = vector.broadcast %cst : f32 to vector<64x40xf32>
    %c0_10 = arith.constant 0 : index
    %c0_11 = arith.constant 0 : index
    %35 = vector.load %arg12[%c0_10, %c0_11] : memref<64x40xf32, #tpu.memory_space<vmem>>, vector<64x40xf32>
    tpu.vector_store %arg12[%c0_10, %c0_11], %34 {strides = array<i32>} : memref<64x40xf32, #tpu.memory_space<vmem>>, vector<64x40xf32>,
    %cst_12 = arith.constant 5.000000e-01 : f32
    %36 = vector.broadcast %cst_12 : f32 to vector<64x36xf32>
    %37 = arith.mulf %36, %33 : vector<64x36xf32>
    %38 = math.tanh %37 : vector<64x36xf32>
    %cst_13 = arith.constant 5.000000e-01 : f32
    %39 = vector.broadcast %cst_13 : f32 to vector<64x36xf32>
    %40 = arith.mulf %39, %38 : vector<64x36xf32>
    %cst_14 = arith.constant 5.000000e-01 : f32
    %41 = vector.broadcast %cst_14 : f32 to vector<64x36xf32>
    %42 = arith.addf %40, %41 : vector<64x36xf32>
    %c0_15 = arith.constant 0 : index
    %c0_16 = arith.constant 0 : index
    %43 = vector.load %arg2[%c0_15, %c0_16] : memref<1x36xf32, #tpu.memory_space<vmem>>, vector<1x36xf32>
    %44 = vector.broadcast %43 : vector<1x36xf32> to vector<64x36xf32>
    %45 = arith.mulf %42, %44 : vector<64x36xf32>
    %c0_17 = arith.constant 0 : index
    %c2_18 = arith.constant 2 : index
    %46 = vector.load %arg12[%c0_17, %c2_18] : memref<64x40xf32, #tpu.memory_space<vmem>>, vector<64x36xf32>
    tpu.vector_store %arg12[%c0_17, %c2_18], %45 {strides = array<i32>} : memref<64x40xf32, #tpu.memory_space<vmem>>, vector<64x36xf32>,
    %c0_19 = arith.constant 0 : index
    %c0_20 = arith.constant 0 : index
    %c0_21 = arith.constant 0 : index
    %47 = vector.load %arg5[%c0_19, %c0_20, %c0_21] : memref<5x64x64xf32, #tpu.memory_space<vmem>>, vector<1x64x64xf32>
    %48 = vector.shape_cast %47 : vector<1x64x64xf32> to vector<64x64xf32>
    %c0_22 = arith.constant 0 : index
    %c0_23 = arith.constant 0 : index
    %49 = vector.load %arg12[%c0_22, %c0_23] : memref<64x40xf32, #tpu.memory_space<vmem>>, vector<64x36xf32>
    %cst_24 = arith.constant dense<0.000000e+00> : vector<64x36xf32>
    %50 = tpu.matmul %48, %49, %cst_24 {dimension_numbers = #tpu.dot_dimension_numbers<[1], [0], [0], [1], [0, 0, 1, 1], [], []>} : vector<64x64xf32>, vector<64x36xf32>, vector<64x36xf32> -> vector<64x36xf32>
    %c1_25 = arith.constant 1 : index
    %c0_26 = arith.constant 0 : index
    %c0_27 = arith.constant 0 : index
    %51 = vector.load %arg5[%c1_25, %c0_26, %c0_27] : memref<5x64x64xf32, #tpu.memory_space<vmem>>, vector<1x64x64xf32>
    %52 = vector.shape_cast %51 : vector<1x64x64xf32> to vector<64x64xf32>
    %c0_28 = arith.constant 0 : index
    %c1_29 = arith.constant 1 : index
    %53 = vector.load %arg12[%c0_28, %c1_29] : memref<64x40xf32, #tpu.memory_space<vmem>>, vector<64x36xf32>
    %cst_30 = arith.constant dense<0.000000e+00> : vector<64x36xf32>
    %54 = tpu.matmul %52, %53, %cst_30 {dimension_numbers = #tpu.dot_dimension_numbers<[1], [0], [0], [1], [0, 0, 1, 1], [], []>} : vector<64x64xf32>, vector<64x36xf32>, vector<64x36xf32> -> vector<64x36xf32>
    %55 = arith.addf %50, %54 : vector<64x36xf32>
    %c2_31 = arith.constant 2 : index
    %c0_32 = arith.constant 0 : index
    %c0_33 = arith.constant 0 : index
    %56 = vector.load %arg5[%c2_31, %c0_32, %c0_33] : memref<5x64x64xf32, #tpu.memory_space<vmem>>, vector<1x64x64xf32>
    %57 = vector.shape_cast %56 : vector<1x64x64xf32> to vector<64x64xf32>
    %c0_34 = arith.constant 0 : index
    %c2_35 = arith.constant 2 : index
    %58 = vector.load %arg12[%c0_34, %c2_35] : memref<64x40xf32, #tpu.memory_space<vmem>>, vector<64x36xf32>
    %cst_36 = arith.constant dense<0.000000e+00> : vector<64x36xf32>
    %59 = tpu.matmul %57, %58, %cst_36 {dimension_numbers = #tpu.dot_dimension_numbers<[1], [0], [0], [1], [0, 0, 1, 1], [], []>} : vector<64x64xf32>, vector<64x36xf32>, vector<64x36xf32> -> vector<64x36xf32>
    %60 = arith.addf %55, %59 : vector<64x36xf32>
    %c3_37 = arith.constant 3 : index
    %c0_38 = arith.constant 0 : index
    %c0_39 = arith.constant 0 : index
    %61 = vector.load %arg5[%c3_37, %c0_38, %c0_39] : memref<5x64x64xf32, #tpu.memory_space<vmem>>, vector<1x64x64xf32>
    %62 = vector.shape_cast %61 : vector<1x64x64xf32> to vector<64x64xf32>
    %c0_40 = arith.constant 0 : index
    %c3_41 = arith.constant 3 : index
    %63 = vector.load %arg12[%c0_40, %c3_41] : memref<64x40xf32, #tpu.memory_space<vmem>>, vector<64x36xf32>
    %cst_42 = arith.constant dense<0.000000e+00> : vector<64x36xf32>
    %64 = tpu.matmul %62, %63, %cst_42 {dimension_numbers = #tpu.dot_dimension_numbers<[1], [0], [0], [1], [0, 0, 1, 1], [], []>} : vector<64x64xf32>, vector<64x36xf32>, vector<64x36xf32> -> vector<64x36xf32>
    %65 = arith.addf %60, %64 : vector<64x36xf32>
    %c4_43 = arith.constant 4 : index
    %c0_44 = arith.constant 0 : index
    %c0_45 = arith.constant 0 : index
    %66 = vector.load %arg5[%c4_43, %c0_44, %c0_45] : memref<5x64x64xf32, #tpu.memory_space<vmem>>, vector<1x64x64xf32>
    %67 = vector.shape_cast %66 : vector<1x64x64xf32> to vector<64x64xf32>
    %c0_46 = arith.constant 0 : index
    %c4_47 = arith.constant 4 : index
    %68 = vector.load %arg12[%c0_46, %c4_47] : memref<64x40xf32, #tpu.memory_space<vmem>>, vector<64x36xf32>
    %cst_48 = arith.constant dense<0.000000e+00> : vector<64x36xf32>
    %69 = tpu.matmul %67, %68, %cst_48 {dimension_numbers = #tpu.dot_dimension_numbers<[1], [0], [0], [1], [0, 0, 1, 1], [], []>} : vector<64x64xf32>, vector<64x36xf32>, vector<64x36xf32> -> vector<64x36xf32>
    %70 = arith.addf %65, %69 : vector<64x36xf32>
    %c0_49 = arith.constant 0 : index
    %c0_50 = arith.constant 0 : index
    %71 = vector.load %arg6[%c0_49, %c0_50] : memref<64x1xf32, #tpu.memory_space<vmem>>, vector<64x1xf32>
    %72 = vector.broadcast %71 : vector<64x1xf32> to vector<64x36xf32>
    %73 = arith.addf %70, %72 : vector<64x36xf32>
    %cst_51 = arith.constant 5.000000e-01 : f32
    %74 = vector.broadcast %cst_51 : f32 to vector<64x36xf32>
    %75 = arith.mulf %74, %73 : vector<64x36xf32>
    %76 = math.tanh %75 : vector<64x36xf32>
    %cst_52 = arith.constant 5.000000e-01 : f32
    %77 = vector.broadcast %cst_52 : f32 to vector<64x36xf32>
    %78 = arith.mulf %77, %76 : vector<64x36xf32>
    %cst_53 = arith.constant 5.000000e-01 : f32
    %79 = vector.broadcast %cst_53 : f32 to vector<64x36xf32>
    %80 = arith.addf %78, %79 : vector<64x36xf32>
    %c0_54 = arith.constant 0 : index
    %c0_55 = arith.constant 0 : index
    %81 = vector.load %arg13[%c0_54, %c0_55] : memref<64x36xf32, #tpu.memory_space<vmem>>, vector<64x36xf32>
    tpu.vector_store %arg13[%c0_54, %c0_55], %80 {strides = array<i32>} : memref<64x36xf32, #tpu.memory_space<vmem>>, vector<64x36xf32>,
    %c0_56 = arith.constant 0 : index
    %c0_57 = arith.constant 0 : index
    %82 = vector.load %arg13[%c0_56, %c0_57] : memref<64x36xf32, #tpu.memory_space<vmem>>, vector<1x16xf32>
    %c0_58 = arith.constant 0 : index
    %c0_59 = arith.constant 0 : index
    %83 = vector.load %arg14[%c0_58, %c0_59] : memref<2x1024xf32, #tpu.memory_space<vmem>>, vector<1x16xf32>
    tpu.vector_store %arg14[%c0_58, %c0_59], %82 {strides = array<i32>} : memref<2x1024xf32, #tpu.memory_space<vmem>>, vector<1x16xf32>,
    %c1_60 = arith.constant 1 : index
    %c0_61 = arith.constant 0 : index
    %84 = vector.load %arg13[%c1_60, %c0_61] : memref<64x36xf32, #tpu.memory_space<vmem>>, vector<1x16xf32>
    %c0_62 = arith.constant 0 : index
    %c16 = arith.constant 16 : index
    %85 = vector.load %arg14[%c0_62, %c16] : memref<2x1024xf32, #tpu.memory_space<vmem>>, vector<1x16xf32>
    tpu.vector_store %arg14[%c0_62, %c16], %84 {strides = array<i32>} : memref<2x1024xf32, #tpu.memory_space<vmem>>, vector<1x16xf32>,
    %c2_63 = arith.constant 2 : index
    %c0_64 = arith.constant 0 : index
    %86 = vector.load %arg13[%c2_63, %c0_64] : memref<64x36xf32, #tpu.memory_space<vmem>>, vector<1x16xf32>
    %c0_65 = arith.constant 0 : index
    %c32 = arith.constant 32 : index
    %87 = vector.load %arg14[%c0_65, %c32] : memref<2x1024xf32, #tpu.memory_space<vmem>>, vector<1x16xf32>
    tpu.vector_store %arg14[%c0_65, %c32], %86 {strides = array<i32>} : memref<2x1024xf32, #tpu.memory_space<vmem>>, vector<1x16xf32>,
    %c3_66 = arith.constant 3 : index
    %c0_67 = arith.constant 0 : index
    %88 = vector.load %arg13[%c3_66, %c0_67] : memref<64x36xf32, #tpu.memory_space<vmem>>, vector<1x16xf32>
    %c0_68 = arith.constant 0 : index
    %c48 = arith.constant 48 : index
    %89 = vector.load %arg14[%c0_68, %c48] : memref<2x1024xf32, #tpu.memory_space<vmem>>, vector<1x16xf32>
    tpu.vector_store %arg14[%c0_68, %c48], %88 {strides = array<i32>} : memref<2x1024xf32, #tpu.memory_space<vmem>>, vector<1x16xf32>,
    %c4_69 = arith.constant 4 : index
    %c0_70 = arith.constant 0 : index
    %90 = vector.load %arg13[%c4_69, %c0_70] : memref<64x36xf32, #tpu.memory_space<vmem>>, vector<1x16xf32>
    %c0_71 = arith.constant 0 : index
    %c64 = arith.constant 64 : index
    %91 = vector.load %arg14[%c0_71, %c64] : memref<2x1024xf32, #tpu.memory_space<vmem>>, vector<1x16xf32>
    tpu.vector_store %arg14[%c0_71, %c64], %90 {strides = array<i32>} : memref<2x1024xf32, #tpu.memory_space<vmem>>, vector<1x16xf32>,
    %c5 = arith.constant 5 : index
    %c0_72 = arith.constant 0 : index
    %92 = vector.load %arg13[%c5, %c0_72] : memref<64x36xf32, #tpu.memory_space<vmem>>, vector<1x16xf32>
    %c0_73 = arith.constant 0 : index
    %c80 = arith.constant 80 : index
    %93 = vector.load %arg14[%c0_73, %c80] : memref<2x1024xf32, #tpu.memory_space<vmem>>, vector<1x16xf32>
    tpu.vector_store %arg14[%c0_73, %c80], %92 {strides = array<i32>} : memref<2x1024xf32, #tpu.memory_space<vmem>>, vector<1x16xf32>,
    %c6 = arith.constant 6 : index
    %c0_74 = arith.constant 0 : index
    %94 = vector.load %arg13[%c6, %c0_74] : memref<64x36xf32, #tpu.memory_space<vmem>>, vector<1x16xf32>
    %c0_75 = arith.constant 0 : index
    %c96 = arith.constant 96 : index
    %95 = vector.load %arg14[%c0_75, %c96] : memref<2x1024xf32, #tpu.memory_space<vmem>>, vector<1x16xf32>
    tpu.vector_store %arg14[%c0_75, %c96], %94 {strides = array<i32>} : memref<2x1024xf32, #tpu.memory_space<vmem>>, vector<1x16xf32>,
    %c7 = arith.constant 7 : index
    %c0_76 = arith.constant 0 : index
    %96 = vector.load %arg13[%c7, %c0_76] : memref<64x36xf32, #tpu.memory_space<vmem>>, vector<1x16xf32>
    %c0_77 = arith.constant 0 : index
    %c112 = arith.constant 112 : index
    %97 = vector.load %arg14[%c0_77, %c112] : memref<2x1024xf32, #tpu.memory_space<vmem>>, vector<1x16xf32>
    tpu.vector_store %arg14[%c0_77, %c112], %96 {strides = array<i32>} : memref<2x1024xf32, #tpu.memory_space<vmem>>, vector<1x16xf32>,
    %c8 = arith.constant 8 : index
    %c0_78 = arith.constant 0 : index
    %98 = vector.load %arg13[%c8, %c0_78] : memref<64x36xf32, #tpu.memory_space<vmem>>, vector<1x16xf32>
    %c0_79 = arith.constant 0 : index
    %c128 = arith.constant 128 : index
    %99 = vector.load %arg14[%c0_79, %c128] : memref<2x1024xf32, #tpu.memory_space<vmem>>, vector<1x16xf32>
    tpu.vector_store %arg14[%c0_79, %c128], %98 {strides = array<i32>} : memref<2x1024xf32, #tpu.memory_space<vmem>>, vector<1x16xf32>,
    %c9 = arith.constant 9 : index
    %c0_80 = arith.constant 0 : index
    %100 = vector.load %arg13[%c9, %c0_80] : memref<64x36xf32, #tpu.memory_space<vmem>>, vector<1x16xf32>
    %c0_81 = arith.constant 0 : index
    %c144 = arith.constant 144 : index
    %101 = vector.load %arg14[%c0_81, %c144] : memref<2x1024xf32, #tpu.memory_space<vmem>>, vector<1x16xf32>
    tpu.vector_store %arg14[%c0_81, %c144], %100 {strides = array<i32>} : memref<2x1024xf32, #tpu.memory_space<vmem>>, vector<1x16xf32>,
    %c10 = arith.constant 10 : index
    %c0_82 = arith.constant 0 : index
    %102 = vector.load %arg13[%c10, %c0_82] : memref<64x36xf32, #tpu.memory_space<vmem>>, vector<1x16xf32>
    %c0_83 = arith.constant 0 : index
    %c160 = arith.constant 160 : index
    %103 = vector.load %arg14[%c0_83, %c160] : memref<2x1024xf32, #tpu.memory_space<vmem>>, vector<1x16xf32>
    tpu.vector_store %arg14[%c0_83, %c160], %102 {strides = array<i32>} : memref<2x1024xf32, #tpu.memory_space<vmem>>, vector<1x16xf32>,
    %c11 = arith.constant 11 : index
    %c0_84 = arith.constant 0 : index
    %104 = vector.load %arg13[%c11, %c0_84] : memref<64x36xf32, #tpu.memory_space<vmem>>, vector<1x16xf32>
    %c0_85 = arith.constant 0 : index
    %c176 = arith.constant 176 : index
    %105 = vector.load %arg14[%c0_85, %c176] : memref<2x1024xf32, #tpu.memory_space<vmem>>, vector<1x16xf32>
    tpu.vector_store %arg14[%c0_85, %c176], %104 {strides = array<i32>} : memref<2x1024xf32, #tpu.memory_space<vmem>>, vector<1x16xf32>,
    %c12 = arith.constant 12 : index
    %c0_86 = arith.constant 0 : index
    %106 = vector.load %arg13[%c12, %c0_86] : memref<64x36xf32, #tpu.memory_space<vmem>>, vector<1x16xf32>
    %c0_87 = arith.constant 0 : index
    %c192 = arith.constant 192 : index
    %107 = vector.load %arg14[%c0_87, %c192] : memref<2x1024xf32, #tpu.memory_space<vmem>>, vector<1x16xf32>
    tpu.vector_store %arg14[%c0_87, %c192], %106 {strides = array<i32>} : memref<2x1024xf32, #tpu.memory_space<vmem>>, vector<1x16xf32>,
    %c13 = arith.constant 13 : index
    %c0_88 = arith.constant 0 : index
    %108 = vector.load %arg13[%c13, %c0_88] : memref<64x36xf32, #tpu.memory_space<vmem>>, vector<1x16xf32>
    %c0_89 = arith.constant 0 : index
    %c208 = arith.constant 208 : index
    %109 = vector.load %arg14[%c0_89, %c208] : memref<2x1024xf32, #tpu.memory_space<vmem>>, vector<1x16xf32>
    tpu.vector_store %arg14[%c0_89, %c208], %108 {strides = array<i32>} : memref<2x1024xf32, #tpu.memory_space<vmem>>, vector<1x16xf32>,
    %c14 = arith.constant 14 : index
    %c0_90 = arith.constant 0 : index
    %110 = vector.load %arg13[%c14, %c0_90] : memref<64x36xf32, #tpu.memory_space<vmem>>, vector<1x16xf32>
    %c0_91 = arith.constant 0 : index
    %c224 = arith.constant 224 : index
    %111 = vector.load %arg14[%c0_91, %c224] : memref<2x1024xf32, #tpu.memory_space<vmem>>, vector<1x16xf32>
    tpu.vector_store %arg14[%c0_91, %c224], %110 {strides = array<i32>} : memref<2x1024xf32, #tpu.memory_space<vmem>>, vector<1x16xf32>,
    %c15 = arith.constant 15 : index
    %c0_92 = arith.constant 0 : index
    %112 = vector.load %arg13[%c15, %c0_92] : memref<64x36xf32, #tpu.memory_space<vmem>>, vector<1x16xf32>
    %c0_93 = arith.constant 0 : index
    %c240 = arith.constant 240 : index
    %113 = vector.load %arg14[%c0_93, %c240] : memref<2x1024xf32, #tpu.memory_space<vmem>>, vector<1x16xf32>
    tpu.vector_store %arg14[%c0_93, %c240], %112 {strides = array<i32>} : memref<2x1024xf32, #tpu.memory_space<vmem>>, vector<1x16xf32>,
    %c16_94 = arith.constant 16 : index
    %c0_95 = arith.constant 0 : index
    %114 = vector.load %arg13[%c16_94, %c0_95] : memref<64x36xf32, #tpu.memory_space<vmem>>, vector<1x16xf32>
    %c0_96 = arith.constant 0 : index
    %c256 = arith.constant 256 : index
    %115 = vector.load %arg14[%c0_96, %c256] : memref<2x1024xf32, #tpu.memory_space<vmem>>, vector<1x16xf32>
    tpu.vector_store %arg14[%c0_96, %c256], %114 {strides = array<i32>} : memref<2x1024xf32, #tpu.memory_space<vmem>>, vector<1x16xf32>,
    %c17 = arith.constant 17 : index
    %c0_97 = arith.constant 0 : index
    %116 = vector.load %arg13[%c17, %c0_97] : memref<64x36xf32, #tpu.memory_space<vmem>>, vector<1x16xf32>
    %c0_98 = arith.constant 0 : index
    %c272 = arith.constant 272 : index
    %117 = vector.load %arg14[%c0_98, %c272] : memref<2x1024xf32, #tpu.memory_space<vmem>>, vector<1x16xf32>
    tpu.vector_store %arg14[%c0_98, %c272], %116 {strides = array<i32>} : memref<2x1024xf32, #tpu.memory_space<vmem>>, vector<1x16xf32>,
    %c18 = arith.constant 18 : index
    %c0_99 = arith.constant 0 : index
    %118 = vector.load %arg13[%c18, %c0_99] : memref<64x36xf32, #tpu.memory_space<vmem>>, vector<1x16xf32>
    %c0_100 = arith.constant 0 : index
    %c288 = arith.constant 288 : index
    %119 = vector.load %arg14[%c0_100, %c288] : memref<2x1024xf32, #tpu.memory_space<vmem>>, vector<1x16xf32>
    tpu.vector_store %arg14[%c0_100, %c288], %118 {strides = array<i32>} : memref<2x1024xf32, #tpu.memory_space<vmem>>, vector<1x16xf32>,
    %c19 = arith.constant 19 : index
    %c0_101 = arith.constant 0 : index
    %120 = vector.load %arg13[%c19, %c0_101] : memref<64x36xf32, #tpu.memory_space<vmem>>, vector<1x16xf32>
    %c0_102 = arith.constant 0 : index
    %c304 = arith.constant 304 : index
    %121 = vector.load %arg14[%c0_102, %c304] : memref<2x1024xf32, #tpu.memory_space<vmem>>, vector<1x16xf32>
    tpu.vector_store %arg14[%c0_102, %c304], %120 {strides = array<i32>} : memref<2x1024xf32, #tpu.memory_space<vmem>>, vector<1x16xf32>,
    %c20 = arith.constant 20 : index
    %c0_103 = arith.constant 0 : index
    %122 = vector.load %arg13[%c20, %c0_103] : memref<64x36xf32, #tpu.memory_space<vmem>>, vector<1x16xf32>
    %c0_104 = arith.constant 0 : index
    %c320 = arith.constant 320 : index
    %123 = vector.load %arg14[%c0_104, %c320] : memref<2x1024xf32, #tpu.memory_space<vmem>>, vector<1x16xf32>
    tpu.vector_store %arg14[%c0_104, %c320], %122 {strides = array<i32>} : memref<2x1024xf32, #tpu.memory_space<vmem>>, vector<1x16xf32>,
    %c21 = arith.constant 21 : index
    %c0_105 = arith.constant 0 : index
    %124 = vector.load %arg13[%c21, %c0_105] : memref<64x36xf32, #tpu.memory_space<vmem>>, vector<1x16xf32>
    %c0_106 = arith.constant 0 : index
    %c336 = arith.constant 336 : index
    %125 = vector.load %arg14[%c0_106, %c336] : memref<2x1024xf32, #tpu.memory_space<vmem>>, vector<1x16xf32>
    tpu.vector_store %arg14[%c0_106, %c336], %124 {strides = array<i32>} : memref<2x1024xf32, #tpu.memory_space<vmem>>, vector<1x16xf32>,
    %c22 = arith.constant 22 : index
    %c0_107 = arith.constant 0 : index
    %126 = vector.load %arg13[%c22, %c0_107] : memref<64x36xf32, #tpu.memory_space<vmem>>, vector<1x16xf32>
    %c0_108 = arith.constant 0 : index
    %c352 = arith.constant 352 : index
    %127 = vector.load %arg14[%c0_108, %c352] : memref<2x1024xf32, #tpu.memory_space<vmem>>, vector<1x16xf32>
    tpu.vector_store %arg14[%c0_108, %c352], %126 {strides = array<i32>} : memref<2x1024xf32, #tpu.memory_space<vmem>>, vector<1x16xf32>,
    %c23 = arith.constant 23 : index
    %c0_109 = arith.constant 0 : index
    %128 = vector.load %arg13[%c23, %c0_109] : memref<64x36xf32, #tpu.memory_space<vmem>>, vector<1x16xf32>
    %c0_110 = arith.constant 0 : index
    %c368 = arith.constant 368 : index
    %129 = vector.load %arg14[%c0_110, %c368] : memref<2x1024xf32, #tpu.memory_space<vmem>>, vector<1x16xf32>
    tpu.vector_store %arg14[%c0_110, %c368], %128 {strides = array<i32>} : memref<2x1024xf32, #tpu.memory_space<vmem>>, vector<1x16xf32>,
    %c24 = arith.constant 24 : index
    %c0_111 = arith.constant 0 : index
    %130 = vector.load %arg13[%c24, %c0_111] : memref<64x36xf32, #tpu.memory_space<vmem>>, vector<1x16xf32>
    %c0_112 = arith.constant 0 : index
    %c384 = arith.constant 384 : index
    %131 = vector.load %arg14[%c0_112, %c384] : memref<2x1024xf32, #tpu.memory_space<vmem>>, vector<1x16xf32>
    tpu.vector_store %arg14[%c0_112, %c384], %130 {strides = array<i32>} : memref<2x1024xf32, #tpu.memory_space<vmem>>, vector<1x16xf32>,
    %c25 = arith.constant 25 : index
    %c0_113 = arith.constant 0 : index
    %132 = vector.load %arg13[%c25, %c0_113] : memref<64x36xf32, #tpu.memory_space<vmem>>, vector<1x16xf32>
    %c0_114 = arith.constant 0 : index
    %c400 = arith.constant 400 : index
    %133 = vector.load %arg14[%c0_114, %c400] : memref<2x1024xf32, #tpu.memory_space<vmem>>, vector<1x16xf32>
    tpu.vector_store %arg14[%c0_114, %c400], %132 {strides = array<i32>} : memref<2x1024xf32, #tpu.memory_space<vmem>>, vector<1x16xf32>,
    %c26 = arith.constant 26 : index
    %c0_115 = arith.constant 0 : index
    %134 = vector.load %arg13[%c26, %c0_115] : memref<64x36xf32, #tpu.memory_space<vmem>>, vector<1x16xf32>
    %c0_116 = arith.constant 0 : index
    %c416 = arith.constant 416 : index
    %135 = vector.load %arg14[%c0_116, %c416] : memref<2x1024xf32, #tpu.memory_space<vmem>>, vector<1x16xf32>
    tpu.vector_store %arg14[%c0_116, %c416], %134 {strides = array<i32>} : memref<2x1024xf32, #tpu.memory_space<vmem>>, vector<1x16xf32>,
    %c27 = arith.constant 27 : index
    %c0_117 = arith.constant 0 : index
    %136 = vector.load %arg13[%c27, %c0_117] : memref<64x36xf32, #tpu.memory_space<vmem>>, vector<1x16xf32>
    %c0_118 = arith.constant 0 : index
    %c432 = arith.constant 432 : index
    %137 = vector.load %arg14[%c0_118, %c432] : memref<2x1024xf32, #tpu.memory_space<vmem>>, vector<1x16xf32>
    tpu.vector_store %arg14[%c0_118, %c432], %136 {strides = array<i32>} : memref<2x1024xf32, #tpu.memory_space<vmem>>, vector<1x16xf32>,
    %c28 = arith.constant 28 : index
    %c0_119 = arith.constant 0 : index
    %138 = vector.load %arg13[%c28, %c0_119] : memref<64x36xf32, #tpu.memory_space<vmem>>, vector<1x16xf32>
    %c0_120 = arith.constant 0 : index
    %c448 = arith.constant 448 : index
    %139 = vector.load %arg14[%c0_120, %c448] : memref<2x1024xf32, #tpu.memory_space<vmem>>, vector<1x16xf32>
    tpu.vector_store %arg14[%c0_120, %c448], %138 {strides = array<i32>} : memref<2x1024xf32, #tpu.memory_space<vmem>>, vector<1x16xf32>,
    %c29 = arith.constant 29 : index
    %c0_121 = arith.constant 0 : index
    %140 = vector.load %arg13[%c29, %c0_121] : memref<64x36xf32, #tpu.memory_space<vmem>>, vector<1x16xf32>
    %c0_122 = arith.constant 0 : index
    %c464 = arith.constant 464 : index
    %141 = vector.load %arg14[%c0_122, %c464] : memref<2x1024xf32, #tpu.memory_space<vmem>>, vector<1x16xf32>
    tpu.vector_store %arg14[%c0_122, %c464], %140 {strides = array<i32>} : memref<2x1024xf32, #tpu.memory_space<vmem>>, vector<1x16xf32>,
    %c30 = arith.constant 30 : index
    %c0_123 = arith.constant 0 : index
    %142 = vector.load %arg13[%c30, %c0_123] : memref<64x36xf32, #tpu.memory_space<vmem>>, vector<1x16xf32>
    %c0_124 = arith.constant 0 : index
    %c480 = arith.constant 480 : index
    %143 = vector.load %arg14[%c0_124, %c480] : memref<2x1024xf32, #tpu.memory_space<vmem>>, vector<1x16xf32>
    tpu.vector_store %arg14[%c0_124, %c480], %142 {strides = array<i32>} : memref<2x1024xf32, #tpu.memory_space<vmem>>, vector<1x16xf32>,
    %c31 = arith.constant 31 : index
    %c0_125 = arith.constant 0 : index
    %144 = vector.load %arg13[%c31, %c0_125] : memref<64x36xf32, #tpu.memory_space<vmem>>, vector<1x16xf32>
    %c0_126 = arith.constant 0 : index
    %c496 = arith.constant 496 : index
    %145 = vector.load %arg14[%c0_126, %c496] : memref<2x1024xf32, #tpu.memory_space<vmem>>, vector<1x16xf32>
    tpu.vector_store %arg14[%c0_126, %c496], %144 {strides = array<i32>} : memref<2x1024xf32, #tpu.memory_space<vmem>>, vector<1x16xf32>,
    %c32_127 = arith.constant 32 : index
    %c0_128 = arith.constant 0 : index
    %146 = vector.load %arg13[%c32_127, %c0_128] : memref<64x36xf32, #tpu.memory_space<vmem>>, vector<1x16xf32>
    %c0_129 = arith.constant 0 : index
    %c512 = arith.constant 512 : index
    %147 = vector.load %arg14[%c0_129, %c512] : memref<2x1024xf32, #tpu.memory_space<vmem>>, vector<1x16xf32>
    tpu.vector_store %arg14[%c0_129, %c512], %146 {strides = array<i32>} : memref<2x1024xf32, #tpu.memory_space<vmem>>, vector<1x16xf32>,
    %c33 = arith.constant 33 : index
    %c0_130 = arith.constant 0 : index
    %148 = vector.load %arg13[%c33, %c0_130] : memref<64x36xf32, #tpu.memory_space<vmem>>, vector<1x16xf32>
    %c0_131 = arith.constant 0 : index
    %c528 = arith.constant 528 : index
    %149 = vector.load %arg14[%c0_131, %c528] : memref<2x1024xf32, #tpu.memory_space<vmem>>, vector<1x16xf32>
    tpu.vector_store %arg14[%c0_131, %c528], %148 {strides = array<i32>} : memref<2x1024xf32, #tpu.memory_space<vmem>>, vector<1x16xf32>,
    %c34 = arith.constant 34 : index
    %c0_132 = arith.constant 0 : index
    %150 = vector.load %arg13[%c34, %c0_132] : memref<64x36xf32, #tpu.memory_space<vmem>>, vector<1x16xf32>
    %c0_133 = arith.constant 0 : index
    %c544 = arith.constant 544 : index
    %151 = vector.load %arg14[%c0_133, %c544] : memref<2x1024xf32, #tpu.memory_space<vmem>>, vector<1x16xf32>
    tpu.vector_store %arg14[%c0_133, %c544], %150 {strides = array<i32>} : memref<2x1024xf32, #tpu.memory_space<vmem>>, vector<1x16xf32>,
    %c35 = arith.constant 35 : index
    %c0_134 = arith.constant 0 : index
    %152 = vector.load %arg13[%c35, %c0_134] : memref<64x36xf32, #tpu.memory_space<vmem>>, vector<1x16xf32>
    %c0_135 = arith.constant 0 : index
    %c560 = arith.constant 560 : index
    %153 = vector.load %arg14[%c0_135, %c560] : memref<2x1024xf32, #tpu.memory_space<vmem>>, vector<1x16xf32>
    tpu.vector_store %arg14[%c0_135, %c560], %152 {strides = array<i32>} : memref<2x1024xf32, #tpu.memory_space<vmem>>, vector<1x16xf32>,
    %c36 = arith.constant 36 : index
    %c0_136 = arith.constant 0 : index
    %154 = vector.load %arg13[%c36, %c0_136] : memref<64x36xf32, #tpu.memory_space<vmem>>, vector<1x16xf32>
    %c0_137 = arith.constant 0 : index
    %c576 = arith.constant 576 : index
    %155 = vector.load %arg14[%c0_137, %c576] : memref<2x1024xf32, #tpu.memory_space<vmem>>, vector<1x16xf32>
    tpu.vector_store %arg14[%c0_137, %c576], %154 {strides = array<i32>} : memref<2x1024xf32, #tpu.memory_space<vmem>>, vector<1x16xf32>,
    %c37 = arith.constant 37 : index
    %c0_138 = arith.constant 0 : index
    %156 = vector.load %arg13[%c37, %c0_138] : memref<64x36xf32, #tpu.memory_space<vmem>>, vector<1x16xf32>
    %c0_139 = arith.constant 0 : index
    %c592 = arith.constant 592 : index
    %157 = vector.load %arg14[%c0_139, %c592] : memref<2x1024xf32, #tpu.memory_space<vmem>>, vector<1x16xf32>
    tpu.vector_store %arg14[%c0_139, %c592], %156 {strides = array<i32>} : memref<2x1024xf32, #tpu.memory_space<vmem>>, vector<1x16xf32>,
    %c38 = arith.constant 38 : index
    %c0_140 = arith.constant 0 : index
    %158 = vector.load %arg13[%c38, %c0_140] : memref<64x36xf32, #tpu.memory_space<vmem>>, vector<1x16xf32>
    %c0_141 = arith.constant 0 : index
    %c608 = arith.constant 608 : index
    %159 = vector.load %arg14[%c0_141, %c608] : memref<2x1024xf32, #tpu.memory_space<vmem>>, vector<1x16xf32>
    tpu.vector_store %arg14[%c0_141, %c608], %158 {strides = array<i32>} : memref<2x1024xf32, #tpu.memory_space<vmem>>, vector<1x16xf32>,
    %c39 = arith.constant 39 : index
    %c0_142 = arith.constant 0 : index
    %160 = vector.load %arg13[%c39, %c0_142] : memref<64x36xf32, #tpu.memory_space<vmem>>, vector<1x16xf32>
    %c0_143 = arith.constant 0 : index
    %c624 = arith.constant 624 : index
    %161 = vector.load %arg14[%c0_143, %c624] : memref<2x1024xf32, #tpu.memory_space<vmem>>, vector<1x16xf32>
    tpu.vector_store %arg14[%c0_143, %c624], %160 {strides = array<i32>} : memref<2x1024xf32, #tpu.memory_space<vmem>>, vector<1x16xf32>,
    %c40 = arith.constant 40 : index
    %c0_144 = arith.constant 0 : index
    %162 = vector.load %arg13[%c40, %c0_144] : memref<64x36xf32, #tpu.memory_space<vmem>>, vector<1x16xf32>
    %c0_145 = arith.constant 0 : index
    %c640 = arith.constant 640 : index
    %163 = vector.load %arg14[%c0_145, %c640] : memref<2x1024xf32, #tpu.memory_space<vmem>>, vector<1x16xf32>
    tpu.vector_store %arg14[%c0_145, %c640], %162 {strides = array<i32>} : memref<2x1024xf32, #tpu.memory_space<vmem>>, vector<1x16xf32>,
    %c41 = arith.constant 41 : index
    %c0_146 = arith.constant 0 : index
    %164 = vector.load %arg13[%c41, %c0_146] : memref<64x36xf32, #tpu.memory_space<vmem>>, vector<1x16xf32>
    %c0_147 = arith.constant 0 : index
    %c656 = arith.constant 656 : index
    %165 = vector.load %arg14[%c0_147, %c656] : memref<2x1024xf32, #tpu.memory_space<vmem>>, vector<1x16xf32>
    tpu.vector_store %arg14[%c0_147, %c656], %164 {strides = array<i32>} : memref<2x1024xf32, #tpu.memory_space<vmem>>, vector<1x16xf32>,
    %c42 = arith.constant 42 : index
    %c0_148 = arith.constant 0 : index
    %166 = vector.load %arg13[%c42, %c0_148] : memref<64x36xf32, #tpu.memory_space<vmem>>, vector<1x16xf32>
    %c0_149 = arith.constant 0 : index
    %c672 = arith.constant 672 : index
    %167 = vector.load %arg14[%c0_149, %c672] : memref<2x1024xf32, #tpu.memory_space<vmem>>, vector<1x16xf32>
    tpu.vector_store %arg14[%c0_149, %c672], %166 {strides = array<i32>} : memref<2x1024xf32, #tpu.memory_space<vmem>>, vector<1x16xf32>,
    %c43 = arith.constant 43 : index
    %c0_150 = arith.constant 0 : index
    %168 = vector.load %arg13[%c43, %c0_150] : memref<64x36xf32, #tpu.memory_space<vmem>>, vector<1x16xf32>
    %c0_151 = arith.constant 0 : index
    %c688 = arith.constant 688 : index
    %169 = vector.load %arg14[%c0_151, %c688] : memref<2x1024xf32, #tpu.memory_space<vmem>>, vector<1x16xf32>
    tpu.vector_store %arg14[%c0_151, %c688], %168 {strides = array<i32>} : memref<2x1024xf32, #tpu.memory_space<vmem>>, vector<1x16xf32>,
    %c44 = arith.constant 44 : index
    %c0_152 = arith.constant 0 : index
    %170 = vector.load %arg13[%c44, %c0_152] : memref<64x36xf32, #tpu.memory_space<vmem>>, vector<1x16xf32>
    %c0_153 = arith.constant 0 : index
    %c704 = arith.constant 704 : index
    %171 = vector.load %arg14[%c0_153, %c704] : memref<2x1024xf32, #tpu.memory_space<vmem>>, vector<1x16xf32>
    tpu.vector_store %arg14[%c0_153, %c704], %170 {strides = array<i32>} : memref<2x1024xf32, #tpu.memory_space<vmem>>, vector<1x16xf32>,
    %c45 = arith.constant 45 : index
    %c0_154 = arith.constant 0 : index
    %172 = vector.load %arg13[%c45, %c0_154] : memref<64x36xf32, #tpu.memory_space<vmem>>, vector<1x16xf32>
    %c0_155 = arith.constant 0 : index
    %c720 = arith.constant 720 : index
    %173 = vector.load %arg14[%c0_155, %c720] : memref<2x1024xf32, #tpu.memory_space<vmem>>, vector<1x16xf32>
    tpu.vector_store %arg14[%c0_155, %c720], %172 {strides = array<i32>} : memref<2x1024xf32, #tpu.memory_space<vmem>>, vector<1x16xf32>,
    %c46 = arith.constant 46 : index
    %c0_156 = arith.constant 0 : index
    %174 = vector.load %arg13[%c46, %c0_156] : memref<64x36xf32, #tpu.memory_space<vmem>>, vector<1x16xf32>
    %c0_157 = arith.constant 0 : index
    %c736 = arith.constant 736 : index
    %175 = vector.load %arg14[%c0_157, %c736] : memref<2x1024xf32, #tpu.memory_space<vmem>>, vector<1x16xf32>
    tpu.vector_store %arg14[%c0_157, %c736], %174 {strides = array<i32>} : memref<2x1024xf32, #tpu.memory_space<vmem>>, vector<1x16xf32>,
    %c47 = arith.constant 47 : index
    %c0_158 = arith.constant 0 : index
    %176 = vector.load %arg13[%c47, %c0_158] : memref<64x36xf32, #tpu.memory_space<vmem>>, vector<1x16xf32>
    %c0_159 = arith.constant 0 : index
    %c752 = arith.constant 752 : index
    %177 = vector.load %arg14[%c0_159, %c752] : memref<2x1024xf32, #tpu.memory_space<vmem>>, vector<1x16xf32>
    tpu.vector_store %arg14[%c0_159, %c752], %176 {strides = array<i32>} : memref<2x1024xf32, #tpu.memory_space<vmem>>, vector<1x16xf32>,
    %c48_160 = arith.constant 48 : index
    %c0_161 = arith.constant 0 : index
    %178 = vector.load %arg13[%c48_160, %c0_161] : memref<64x36xf32, #tpu.memory_space<vmem>>, vector<1x16xf32>
    %c0_162 = arith.constant 0 : index
    %c768 = arith.constant 768 : index
    %179 = vector.load %arg14[%c0_162, %c768] : memref<2x1024xf32, #tpu.memory_space<vmem>>, vector<1x16xf32>
    tpu.vector_store %arg14[%c0_162, %c768], %178 {strides = array<i32>} : memref<2x1024xf32, #tpu.memory_space<vmem>>, vector<1x16xf32>,
    %c49 = arith.constant 49 : index
    %c0_163 = arith.constant 0 : index
    %180 = vector.load %arg13[%c49, %c0_163] : memref<64x36xf32, #tpu.memory_space<vmem>>, vector<1x16xf32>
    %c0_164 = arith.constant 0 : index
    %c784 = arith.constant 784 : index
    %181 = vector.load %arg14[%c0_164, %c784] : memref<2x1024xf32, #tpu.memory_space<vmem>>, vector<1x16xf32>
    tpu.vector_store %arg14[%c0_164, %c784], %180 {strides = array<i32>} : memref<2x1024xf32, #tpu.memory_space<vmem>>, vector<1x16xf32>,
    %c50 = arith.constant 50 : index
    %c0_165 = arith.constant 0 : index
    %182 = vector.load %arg13[%c50, %c0_165] : memref<64x36xf32, #tpu.memory_space<vmem>>, vector<1x16xf32>
    %c0_166 = arith.constant 0 : index
    %c800 = arith.constant 800 : index
    %183 = vector.load %arg14[%c0_166, %c800] : memref<2x1024xf32, #tpu.memory_space<vmem>>, vector<1x16xf32>
    tpu.vector_store %arg14[%c0_166, %c800], %182 {strides = array<i32>} : memref<2x1024xf32, #tpu.memory_space<vmem>>, vector<1x16xf32>,
    %c51 = arith.constant 51 : index
    %c0_167 = arith.constant 0 : index
    %184 = vector.load %arg13[%c51, %c0_167] : memref<64x36xf32, #tpu.memory_space<vmem>>, vector<1x16xf32>
    %c0_168 = arith.constant 0 : index
    %c816 = arith.constant 816 : index
    %185 = vector.load %arg14[%c0_168, %c816] : memref<2x1024xf32, #tpu.memory_space<vmem>>, vector<1x16xf32>
    tpu.vector_store %arg14[%c0_168, %c816], %184 {strides = array<i32>} : memref<2x1024xf32, #tpu.memory_space<vmem>>, vector<1x16xf32>,
    %c52 = arith.constant 52 : index
    %c0_169 = arith.constant 0 : index
    %186 = vector.load %arg13[%c52, %c0_169] : memref<64x36xf32, #tpu.memory_space<vmem>>, vector<1x16xf32>
    %c0_170 = arith.constant 0 : index
    %c832 = arith.constant 832 : index
    %187 = vector.load %arg14[%c0_170, %c832] : memref<2x1024xf32, #tpu.memory_space<vmem>>, vector<1x16xf32>
    tpu.vector_store %arg14[%c0_170, %c832], %186 {strides = array<i32>} : memref<2x1024xf32, #tpu.memory_space<vmem>>, vector<1x16xf32>,
    %c53 = arith.constant 53 : index
    %c0_171 = arith.constant 0 : index
    %188 = vector.load %arg13[%c53, %c0_171] : memref<64x36xf32, #tpu.memory_space<vmem>>, vector<1x16xf32>
    %c0_172 = arith.constant 0 : index
    %c848 = arith.constant 848 : index
    %189 = vector.load %arg14[%c0_172, %c848] : memref<2x1024xf32, #tpu.memory_space<vmem>>, vector<1x16xf32>
    tpu.vector_store %arg14[%c0_172, %c848], %188 {strides = array<i32>} : memref<2x1024xf32, #tpu.memory_space<vmem>>, vector<1x16xf32>,
    %c54 = arith.constant 54 : index
    %c0_173 = arith.constant 0 : index
    %190 = vector.load %arg13[%c54, %c0_173] : memref<64x36xf32, #tpu.memory_space<vmem>>, vector<1x16xf32>
    %c0_174 = arith.constant 0 : index
    %c864 = arith.constant 864 : index
    %191 = vector.load %arg14[%c0_174, %c864] : memref<2x1024xf32, #tpu.memory_space<vmem>>, vector<1x16xf32>
    tpu.vector_store %arg14[%c0_174, %c864], %190 {strides = array<i32>} : memref<2x1024xf32, #tpu.memory_space<vmem>>, vector<1x16xf32>,
    %c55 = arith.constant 55 : index
    %c0_175 = arith.constant 0 : index
    %192 = vector.load %arg13[%c55, %c0_175] : memref<64x36xf32, #tpu.memory_space<vmem>>, vector<1x16xf32>
    %c0_176 = arith.constant 0 : index
    %c880 = arith.constant 880 : index
    %193 = vector.load %arg14[%c0_176, %c880] : memref<2x1024xf32, #tpu.memory_space<vmem>>, vector<1x16xf32>
    tpu.vector_store %arg14[%c0_176, %c880], %192 {strides = array<i32>} : memref<2x1024xf32, #tpu.memory_space<vmem>>, vector<1x16xf32>,
    %c56 = arith.constant 56 : index
    %c0_177 = arith.constant 0 : index
    %194 = vector.load %arg13[%c56, %c0_177] : memref<64x36xf32, #tpu.memory_space<vmem>>, vector<1x16xf32>
    %c0_178 = arith.constant 0 : index
    %c896 = arith.constant 896 : index
    %195 = vector.load %arg14[%c0_178, %c896] : memref<2x1024xf32, #tpu.memory_space<vmem>>, vector<1x16xf32>
    tpu.vector_store %arg14[%c0_178, %c896], %194 {strides = array<i32>} : memref<2x1024xf32, #tpu.memory_space<vmem>>, vector<1x16xf32>,
    %c57 = arith.constant 57 : index
    %c0_179 = arith.constant 0 : index
    %196 = vector.load %arg13[%c57, %c0_179] : memref<64x36xf32, #tpu.memory_space<vmem>>, vector<1x16xf32>
    %c0_180 = arith.constant 0 : index
    %c912 = arith.constant 912 : index
    %197 = vector.load %arg14[%c0_180, %c912] : memref<2x1024xf32, #tpu.memory_space<vmem>>, vector<1x16xf32>
    tpu.vector_store %arg14[%c0_180, %c912], %196 {strides = array<i32>} : memref<2x1024xf32, #tpu.memory_space<vmem>>, vector<1x16xf32>,
    %c58 = arith.constant 58 : index
    %c0_181 = arith.constant 0 : index
    %198 = vector.load %arg13[%c58, %c0_181] : memref<64x36xf32, #tpu.memory_space<vmem>>, vector<1x16xf32>
    %c0_182 = arith.constant 0 : index
    %c928 = arith.constant 928 : index
    %199 = vector.load %arg14[%c0_182, %c928] : memref<2x1024xf32, #tpu.memory_space<vmem>>, vector<1x16xf32>
    tpu.vector_store %arg14[%c0_182, %c928], %198 {strides = array<i32>} : memref<2x1024xf32, #tpu.memory_space<vmem>>, vector<1x16xf32>,
    %c59 = arith.constant 59 : index
    %c0_183 = arith.constant 0 : index
    %200 = vector.load %arg13[%c59, %c0_183] : memref<64x36xf32, #tpu.memory_space<vmem>>, vector<1x16xf32>
    %c0_184 = arith.constant 0 : index
    %c944 = arith.constant 944 : index
    %201 = vector.load %arg14[%c0_184, %c944] : memref<2x1024xf32, #tpu.memory_space<vmem>>, vector<1x16xf32>
    tpu.vector_store %arg14[%c0_184, %c944], %200 {strides = array<i32>} : memref<2x1024xf32, #tpu.memory_space<vmem>>, vector<1x16xf32>,
    %c60 = arith.constant 60 : index
    %c0_185 = arith.constant 0 : index
    %202 = vector.load %arg13[%c60, %c0_185] : memref<64x36xf32, #tpu.memory_space<vmem>>, vector<1x16xf32>
    %c0_186 = arith.constant 0 : index
    %c960 = arith.constant 960 : index
    %203 = vector.load %arg14[%c0_186, %c960] : memref<2x1024xf32, #tpu.memory_space<vmem>>, vector<1x16xf32>
    tpu.vector_store %arg14[%c0_186, %c960], %202 {strides = array<i32>} : memref<2x1024xf32, #tpu.memory_space<vmem>>, vector<1x16xf32>,
    %c61 = arith.constant 61 : index
    %c0_187 = arith.constant 0 : index
    %204 = vector.load %arg13[%c61, %c0_187] : memref<64x36xf32, #tpu.memory_space<vmem>>, vector<1x16xf32>
    %c0_188 = arith.constant 0 : index
    %c976 = arith.constant 976 : index
    %205 = vector.load %arg14[%c0_188, %c976] : memref<2x1024xf32, #tpu.memory_space<vmem>>, vector<1x16xf32>
    tpu.vector_store %arg14[%c0_188, %c976], %204 {strides = array<i32>} : memref<2x1024xf32, #tpu.memory_space<vmem>>, vector<1x16xf32>,
    %c62 = arith.constant 62 : index
    %c0_189 = arith.constant 0 : index
    %206 = vector.load %arg13[%c62, %c0_189] : memref<64x36xf32, #tpu.memory_space<vmem>>, vector<1x16xf32>
    %c0_190 = arith.constant 0 : index
    %c992 = arith.constant 992 : index
    %207 = vector.load %arg14[%c0_190, %c992] : memref<2x1024xf32, #tpu.memory_space<vmem>>, vector<1x16xf32>
    tpu.vector_store %arg14[%c0_190, %c992], %206 {strides = array<i32>} : memref<2x1024xf32, #tpu.memory_space<vmem>>, vector<1x16xf32>,
    %c63 = arith.constant 63 : index
    %c0_191 = arith.constant 0 : index
    %208 = vector.load %arg13[%c63, %c0_191] : memref<64x36xf32, #tpu.memory_space<vmem>>, vector<1x16xf32>
    %c0_192 = arith.constant 0 : index
    %c1008 = arith.constant 1008 : index
    %209 = vector.load %arg14[%c0_192, %c1008] : memref<2x1024xf32, #tpu.memory_space<vmem>>, vector<1x16xf32>
    tpu.vector_store %arg14[%c0_192, %c1008], %208 {strides = array<i32>} : memref<2x1024xf32, #tpu.memory_space<vmem>>, vector<1x16xf32>,
    %c0_193 = arith.constant 0 : index
    %c20_194 = arith.constant 20 : index
    %210 = vector.load %arg13[%c0_193, %c20_194] : memref<64x36xf32, #tpu.memory_space<vmem>>, vector<1x16xf32>
    %c1_195 = arith.constant 1 : index
    %c0_196 = arith.constant 0 : index
    %211 = vector.load %arg14[%c1_195, %c0_196] : memref<2x1024xf32, #tpu.memory_space<vmem>>, vector<1x16xf32>
    tpu.vector_store %arg14[%c1_195, %c0_196], %210 {strides = array<i32>} : memref<2x1024xf32, #tpu.memory_space<vmem>>, vector<1x16xf32>,
    %c1_197 = arith.constant 1 : index
    %c20_198 = arith.constant 20 : index
    %212 = vector.load %arg13[%c1_197, %c20_198] : memref<64x36xf32, #tpu.memory_space<vmem>>, vector<1x16xf32>
    %c1_199 = arith.constant 1 : index
    %c16_200 = arith.constant 16 : index
    %213 = vector.load %arg14[%c1_199, %c16_200] : memref<2x1024xf32, #tpu.memory_space<vmem>>, vector<1x16xf32>
    tpu.vector_store %arg14[%c1_199, %c16_200], %212 {strides = array<i32>} : memref<2x1024xf32, #tpu.memory_space<vmem>>, vector<1x16xf32>,
    %c2_201 = arith.constant 2 : index
    %c20_202 = arith.constant 20 : index
    %214 = vector.load %arg13[%c2_201, %c20_202] : memref<64x36xf32, #tpu.memory_space<vmem>>, vector<1x16xf32>
    %c1_203 = arith.constant 1 : index
    %c32_204 = arith.constant 32 : index
    %215 = vector.load %arg14[%c1_203, %c32_204] : memref<2x1024xf32, #tpu.memory_space<vmem>>, vector<1x16xf32>
    tpu.vector_store %arg14[%c1_203, %c32_204], %214 {strides = array<i32>} : memref<2x1024xf32, #tpu.memory_space<vmem>>, vector<1x16xf32>,
    %c3_205 = arith.constant 3 : index
    %c20_206 = arith.constant 20 : index
    %216 = vector.load %arg13[%c3_205, %c20_206] : memref<64x36xf32, #tpu.memory_space<vmem>>, vector<1x16xf32>
    %c1_207 = arith.constant 1 : index
    %c48_208 = arith.constant 48 : index
    %217 = vector.load %arg14[%c1_207, %c48_208] : memref<2x1024xf32, #tpu.memory_space<vmem>>, vector<1x16xf32>
    tpu.vector_store %arg14[%c1_207, %c48_208], %216 {strides = array<i32>} : memref<2x1024xf32, #tpu.memory_space<vmem>>, vector<1x16xf32>,
    %c4_209 = arith.constant 4 : index
    %c20_210 = arith.constant 20 : index
    %218 = vector.load %arg13[%c4_209, %c20_210] : memref<64x36xf32, #tpu.memory_space<vmem>>, vector<1x16xf32>
    %c1_211 = arith.constant 1 : index
    %c64_212 = arith.constant 64 : index
    %219 = vector.load %arg14[%c1_211, %c64_212] : memref<2x1024xf32, #tpu.memory_space<vmem>>, vector<1x16xf32>
    tpu.vector_store %arg14[%c1_211, %c64_212], %218 {strides = array<i32>} : memref<2x1024xf32, #tpu.memory_space<vmem>>, vector<1x16xf32>,
    %c5_213 = arith.constant 5 : index
    %c20_214 = arith.constant 20 : index
    %220 = vector.load %arg13[%c5_213, %c20_214] : memref<64x36xf32, #tpu.memory_space<vmem>>, vector<1x16xf32>
    %c1_215 = arith.constant 1 : index
    %c80_216 = arith.constant 80 : index
    %221 = vector.load %arg14[%c1_215, %c80_216] : memref<2x1024xf32, #tpu.memory_space<vmem>>, vector<1x16xf32>
    tpu.vector_store %arg14[%c1_215, %c80_216], %220 {strides = array<i32>} : memref<2x1024xf32, #tpu.memory_space<vmem>>, vector<1x16xf32>,
    %c6_217 = arith.constant 6 : index
    %c20_218 = arith.constant 20 : index
    %222 = vector.load %arg13[%c6_217, %c20_218] : memref<64x36xf32, #tpu.memory_space<vmem>>, vector<1x16xf32>
    %c1_219 = arith.constant 1 : index
    %c96_220 = arith.constant 96 : index
    %223 = vector.load %arg14[%c1_219, %c96_220] : memref<2x1024xf32, #tpu.memory_space<vmem>>, vector<1x16xf32>
    tpu.vector_store %arg14[%c1_219, %c96_220], %222 {strides = array<i32>} : memref<2x1024xf32, #tpu.memory_space<vmem>>, vector<1x16xf32>,
    %c7_221 = arith.constant 7 : index
    %c20_222 = arith.constant 20 : index
    %224 = vector.load %arg13[%c7_221, %c20_222] : memref<64x36xf32, #tpu.memory_space<vmem>>, vector<1x16xf32>
    %c1_223 = arith.constant 1 : index
    %c112_224 = arith.constant 112 : index
    %225 = vector.load %arg14[%c1_223, %c112_224] : memref<2x1024xf32, #tpu.memory_space<vmem>>, vector<1x16xf32>
    tpu.vector_store %arg14[%c1_223, %c112_224], %224 {strides = array<i32>} : memref<2x1024xf32, #tpu.memory_space<vmem>>, vector<1x16xf32>,
    %c8_225 = arith.constant 8 : index
    %c20_226 = arith.constant 20 : index
    %226 = vector.load %arg13[%c8_225, %c20_226] : memref<64x36xf32, #tpu.memory_space<vmem>>, vector<1x16xf32>
    %c1_227 = arith.constant 1 : index
    %c128_228 = arith.constant 128 : index
    %227 = vector.load %arg14[%c1_227, %c128_228] : memref<2x1024xf32, #tpu.memory_space<vmem>>, vector<1x16xf32>
    tpu.vector_store %arg14[%c1_227, %c128_228], %226 {strides = array<i32>} : memref<2x1024xf32, #tpu.memory_space<vmem>>, vector<1x16xf32>,
    %c9_229 = arith.constant 9 : index
    %c20_230 = arith.constant 20 : index
    %228 = vector.load %arg13[%c9_229, %c20_230] : memref<64x36xf32, #tpu.memory_space<vmem>>, vector<1x16xf32>
    %c1_231 = arith.constant 1 : index
    %c144_232 = arith.constant 144 : index
    %229 = vector.load %arg14[%c1_231, %c144_232] : memref<2x1024xf32, #tpu.memory_space<vmem>>, vector<1x16xf32>
    tpu.vector_store %arg14[%c1_231, %c144_232], %228 {strides = array<i32>} : memref<2x1024xf32, #tpu.memory_space<vmem>>, vector<1x16xf32>,
    %c10_233 = arith.constant 10 : index
    %c20_234 = arith.constant 20 : index
    %230 = vector.load %arg13[%c10_233, %c20_234] : memref<64x36xf32, #tpu.memory_space<vmem>>, vector<1x16xf32>
    %c1_235 = arith.constant 1 : index
    %c160_236 = arith.constant 160 : index
    %231 = vector.load %arg14[%c1_235, %c160_236] : memref<2x1024xf32, #tpu.memory_space<vmem>>, vector<1x16xf32>
    tpu.vector_store %arg14[%c1_235, %c160_236], %230 {strides = array<i32>} : memref<2x1024xf32, #tpu.memory_space<vmem>>, vector<1x16xf32>,
    %c11_237 = arith.constant 11 : index
    %c20_238 = arith.constant 20 : index
    %232 = vector.load %arg13[%c11_237, %c20_238] : memref<64x36xf32, #tpu.memory_space<vmem>>, vector<1x16xf32>
    %c1_239 = arith.constant 1 : index
    %c176_240 = arith.constant 176 : index
    %233 = vector.load %arg14[%c1_239, %c176_240] : memref<2x1024xf32, #tpu.memory_space<vmem>>, vector<1x16xf32>
    tpu.vector_store %arg14[%c1_239, %c176_240], %232 {strides = array<i32>} : memref<2x1024xf32, #tpu.memory_space<vmem>>, vector<1x16xf32>,
    %c12_241 = arith.constant 12 : index
    %c20_242 = arith.constant 20 : index
    %234 = vector.load %arg13[%c12_241, %c20_242] : memref<64x36xf32, #tpu.memory_space<vmem>>, vector<1x16xf32>
    %c1_243 = arith.constant 1 : index
    %c192_244 = arith.constant 192 : index
    %235 = vector.load %arg14[%c1_243, %c192_244] : memref<2x1024xf32, #tpu.memory_space<vmem>>, vector<1x16xf32>
    tpu.vector_store %arg14[%c1_243, %c192_244], %234 {strides = array<i32>} : memref<2x1024xf32, #tpu.memory_space<vmem>>, vector<1x16xf32>,
    %c13_245 = arith.constant 13 : index
    %c20_246 = arith.constant 20 : index
    %236 = vector.load %arg13[%c13_245, %c20_246] : memref<64x36xf32, #tpu.memory_space<vmem>>, vector<1x16xf32>
    %c1_247 = arith.constant 1 : index
    %c208_248 = arith.constant 208 : index
    %237 = vector.load %arg14[%c1_247, %c208_248] : memref<2x1024xf32, #tpu.memory_space<vmem>>, vector<1x16xf32>
    tpu.vector_store %arg14[%c1_247, %c208_248], %236 {strides = array<i32>} : memref<2x1024xf32, #tpu.memory_space<vmem>>, vector<1x16xf32>,
    %c14_249 = arith.constant 14 : index
    %c20_250 = arith.constant 20 : index
    %238 = vector.load %arg13[%c14_249, %c20_250] : memref<64x36xf32, #tpu.memory_space<vmem>>, vector<1x16xf32>
    %c1_251 = arith.constant 1 : index
    %c224_252 = arith.constant 224 : index
    %239 = vector.load %arg14[%c1_251, %c224_252] : memref<2x1024xf32, #tpu.memory_space<vmem>>, vector<1x16xf32>
    tpu.vector_store %arg14[%c1_251, %c224_252], %238 {strides = array<i32>} : memref<2x1024xf32, #tpu.memory_space<vmem>>, vector<1x16xf32>,
    %c15_253 = arith.constant 15 : index
    %c20_254 = arith.constant 20 : index
    %240 = vector.load %arg13[%c15_253, %c20_254] : memref<64x36xf32, #tpu.memory_space<vmem>>, vector<1x16xf32>
    %c1_255 = arith.constant 1 : index
    %c240_256 = arith.constant 240 : index
    %241 = vector.load %arg14[%c1_255, %c240_256] : memref<2x1024xf32, #tpu.memory_space<vmem>>, vector<1x16xf32>
    tpu.vector_store %arg14[%c1_255, %c240_256], %240 {strides = array<i32>} : memref<2x1024xf32, #tpu.memory_space<vmem>>, vector<1x16xf32>,
    %c16_257 = arith.constant 16 : index
    %c20_258 = arith.constant 20 : index
    %242 = vector.load %arg13[%c16_257, %c20_258] : memref<64x36xf32, #tpu.memory_space<vmem>>, vector<1x16xf32>
    %c1_259 = arith.constant 1 : index
    %c256_260 = arith.constant 256 : index
    %243 = vector.load %arg14[%c1_259, %c256_260] : memref<2x1024xf32, #tpu.memory_space<vmem>>, vector<1x16xf32>
    tpu.vector_store %arg14[%c1_259, %c256_260], %242 {strides = array<i32>} : memref<2x1024xf32, #tpu.memory_space<vmem>>, vector<1x16xf32>,
    %c17_261 = arith.constant 17 : index
    %c20_262 = arith.constant 20 : index
    %244 = vector.load %arg13[%c17_261, %c20_262] : memref<64x36xf32, #tpu.memory_space<vmem>>, vector<1x16xf32>
    %c1_263 = arith.constant 1 : index
    %c272_264 = arith.constant 272 : index
    %245 = vector.load %arg14[%c1_263, %c272_264] : memref<2x1024xf32, #tpu.memory_space<vmem>>, vector<1x16xf32>
    tpu.vector_store %arg14[%c1_263, %c272_264], %244 {strides = array<i32>} : memref<2x1024xf32, #tpu.memory_space<vmem>>, vector<1x16xf32>,
    %c18_265 = arith.constant 18 : index
    %c20_266 = arith.constant 20 : index
    %246 = vector.load %arg13[%c18_265, %c20_266] : memref<64x36xf32, #tpu.memory_space<vmem>>, vector<1x16xf32>
    %c1_267 = arith.constant 1 : index
    %c288_268 = arith.constant 288 : index
    %247 = vector.load %arg14[%c1_267, %c288_268] : memref<2x1024xf32, #tpu.memory_space<vmem>>, vector<1x16xf32>
    tpu.vector_store %arg14[%c1_267, %c288_268], %246 {strides = array<i32>} : memref<2x1024xf32, #tpu.memory_space<vmem>>, vector<1x16xf32>,
    %c19_269 = arith.constant 19 : index
    %c20_270 = arith.constant 20 : index
    %248 = vector.load %arg13[%c19_269, %c20_270] : memref<64x36xf32, #tpu.memory_space<vmem>>, vector<1x16xf32>
    %c1_271 = arith.constant 1 : index
    %c304_272 = arith.constant 304 : index
    %249 = vector.load %arg14[%c1_271, %c304_272] : memref<2x1024xf32, #tpu.memory_space<vmem>>, vector<1x16xf32>
    tpu.vector_store %arg14[%c1_271, %c304_272], %248 {strides = array<i32>} : memref<2x1024xf32, #tpu.memory_space<vmem>>, vector<1x16xf32>,
    %c20_273 = arith.constant 20 : index
    %c20_274 = arith.constant 20 : index
    %250 = vector.load %arg13[%c20_273, %c20_274] : memref<64x36xf32, #tpu.memory_space<vmem>>, vector<1x16xf32>
    %c1_275 = arith.constant 1 : index
    %c320_276 = arith.constant 320 : index
    %251 = vector.load %arg14[%c1_275, %c320_276] : memref<2x1024xf32, #tpu.memory_space<vmem>>, vector<1x16xf32>
    tpu.vector_store %arg14[%c1_275, %c320_276], %250 {strides = array<i32>} : memref<2x1024xf32, #tpu.memory_space<vmem>>, vector<1x16xf32>,
    %c21_277 = arith.constant 21 : index
    %c20_278 = arith.constant 20 : index
    %252 = vector.load %arg13[%c21_277, %c20_278] : memref<64x36xf32, #tpu.memory_space<vmem>>, vector<1x16xf32>
    %c1_279 = arith.constant 1 : index
    %c336_280 = arith.constant 336 : index
    %253 = vector.load %arg14[%c1_279, %c336_280] : memref<2x1024xf32, #tpu.memory_space<vmem>>, vector<1x16xf32>
    tpu.vector_store %arg14[%c1_279, %c336_280], %252 {strides = array<i32>} : memref<2x1024xf32, #tpu.memory_space<vmem>>, vector<1x16xf32>,
    %c22_281 = arith.constant 22 : index
    %c20_282 = arith.constant 20 : index
    %254 = vector.load %arg13[%c22_281, %c20_282] : memref<64x36xf32, #tpu.memory_space<vmem>>, vector<1x16xf32>
    %c1_283 = arith.constant 1 : index
    %c352_284 = arith.constant 352 : index
    %255 = vector.load %arg14[%c1_283, %c352_284] : memref<2x1024xf32, #tpu.memory_space<vmem>>, vector<1x16xf32>
    tpu.vector_store %arg14[%c1_283, %c352_284], %254 {strides = array<i32>} : memref<2x1024xf32, #tpu.memory_space<vmem>>, vector<1x16xf32>,
    %c23_285 = arith.constant 23 : index
    %c20_286 = arith.constant 20 : index
    %256 = vector.load %arg13[%c23_285, %c20_286] : memref<64x36xf32, #tpu.memory_space<vmem>>, vector<1x16xf32>
    %c1_287 = arith.constant 1 : index
    %c368_288 = arith.constant 368 : index
    %257 = vector.load %arg14[%c1_287, %c368_288] : memref<2x1024xf32, #tpu.memory_space<vmem>>, vector<1x16xf32>
    tpu.vector_store %arg14[%c1_287, %c368_288], %256 {strides = array<i32>} : memref<2x1024xf32, #tpu.memory_space<vmem>>, vector<1x16xf32>,
    %c24_289 = arith.constant 24 : index
    %c20_290 = arith.constant 20 : index
    %258 = vector.load %arg13[%c24_289, %c20_290] : memref<64x36xf32, #tpu.memory_space<vmem>>, vector<1x16xf32>
    %c1_291 = arith.constant 1 : index
    %c384_292 = arith.constant 384 : index
    %259 = vector.load %arg14[%c1_291, %c384_292] : memref<2x1024xf32, #tpu.memory_space<vmem>>, vector<1x16xf32>
    tpu.vector_store %arg14[%c1_291, %c384_292], %258 {strides = array<i32>} : memref<2x1024xf32, #tpu.memory_space<vmem>>, vector<1x16xf32>,
    %c25_293 = arith.constant 25 : index
    %c20_294 = arith.constant 20 : index
    %260 = vector.load %arg13[%c25_293, %c20_294] : memref<64x36xf32, #tpu.memory_space<vmem>>, vector<1x16xf32>
    %c1_295 = arith.constant 1 : index
    %c400_296 = arith.constant 400 : index
    %261 = vector.load %arg14[%c1_295, %c400_296] : memref<2x1024xf32, #tpu.memory_space<vmem>>, vector<1x16xf32>
    tpu.vector_store %arg14[%c1_295, %c400_296], %260 {strides = array<i32>} : memref<2x1024xf32, #tpu.memory_space<vmem>>, vector<1x16xf32>,
    %c26_297 = arith.constant 26 : index
    %c20_298 = arith.constant 20 : index
    %262 = vector.load %arg13[%c26_297, %c20_298] : memref<64x36xf32, #tpu.memory_space<vmem>>, vector<1x16xf32>
    %c1_299 = arith.constant 1 : index
    %c416_300 = arith.constant 416 : index
    %263 = vector.load %arg14[%c1_299, %c416_300] : memref<2x1024xf32, #tpu.memory_space<vmem>>, vector<1x16xf32>
    tpu.vector_store %arg14[%c1_299, %c416_300], %262 {strides = array<i32>} : memref<2x1024xf32, #tpu.memory_space<vmem>>, vector<1x16xf32>,
    %c27_301 = arith.constant 27 : index
    %c20_302 = arith.constant 20 : index
    %264 = vector.load %arg13[%c27_301, %c20_302] : memref<64x36xf32, #tpu.memory_space<vmem>>, vector<1x16xf32>
    %c1_303 = arith.constant 1 : index
    %c432_304 = arith.constant 432 : index
    %265 = vector.load %arg14[%c1_303, %c432_304] : memref<2x1024xf32, #tpu.memory_space<vmem>>, vector<1x16xf32>
    tpu.vector_store %arg14[%c1_303, %c432_304], %264 {strides = array<i32>} : memref<2x1024xf32, #tpu.memory_space<vmem>>, vector<1x16xf32>,
    %c28_305 = arith.constant 28 : index
    %c20_306 = arith.constant 20 : index
    %266 = vector.load %arg13[%c28_305, %c20_306] : memref<64x36xf32, #tpu.memory_space<vmem>>, vector<1x16xf32>
    %c1_307 = arith.constant 1 : index
    %c448_308 = arith.constant 448 : index
    %267 = vector.load %arg14[%c1_307, %c448_308] : memref<2x1024xf32, #tpu.memory_space<vmem>>, vector<1x16xf32>
    tpu.vector_store %arg14[%c1_307, %c448_308], %266 {strides = array<i32>} : memref<2x1024xf32, #tpu.memory_space<vmem>>, vector<1x16xf32>,
    %c29_309 = arith.constant 29 : index
    %c20_310 = arith.constant 20 : index
    %268 = vector.load %arg13[%c29_309, %c20_310] : memref<64x36xf32, #tpu.memory_space<vmem>>, vector<1x16xf32>
    %c1_311 = arith.constant 1 : index
    %c464_312 = arith.constant 464 : index
    %269 = vector.load %arg14[%c1_311, %c464_312] : memref<2x1024xf32, #tpu.memory_space<vmem>>, vector<1x16xf32>
    tpu.vector_store %arg14[%c1_311, %c464_312], %268 {strides = array<i32>} : memref<2x1024xf32, #tpu.memory_space<vmem>>, vector<1x16xf32>,
    %c30_313 = arith.constant 30 : index
    %c20_314 = arith.constant 20 : index
    %270 = vector.load %arg13[%c30_313, %c20_314] : memref<64x36xf32, #tpu.memory_space<vmem>>, vector<1x16xf32>
    %c1_315 = arith.constant 1 : index
    %c480_316 = arith.constant 480 : index
    %271 = vector.load %arg14[%c1_315, %c480_316] : memref<2x1024xf32, #tpu.memory_space<vmem>>, vector<1x16xf32>
    tpu.vector_store %arg14[%c1_315, %c480_316], %270 {strides = array<i32>} : memref<2x1024xf32, #tpu.memory_space<vmem>>, vector<1x16xf32>,
    %c31_317 = arith.constant 31 : index
    %c20_318 = arith.constant 20 : index
    %272 = vector.load %arg13[%c31_317, %c20_318] : memref<64x36xf32, #tpu.memory_space<vmem>>, vector<1x16xf32>
    %c1_319 = arith.constant 1 : index
    %c496_320 = arith.constant 496 : index
    %273 = vector.load %arg14[%c1_319, %c496_320] : memref<2x1024xf32, #tpu.memory_space<vmem>>, vector<1x16xf32>
    tpu.vector_store %arg14[%c1_319, %c496_320], %272 {strides = array<i32>} : memref<2x1024xf32, #tpu.memory_space<vmem>>, vector<1x16xf32>,
    %c32_321 = arith.constant 32 : index
    %c20_322 = arith.constant 20 : index
    %274 = vector.load %arg13[%c32_321, %c20_322] : memref<64x36xf32, #tpu.memory_space<vmem>>, vector<1x16xf32>
    %c1_323 = arith.constant 1 : index
    %c512_324 = arith.constant 512 : index
    %275 = vector.load %arg14[%c1_323, %c512_324] : memref<2x1024xf32, #tpu.memory_space<vmem>>, vector<1x16xf32>
    tpu.vector_store %arg14[%c1_323, %c512_324], %274 {strides = array<i32>} : memref<2x1024xf32, #tpu.memory_space<vmem>>, vector<1x16xf32>,
    %c33_325 = arith.constant 33 : index
    %c20_326 = arith.constant 20 : index
    %276 = vector.load %arg13[%c33_325, %c20_326] : memref<64x36xf32, #tpu.memory_space<vmem>>, vector<1x16xf32>
    %c1_327 = arith.constant 1 : index
    %c528_328 = arith.constant 528 : index
    %277 = vector.load %arg14[%c1_327, %c528_328] : memref<2x1024xf32, #tpu.memory_space<vmem>>, vector<1x16xf32>
    tpu.vector_store %arg14[%c1_327, %c528_328], %276 {strides = array<i32>} : memref<2x1024xf32, #tpu.memory_space<vmem>>, vector<1x16xf32>,
    %c34_329 = arith.constant 34 : index
    %c20_330 = arith.constant 20 : index
    %278 = vector.load %arg13[%c34_329, %c20_330] : memref<64x36xf32, #tpu.memory_space<vmem>>, vector<1x16xf32>
    %c1_331 = arith.constant 1 : index
    %c544_332 = arith.constant 544 : index
    %279 = vector.load %arg14[%c1_331, %c544_332] : memref<2x1024xf32, #tpu.memory_space<vmem>>, vector<1x16xf32>
    tpu.vector_store %arg14[%c1_331, %c544_332], %278 {strides = array<i32>} : memref<2x1024xf32, #tpu.memory_space<vmem>>, vector<1x16xf32>,
    %c35_333 = arith.constant 35 : index
    %c20_334 = arith.constant 20 : index
    %280 = vector.load %arg13[%c35_333, %c20_334] : memref<64x36xf32, #tpu.memory_space<vmem>>, vector<1x16xf32>
    %c1_335 = arith.constant 1 : index
    %c560_336 = arith.constant 560 : index
    %281 = vector.load %arg14[%c1_335, %c560_336] : memref<2x1024xf32, #tpu.memory_space<vmem>>, vector<1x16xf32>
    tpu.vector_store %arg14[%c1_335, %c560_336], %280 {strides = array<i32>} : memref<2x1024xf32, #tpu.memory_space<vmem>>, vector<1x16xf32>,
    %c36_337 = arith.constant 36 : index
    %c20_338 = arith.constant 20 : index
    %282 = vector.load %arg13[%c36_337, %c20_338] : memref<64x36xf32, #tpu.memory_space<vmem>>, vector<1x16xf32>
    %c1_339 = arith.constant 1 : index
    %c576_340 = arith.constant 576 : index
    %283 = vector.load %arg14[%c1_339, %c576_340] : memref<2x1024xf32, #tpu.memory_space<vmem>>, vector<1x16xf32>
    tpu.vector_store %arg14[%c1_339, %c576_340], %282 {strides = array<i32>} : memref<2x1024xf32, #tpu.memory_space<vmem>>, vector<1x16xf32>,
    %c37_341 = arith.constant 37 : index
    %c20_342 = arith.constant 20 : index
    %284 = vector.load %arg13[%c37_341, %c20_342] : memref<64x36xf32, #tpu.memory_space<vmem>>, vector<1x16xf32>
    %c1_343 = arith.constant 1 : index
    %c592_344 = arith.constant 592 : index
    %285 = vector.load %arg14[%c1_343, %c592_344] : memref<2x1024xf32, #tpu.memory_space<vmem>>, vector<1x16xf32>
    tpu.vector_store %arg14[%c1_343, %c592_344], %284 {strides = array<i32>} : memref<2x1024xf32, #tpu.memory_space<vmem>>, vector<1x16xf32>,
    %c38_345 = arith.constant 38 : index
    %c20_346 = arith.constant 20 : index
    %286 = vector.load %arg13[%c38_345, %c20_346] : memref<64x36xf32, #tpu.memory_space<vmem>>, vector<1x16xf32>
    %c1_347 = arith.constant 1 : index
    %c608_348 = arith.constant 608 : index
    %287 = vector.load %arg14[%c1_347, %c608_348] : memref<2x1024xf32, #tpu.memory_space<vmem>>, vector<1x16xf32>
    tpu.vector_store %arg14[%c1_347, %c608_348], %286 {strides = array<i32>} : memref<2x1024xf32, #tpu.memory_space<vmem>>, vector<1x16xf32>,
    %c39_349 = arith.constant 39 : index
    %c20_350 = arith.constant 20 : index
    %288 = vector.load %arg13[%c39_349, %c20_350] : memref<64x36xf32, #tpu.memory_space<vmem>>, vector<1x16xf32>
    %c1_351 = arith.constant 1 : index
    %c624_352 = arith.constant 624 : index
    %289 = vector.load %arg14[%c1_351, %c624_352] : memref<2x1024xf32, #tpu.memory_space<vmem>>, vector<1x16xf32>
    tpu.vector_store %arg14[%c1_351, %c624_352], %288 {strides = array<i32>} : memref<2x1024xf32, #tpu.memory_space<vmem>>, vector<1x16xf32>,
    %c40_353 = arith.constant 40 : index
    %c20_354 = arith.constant 20 : index
    %290 = vector.load %arg13[%c40_353, %c20_354] : memref<64x36xf32, #tpu.memory_space<vmem>>, vector<1x16xf32>
    %c1_355 = arith.constant 1 : index
    %c640_356 = arith.constant 640 : index
    %291 = vector.load %arg14[%c1_355, %c640_356] : memref<2x1024xf32, #tpu.memory_space<vmem>>, vector<1x16xf32>
    tpu.vector_store %arg14[%c1_355, %c640_356], %290 {strides = array<i32>} : memref<2x1024xf32, #tpu.memory_space<vmem>>, vector<1x16xf32>,
    %c41_357 = arith.constant 41 : index
    %c20_358 = arith.constant 20 : index
    %292 = vector.load %arg13[%c41_357, %c20_358] : memref<64x36xf32, #tpu.memory_space<vmem>>, vector<1x16xf32>
    %c1_359 = arith.constant 1 : index
    %c656_360 = arith.constant 656 : index
    %293 = vector.load %arg14[%c1_359, %c656_360] : memref<2x1024xf32, #tpu.memory_space<vmem>>, vector<1x16xf32>
    tpu.vector_store %arg14[%c1_359, %c656_360], %292 {strides = array<i32>} : memref<2x1024xf32, #tpu.memory_space<vmem>>, vector<1x16xf32>,
    %c42_361 = arith.constant 42 : index
    %c20_362 = arith.constant 20 : index
    %294 = vector.load %arg13[%c42_361, %c20_362] : memref<64x36xf32, #tpu.memory_space<vmem>>, vector<1x16xf32>
    %c1_363 = arith.constant 1 : index
    %c672_364 = arith.constant 672 : index
    %295 = vector.load %arg14[%c1_363, %c672_364] : memref<2x1024xf32, #tpu.memory_space<vmem>>, vector<1x16xf32>
    tpu.vector_store %arg14[%c1_363, %c672_364], %294 {strides = array<i32>} : memref<2x1024xf32, #tpu.memory_space<vmem>>, vector<1x16xf32>,
    %c43_365 = arith.constant 43 : index
    %c20_366 = arith.constant 20 : index
    %296 = vector.load %arg13[%c43_365, %c20_366] : memref<64x36xf32, #tpu.memory_space<vmem>>, vector<1x16xf32>
    %c1_367 = arith.constant 1 : index
    %c688_368 = arith.constant 688 : index
    %297 = vector.load %arg14[%c1_367, %c688_368] : memref<2x1024xf32, #tpu.memory_space<vmem>>, vector<1x16xf32>
    tpu.vector_store %arg14[%c1_367, %c688_368], %296 {strides = array<i32>} : memref<2x1024xf32, #tpu.memory_space<vmem>>, vector<1x16xf32>,
    %c44_369 = arith.constant 44 : index
    %c20_370 = arith.constant 20 : index
    %298 = vector.load %arg13[%c44_369, %c20_370] : memref<64x36xf32, #tpu.memory_space<vmem>>, vector<1x16xf32>
    %c1_371 = arith.constant 1 : index
    %c704_372 = arith.constant 704 : index
    %299 = vector.load %arg14[%c1_371, %c704_372] : memref<2x1024xf32, #tpu.memory_space<vmem>>, vector<1x16xf32>
    tpu.vector_store %arg14[%c1_371, %c704_372], %298 {strides = array<i32>} : memref<2x1024xf32, #tpu.memory_space<vmem>>, vector<1x16xf32>,
    %c45_373 = arith.constant 45 : index
    %c20_374 = arith.constant 20 : index
    %300 = vector.load %arg13[%c45_373, %c20_374] : memref<64x36xf32, #tpu.memory_space<vmem>>, vector<1x16xf32>
    %c1_375 = arith.constant 1 : index
    %c720_376 = arith.constant 720 : index
    %301 = vector.load %arg14[%c1_375, %c720_376] : memref<2x1024xf32, #tpu.memory_space<vmem>>, vector<1x16xf32>
    tpu.vector_store %arg14[%c1_375, %c720_376], %300 {strides = array<i32>} : memref<2x1024xf32, #tpu.memory_space<vmem>>, vector<1x16xf32>,
    %c46_377 = arith.constant 46 : index
    %c20_378 = arith.constant 20 : index
    %302 = vector.load %arg13[%c46_377, %c20_378] : memref<64x36xf32, #tpu.memory_space<vmem>>, vector<1x16xf32>
    %c1_379 = arith.constant 1 : index
    %c736_380 = arith.constant 736 : index
    %303 = vector.load %arg14[%c1_379, %c736_380] : memref<2x1024xf32, #tpu.memory_space<vmem>>, vector<1x16xf32>
    tpu.vector_store %arg14[%c1_379, %c736_380], %302 {strides = array<i32>} : memref<2x1024xf32, #tpu.memory_space<vmem>>, vector<1x16xf32>,
    %c47_381 = arith.constant 47 : index
    %c20_382 = arith.constant 20 : index
    %304 = vector.load %arg13[%c47_381, %c20_382] : memref<64x36xf32, #tpu.memory_space<vmem>>, vector<1x16xf32>
    %c1_383 = arith.constant 1 : index
    %c752_384 = arith.constant 752 : index
    %305 = vector.load %arg14[%c1_383, %c752_384] : memref<2x1024xf32, #tpu.memory_space<vmem>>, vector<1x16xf32>
    tpu.vector_store %arg14[%c1_383, %c752_384], %304 {strides = array<i32>} : memref<2x1024xf32, #tpu.memory_space<vmem>>, vector<1x16xf32>,
    %c48_385 = arith.constant 48 : index
    %c20_386 = arith.constant 20 : index
    %306 = vector.load %arg13[%c48_385, %c20_386] : memref<64x36xf32, #tpu.memory_space<vmem>>, vector<1x16xf32>
    %c1_387 = arith.constant 1 : index
    %c768_388 = arith.constant 768 : index
    %307 = vector.load %arg14[%c1_387, %c768_388] : memref<2x1024xf32, #tpu.memory_space<vmem>>, vector<1x16xf32>
    tpu.vector_store %arg14[%c1_387, %c768_388], %306 {strides = array<i32>} : memref<2x1024xf32, #tpu.memory_space<vmem>>, vector<1x16xf32>,
    %c49_389 = arith.constant 49 : index
    %c20_390 = arith.constant 20 : index
    %308 = vector.load %arg13[%c49_389, %c20_390] : memref<64x36xf32, #tpu.memory_space<vmem>>, vector<1x16xf32>
    %c1_391 = arith.constant 1 : index
    %c784_392 = arith.constant 784 : index
    %309 = vector.load %arg14[%c1_391, %c784_392] : memref<2x1024xf32, #tpu.memory_space<vmem>>, vector<1x16xf32>
    tpu.vector_store %arg14[%c1_391, %c784_392], %308 {strides = array<i32>} : memref<2x1024xf32, #tpu.memory_space<vmem>>, vector<1x16xf32>,
    %c50_393 = arith.constant 50 : index
    %c20_394 = arith.constant 20 : index
    %310 = vector.load %arg13[%c50_393, %c20_394] : memref<64x36xf32, #tpu.memory_space<vmem>>, vector<1x16xf32>
    %c1_395 = arith.constant 1 : index
    %c800_396 = arith.constant 800 : index
    %311 = vector.load %arg14[%c1_395, %c800_396] : memref<2x1024xf32, #tpu.memory_space<vmem>>, vector<1x16xf32>
    tpu.vector_store %arg14[%c1_395, %c800_396], %310 {strides = array<i32>} : memref<2x1024xf32, #tpu.memory_space<vmem>>, vector<1x16xf32>,
    %c51_397 = arith.constant 51 : index
    %c20_398 = arith.constant 20 : index
    %312 = vector.load %arg13[%c51_397, %c20_398] : memref<64x36xf32, #tpu.memory_space<vmem>>, vector<1x16xf32>
    %c1_399 = arith.constant 1 : index
    %c816_400 = arith.constant 816 : index
    %313 = vector.load %arg14[%c1_399, %c816_400] : memref<2x1024xf32, #tpu.memory_space<vmem>>, vector<1x16xf32>
    tpu.vector_store %arg14[%c1_399, %c816_400], %312 {strides = array<i32>} : memref<2x1024xf32, #tpu.memory_space<vmem>>, vector<1x16xf32>,
    %c52_401 = arith.constant 52 : index
    %c20_402 = arith.constant 20 : index
    %314 = vector.load %arg13[%c52_401, %c20_402] : memref<64x36xf32, #tpu.memory_space<vmem>>, vector<1x16xf32>
    %c1_403 = arith.constant 1 : index
    %c832_404 = arith.constant 832 : index
    %315 = vector.load %arg14[%c1_403, %c832_404] : memref<2x1024xf32, #tpu.memory_space<vmem>>, vector<1x16xf32>
    tpu.vector_store %arg14[%c1_403, %c832_404], %314 {strides = array<i32>} : memref<2x1024xf32, #tpu.memory_space<vmem>>, vector<1x16xf32>,
    %c53_405 = arith.constant 53 : index
    %c20_406 = arith.constant 20 : index
    %316 = vector.load %arg13[%c53_405, %c20_406] : memref<64x36xf32, #tpu.memory_space<vmem>>, vector<1x16xf32>
    %c1_407 = arith.constant 1 : index
    %c848_408 = arith.constant 848 : index
    %317 = vector.load %arg14[%c1_407, %c848_408] : memref<2x1024xf32, #tpu.memory_space<vmem>>, vector<1x16xf32>
    tpu.vector_store %arg14[%c1_407, %c848_408], %316 {strides = array<i32>} : memref<2x1024xf32, #tpu.memory_space<vmem>>, vector<1x16xf32>,
    %c54_409 = arith.constant 54 : index
    %c20_410 = arith.constant 20 : index
    %318 = vector.load %arg13[%c54_409, %c20_410] : memref<64x36xf32, #tpu.memory_space<vmem>>, vector<1x16xf32>
    %c1_411 = arith.constant 1 : index
    %c864_412 = arith.constant 864 : index
    %319 = vector.load %arg14[%c1_411, %c864_412] : memref<2x1024xf32, #tpu.memory_space<vmem>>, vector<1x16xf32>
    tpu.vector_store %arg14[%c1_411, %c864_412], %318 {strides = array<i32>} : memref<2x1024xf32, #tpu.memory_space<vmem>>, vector<1x16xf32>,
    %c55_413 = arith.constant 55 : index
    %c20_414 = arith.constant 20 : index
    %320 = vector.load %arg13[%c55_413, %c20_414] : memref<64x36xf32, #tpu.memory_space<vmem>>, vector<1x16xf32>
    %c1_415 = arith.constant 1 : index
    %c880_416 = arith.constant 880 : index
    %321 = vector.load %arg14[%c1_415, %c880_416] : memref<2x1024xf32, #tpu.memory_space<vmem>>, vector<1x16xf32>
    tpu.vector_store %arg14[%c1_415, %c880_416], %320 {strides = array<i32>} : memref<2x1024xf32, #tpu.memory_space<vmem>>, vector<1x16xf32>,
    %c56_417 = arith.constant 56 : index
    %c20_418 = arith.constant 20 : index
    %322 = vector.load %arg13[%c56_417, %c20_418] : memref<64x36xf32, #tpu.memory_space<vmem>>, vector<1x16xf32>
    %c1_419 = arith.constant 1 : index
    %c896_420 = arith.constant 896 : index
    %323 = vector.load %arg14[%c1_419, %c896_420] : memref<2x1024xf32, #tpu.memory_space<vmem>>, vector<1x16xf32>
    tpu.vector_store %arg14[%c1_419, %c896_420], %322 {strides = array<i32>} : memref<2x1024xf32, #tpu.memory_space<vmem>>, vector<1x16xf32>,
    %c57_421 = arith.constant 57 : index
    %c20_422 = arith.constant 20 : index
    %324 = vector.load %arg13[%c57_421, %c20_422] : memref<64x36xf32, #tpu.memory_space<vmem>>, vector<1x16xf32>
    %c1_423 = arith.constant 1 : index
    %c912_424 = arith.constant 912 : index
    %325 = vector.load %arg14[%c1_423, %c912_424] : memref<2x1024xf32, #tpu.memory_space<vmem>>, vector<1x16xf32>
    tpu.vector_store %arg14[%c1_423, %c912_424], %324 {strides = array<i32>} : memref<2x1024xf32, #tpu.memory_space<vmem>>, vector<1x16xf32>,
    %c58_425 = arith.constant 58 : index
    %c20_426 = arith.constant 20 : index
    %326 = vector.load %arg13[%c58_425, %c20_426] : memref<64x36xf32, #tpu.memory_space<vmem>>, vector<1x16xf32>
    %c1_427 = arith.constant 1 : index
    %c928_428 = arith.constant 928 : index
    %327 = vector.load %arg14[%c1_427, %c928_428] : memref<2x1024xf32, #tpu.memory_space<vmem>>, vector<1x16xf32>
    tpu.vector_store %arg14[%c1_427, %c928_428], %326 {strides = array<i32>} : memref<2x1024xf32, #tpu.memory_space<vmem>>, vector<1x16xf32>,
    %c59_429 = arith.constant 59 : index
    %c20_430 = arith.constant 20 : index
    %328 = vector.load %arg13[%c59_429, %c20_430] : memref<64x36xf32, #tpu.memory_space<vmem>>, vector<1x16xf32>
    %c1_431 = arith.constant 1 : index
    %c944_432 = arith.constant 944 : index
    %329 = vector.load %arg14[%c1_431, %c944_432] : memref<2x1024xf32, #tpu.memory_space<vmem>>, vector<1x16xf32>
    tpu.vector_store %arg14[%c1_431, %c944_432], %328 {strides = array<i32>} : memref<2x1024xf32, #tpu.memory_space<vmem>>, vector<1x16xf32>,
    %c60_433 = arith.constant 60 : index
    %c20_434 = arith.constant 20 : index
    %330 = vector.load %arg13[%c60_433, %c20_434] : memref<64x36xf32, #tpu.memory_space<vmem>>, vector<1x16xf32>
    %c1_435 = arith.constant 1 : index
    %c960_436 = arith.constant 960 : index
    %331 = vector.load %arg14[%c1_435, %c960_436] : memref<2x1024xf32, #tpu.memory_space<vmem>>, vector<1x16xf32>
    tpu.vector_store %arg14[%c1_435, %c960_436], %330 {strides = array<i32>} : memref<2x1024xf32, #tpu.memory_space<vmem>>, vector<1x16xf32>,
    %c61_437 = arith.constant 61 : index
    %c20_438 = arith.constant 20 : index
    %332 = vector.load %arg13[%c61_437, %c20_438] : memref<64x36xf32, #tpu.memory_space<vmem>>, vector<1x16xf32>
    %c1_439 = arith.constant 1 : index
    %c976_440 = arith.constant 976 : index
    %333 = vector.load %arg14[%c1_439, %c976_440] : memref<2x1024xf32, #tpu.memory_space<vmem>>, vector<1x16xf32>
    tpu.vector_store %arg14[%c1_439, %c976_440], %332 {strides = array<i32>} : memref<2x1024xf32, #tpu.memory_space<vmem>>, vector<1x16xf32>,
    %c62_441 = arith.constant 62 : index
    %c20_442 = arith.constant 20 : index
    %334 = vector.load %arg13[%c62_441, %c20_442] : memref<64x36xf32, #tpu.memory_space<vmem>>, vector<1x16xf32>
    %c1_443 = arith.constant 1 : index
    %c992_444 = arith.constant 992 : index
    %335 = vector.load %arg14[%c1_443, %c992_444] : memref<2x1024xf32, #tpu.memory_space<vmem>>, vector<1x16xf32>
    tpu.vector_store %arg14[%c1_443, %c992_444], %334 {strides = array<i32>} : memref<2x1024xf32, #tpu.memory_space<vmem>>, vector<1x16xf32>,
    %c63_445 = arith.constant 63 : index
    %c20_446 = arith.constant 20 : index
    %336 = vector.load %arg13[%c63_445, %c20_446] : memref<64x36xf32, #tpu.memory_space<vmem>>, vector<1x16xf32>
    %c1_447 = arith.constant 1 : index
    %c1008_448 = arith.constant 1008 : index
    %337 = vector.load %arg14[%c1_447, %c1008_448] : memref<2x1024xf32, #tpu.memory_space<vmem>>, vector<1x16xf32>
    tpu.vector_store %arg14[%c1_447, %c1008_448], %336 {strides = array<i32>} : memref<2x1024xf32, #tpu.memory_space<vmem>>, vector<1x16xf32>,
    %c0_449 = arith.constant 0 : index
    %c0_450 = arith.constant 0 : index
    %338 = vector.load %arg14[%c0_449, %c0_450] : memref<2x1024xf32, #tpu.memory_space<vmem>>, vector<2x1024xf32>
    %c0_451 = arith.constant 0 : index
    %c0_452 = arith.constant 0 : index
    %339 = vector.load %arg7[%c0_451, %c0_452] : memref<1024x128xf32, #tpu.memory_space<vmem>>, vector<1024x128xf32>
    %cst_453 = arith.constant dense<0.000000e+00> : vector<2x128xf32>
    %340 = tpu.matmul %338, %339, %cst_453 {dimension_numbers = #tpu.dot_dimension_numbers<[1], [0], [0], [1], [0, 0, 1, 1], [], []>} : vector<2x1024xf32>, vector<1024x128xf32>, vector<2x128xf32> -> vector<2x128xf32>
    %c0_454 = arith.constant 0 : index
    %c0_455 = arith.constant 0 : index
    %341 = vector.load %arg8[%c0_454, %c0_455] : memref<1x128xf32, #tpu.memory_space<vmem>>, vector<1x128xf32>
    %342 = vector.broadcast %341 : vector<1x128xf32> to vector<2x128xf32>
    %343 = arith.addf %340, %342 : vector<2x128xf32>
    %cst_456 = arith.constant 5.000000e-01 : f32
    %344 = vector.broadcast %cst_456 : f32 to vector<2x128xf32>
    %345 = arith.mulf %344, %343 : vector<2x128xf32>
    %346 = math.tanh %345 : vector<2x128xf32>
    %cst_457 = arith.constant 5.000000e-01 : f32
    %347 = vector.broadcast %cst_457 : f32 to vector<2x128xf32>
    %348 = arith.mulf %347, %346 : vector<2x128xf32>
    %cst_458 = arith.constant 5.000000e-01 : f32
    %349 = vector.broadcast %cst_458 : f32 to vector<2x128xf32>
    %350 = arith.addf %348, %349 : vector<2x128xf32>
    %c0_459 = arith.constant 0 : index
    %c0_460 = arith.constant 0 : index
    %351 = vector.load %arg9[%c0_459, %c0_460] : memref<128x4xf32, #tpu.memory_space<vmem>>, vector<128x4xf32>
    %cst_461 = arith.constant dense<0.000000e+00> : vector<2x4xf32>
    %352 = tpu.matmul %350, %351, %cst_461 {dimension_numbers = #tpu.dot_dimension_numbers<[1], [0], [0], [1], [0, 0, 1, 1], [], []>} : vector<2x128xf32>, vector<128x4xf32>, vector<2x4xf32> -> vector<2x4xf32>
    %c0_462 = arith.constant 0 : index
    %c0_463 = arith.constant 0 : index
    %353 = vector.load %arg10[%c0_462, %c0_463] : memref<1x4xf32, #tpu.memory_space<vmem>>, vector<1x4xf32>
    %354 = vector.broadcast %353 : vector<1x4xf32> to vector<2x4xf32>
    %355 = arith.addf %352, %354 : vector<2x4xf32>
    %c0_464 = arith.constant 0 : index
    %c0_465 = arith.constant 0 : index
    %356 = vector.load %arg11[%c0_464, %c0_465] : memref<2x4xf32, #tpu.memory_space<vmem>>, vector<2x4xf32>
    tpu.vector_store %arg11[%c0_464, %c0_465], %355 {strides = array<i32>} : memref<2x4xf32, #tpu.memory_space<vmem>>, vector<2x4xf32>,
    return
  }
  func.func @transform_0(%arg0: i32) -> (i32, i32, i32) {
    %c0_i32 = arith.constant 0 : i32
    %c0_i32_0 = arith.constant 0 : i32
    %c0_i32_1 = arith.constant 0 : i32
    return %arg0, %c0_i32, %c0_i32_0 : i32, i32, i32
  }
  func.func @transform_1(%arg0: i32) -> (i32, i32) {
    %c0_i32 = arith.constant 0 : i32
    %c0_i32_0 = arith.constant 0 : i32
    %c0_i32_1 = arith.constant 0 : i32
    return %c0_i32, %c0_i32_0 : i32, i32
  }
  func.func @transform_2(%arg0: i32) -> (i32, i32) {
    %c0_i32 = arith.constant 0 : i32
    %c0_i32_0 = arith.constant 0 : i32
    %c0_i32_1 = arith.constant 0 : i32
    return %c0_i32, %c0_i32_0 : i32, i32
  }
  func.func @transform_3(%arg0: i32) -> (i32, i32) {
    %c0_i32 = arith.constant 0 : i32
    %c0_i32_0 = arith.constant 0 : i32
    %c0_i32_1 = arith.constant 0 : i32
    return %c0_i32, %c0_i32_0 : i32, i32
  }
  func.func @transform_4(%arg0: i32) -> (i32, i32, i32) {
    %c0_i32 = arith.constant 0 : i32
    %c0_i32_0 = arith.constant 0 : i32
    %c0_i32_1 = arith.constant 0 : i32
    %c0_i32_2 = arith.constant 0 : i32
    return %c0_i32, %c0_i32_0, %c0_i32_1 : i32, i32, i32
  }
  func.func @transform_5(%arg0: i32) -> (i32, i32) {
    %c0_i32 = arith.constant 0 : i32
    %c0_i32_0 = arith.constant 0 : i32
    %c0_i32_1 = arith.constant 0 : i32
    return %c0_i32, %c0_i32_0 : i32, i32
  }
  func.func @transform_6(%arg0: i32) -> (i32, i32) {
    %c0_i32 = arith.constant 0 : i32
    %c0_i32_0 = arith.constant 0 : i32
    %c0_i32_1 = arith.constant 0 : i32
    return %c0_i32, %c0_i32_0 : i32, i32
  }
  func.func @transform_7(%arg0: i32) -> (i32, i32) {
    %c0_i32 = arith.constant 0 : i32
    %c0_i32_0 = arith.constant 0 : i32
    %c0_i32_1 = arith.constant 0 : i32
    return %c0_i32, %c0_i32_0 : i32, i32
  }
  func.func @transform_8(%arg0: i32) -> (i32, i32) {
    %c0_i32 = arith.constant 0 : i32
    %c0_i32_0 = arith.constant 0 : i32
    %c0_i32_1 = arith.constant 0 : i32
    return %c0_i32, %c0_i32_0 : i32, i32
  }
  func.func @transform_9(%arg0: i32) -> (i32, i32) {
    %c0_i32 = arith.constant 0 : i32
    %c0_i32_0 = arith.constant 0 : i32
    %c0_i32_1 = arith.constant 0 : i32
    return %c0_i32, %c0_i32_0 : i32, i32
  }
  func.func @transform_10(%arg0: i32) -> (i32, i32) {
    %c0_i32 = arith.constant 0 : i32
    %c0_i32_0 = arith.constant 0 : i32
    return %arg0, %c0_i32 : i32, i32
  }
}

</mosaic_0001>

<llo_original>
// kernel: cnn_wen_forward.1
$region0: #{cnn_wen_forward.1}
  #allocation0 [shape = 'u32[]', space=smem, size = 0x4, offset = 0x4, fixed_abs, tag = 'smem constant byte address 0x4 - core index']
  #allocation1 [shape = 'u32[144,128]{1,0:T(1,128)}', space=vmem, size = 0x12000, scoped, tag = 'internal scratch']
  #allocation2 [shape = 'f32[64,40]{1,0:T(8,128)}', space=vmem, size = 0x8000, scoped, tag = 'scratch operand']
  #allocation3 [shape = 'f32[64,36]{1,0:T(8,128)}', space=vmem, size = 0x8000, scoped, tag = 'scratch operand']
  #allocation4 [shape = 'f32[2,1024]{1,0:T(2,128)}', space=vmem, size = 0x2000, scoped, tag = 'scratch operand']
  %s0 = inlined_call_operand.vmem [shape: f32[1,1,40], index: 0, kind: input, shape index: {}]
  %s1 = inlined_call_operand.vmem [shape: f32[1,36], index: 1, kind: input, shape index: {}]
  %s2 = inlined_call_operand.vmem [shape: f32[64,5], index: 2, kind: input, shape index: {}]
  %s3 = inlined_call_operand.vmem [shape: f32[64,1], index: 3, kind: input, shape index: {}]
  %s4 = inlined_call_operand.vmem [shape: f32[5,64,64], index: 4, kind: input, shape index: {}]
  %s5 = inlined_call_operand.vmem [shape: f32[64,1], index: 5, kind: input, shape index: {}]
  %s6 = inlined_call_operand.hbm [shape: f32[1024,128], index: 6, kind: input, shape index: {}]
  %s7 = inlined_call_operand.vmem [shape: f32[1,128], index: 7, kind: input, shape index: {}]
  %s8 = inlined_call_operand.vmem [shape: f32[128,4], index: 8, kind: input, shape index: {}]
  %s9 = inlined_call_operand.vmem [shape: f32[1,4], index: 9, kind: input, shape index: {}]
  %s10 = inlined_call_operand.hbm [shape: f32[2,4], index: 10, kind: output, shape index: {}]
  %s11 = sld [smem:[#allocation0]]
  $region54: #{cnn_wen_forward.1} parent=0
    _
  %s13 = ssub.s32 1, %s11
  %s14 = scalar_select 0, %s13, %s11
  $region1: #{cnn_wen_forward.1} parent=0
    #allocation5 [shape = 'u8[524288]{0}', space=vmem, size = 0x80000, scoped, tag = 'input window, operand 6, single buffered']
    #allocation6 [shape = 's32[1]{0}', space=sflag, size = 0x4, scoped, tag = 'scoped memory for cnn_wen_forward.1']
    #allocation7 [shape = 's32[1]{0}', space=sflag, size = 0x4, scoped, tag = 'scoped memory for cnn_wen_forward.1']
    #allocation8 [shape = 'u8[1024]{0}', space=vmem, size = 0x400, scoped, tag = 'output window, operand 0, single buffered']
    %15 = vsyncpa [#allocation6], 0
    %16 = vsyncpa [#allocation7], 0
    // Predicated region
    $region2: #{cnn_wen_forward.1} parent=1 // pred_check
      _
    $region3: #{cnn_wen_forward.1} parent=1 // pred_check_branch
      %18 = sbr.rel (0) target = $region5
    $region4: #{cnn_wen_forward.1} parent=1 // pred_region
      _
    $region5: #{cnn_wen_forward.1} parent=1 // pred_fallthru
      _
    // Predicated region
    $region6: #{cnn_wen_forward.1} parent=1 // pred_check
      _
    $region7: #{cnn_wen_forward.1} parent=1 // pred_check_branch
      %20 = sbr.rel (0) target = $region9
    $region8: #{cnn_wen_forward.1} parent=1 // pred_region
      _
    $region9: #{cnn_wen_forward.1} parent=1 // pred_fallthru
      _
    // Predicated region
    $region10: #{cnn_wen_forward.1} parent=1 // pred_check
      _
    $region11: #{cnn_wen_forward.1} parent=1 // pred_check_branch
      %22 = sbr.rel (0) target = $region13
    $region12: #{cnn_wen_forward.1} parent=1 // pred_region
      _
    $region13: #{cnn_wen_forward.1} parent=1 // pred_fallthru
      _
    // Predicated region
    $region14: #{cnn_wen_forward.1} parent=1 // pred_check
      _
    $region15: #{cnn_wen_forward.1} parent=1 // pred_check_branch
      %24 = sbr.rel (0) target = $region17
    $region16: #{cnn_wen_forward.1} parent=1 // pred_region
      _
    $region17: #{cnn_wen_forward.1} parent=1 // pred_fallthru
      _
    // Predicated region
    $region18: #{cnn_wen_forward.1} parent=1 // pred_check
      _
    $region19: #{cnn_wen_forward.1} parent=1 // pred_check_branch
      %26 = sbr.rel (0) target = $region21
    $region20: #{cnn_wen_forward.1} parent=1 // pred_region
      _
    $region21: #{cnn_wen_forward.1} parent=1 // pred_fallthru
      _
    // Predicated region
    $region22: #{cnn_wen_forward.1} parent=1 // pred_check
      _
    $region23: #{cnn_wen_forward.1} parent=1 // pred_check_branch
      %28 = sbr.rel (0) target = $region25
    $region24: #{cnn_wen_forward.1} parent=1 // pred_region
      _
    $region25: #{cnn_wen_forward.1} parent=1 // pred_fallthru
      _
    // Predicated region
    $region26: #{cnn_wen_forward.1} parent=1 // pred_check
      _
    $region27: #{cnn_wen_forward.1} parent=1 // pred_check_branch
      %30 = sbr.rel (0) target = $region29
    $region28: #{cnn_wen_forward.1} parent=1 // pred_region
      %s32 = ssub.s32 16384, 16384
      %33 = vsyncadd [#allocation6], %s32
      %s34 = sshll.u32 [#allocation5], 4
      %s35 = int_to_ptr.vmem [resolvable:$true] %s34
      %40 = dma.hbm_to_vmem [thread:$0]  %s6, 16384, %s35, [#allocation6], 128, 128, 8
    $region29: #{cnn_wen_forward.1} parent=1 // pred_fallthru
      _
    // Predicated region
    $region30: #{cnn_wen_forward.1} parent=1 // pred_check
      _
    $region31: #{cnn_wen_forward.1} parent=1 // pred_check_branch
      %42 = sbr.rel (0) target = $region33
    $region32: #{cnn_wen_forward.1} parent=1 // pred_region
      _
    $region33: #{cnn_wen_forward.1} parent=1 // pred_fallthru
      _
    // Predicated region
    $region34: #{cnn_wen_forward.1} parent=1 // pred_check
      _
    $region35: #{cnn_wen_forward.1} parent=1 // pred_check_branch
      %44 = sbr.rel (0) target = $region37
    $region36: #{cnn_wen_forward.1} parent=1 // pred_region
      _
    $region37: #{cnn_wen_forward.1} parent=1 // pred_fallthru
      _
    // Predicated region
    $region38: #{cnn_wen_forward.1} parent=1 // pred_check
      _
    $region39: #{cnn_wen_forward.1} parent=1 // pred_check_branch
      %46 = sbr.rel (0) target = $region41
    $region40: #{cnn_wen_forward.1} parent=1 // pred_region
      _
    $region41: #{cnn_wen_forward.1} parent=1 // pred_fallthru
      _
    // Predicated region
    $region42: #{cnn_wen_forward.1} parent=1 // pred_check
      _
    $region43: #{cnn_wen_forward.1} parent=1 // pred_check_branch
      %48 = sbr.rel (0) target = $region45
    $region44: #{cnn_wen_forward.1} parent=1 // pred_region
      %49 = dma.done [#allocation6], 16384
    $region45: #{cnn_wen_forward.1} parent=1 // pred_fallthru
      _
    %v50 = vld [vmem:[%s0] sm:$0x1]
    %v51 = vld [vmem:[%s2] sm:$0xff]
    %v52 = vld [vmem:[%s2 + $0x8] sm:$0xff]
    %v53 = vld [vmem:[%s2 + $0x10] sm:$0xff]
    %v54 = vld [vmem:[%s2 + $0x18] sm:$0xff]
    %v55 = vld [vmem:[%s2 + $0x20] sm:$0xff]
    %v56 = vld [vmem:[%s2 + $0x28] sm:$0xff]
    %v57 = vld [vmem:[%s2 + $0x30] sm:$0xff]
    %v58 = vld [vmem:[%s2 + $0x38] sm:$0xff]
    %60 = vset.pattern.permute.xlu0 0
    %61 = vperm.xlu0 %60, %v51
    %v62 = vpop.permute.xlu0 %61
    %65 = vset.pattern.permute.xlu0 0
    %66 = vperm.xlu0 %65, %v52
    %v67 = vpop.permute.xlu0 %66
    %70 = vset.pattern.permute.xlu0 0
    %71 = vperm.xlu0 %70, %v53
    %v72 = vpop.permute.xlu0 %71
    %75 = vset.pattern.permute.xlu0 0
    %76 = vperm.xlu0 %75, %v54
    %v77 = vpop.permute.xlu0 %76
    %80 = vset.pattern.permute.xlu0 0
    %81 = vperm.xlu0 %80, %v55
    %v82 = vpop.permute.xlu0 %81
    %85 = vset.pattern.permute.xlu0 0
    %86 = vperm.xlu0 %85, %v56
    %v87 = vpop.permute.xlu0 %86
    %90 = vset.pattern.permute.xlu0 0
    %91 = vperm.xlu0 %90, %v57
    %v92 = vpop.permute.xlu0 %91
    %95 = vset.pattern.permute.xlu0 0
    %96 = vperm.xlu0 %95, %v58
    %v97 = vpop.permute.xlu0 %96
    %v100 = vlaneseq
    %v101 = vshrl.u32 %v100, 7
    %v102 = vsub.s32 0, %v101
    %v103 = vrot.slane %v50, %v102
    %v105 = vmul.f32 %v62, %v103
    %v106 = vmul.f32 %v67, %v103
    %v107 = vmul.f32 %v72, %v103
    %v108 = vmul.f32 %v77, %v103
    %v109 = vmul.f32 %v82, %v103
    %v110 = vmul.f32 %v87, %v103
    %v111 = vmul.f32 %v92, %v103
    %v112 = vmul.f32 %v97, %v103
    %113 = vset.pattern.permute.xlu0 1
    %114 = vperm.xlu0 %113, %v51
    %v115 = vpop.permute.xlu0 %114
    %117 = vset.pattern.permute.xlu0 1
    %118 = vperm.xlu0 %117, %v52
    %v119 = vpop.permute.xlu0 %118
    %121 = vset.pattern.permute.xlu0 1
    %122 = vperm.xlu0 %121, %v53
    %v123 = vpop.permute.xlu0 %122
    %125 = vset.pattern.permute.xlu0 1
    %126 = vperm.xlu0 %125, %v54
    %v127 = vpop.permute.xlu0 %126
    %129 = vset.pattern.permute.xlu0 1
    %130 = vperm.xlu0 %129, %v55
    %v131 = vpop.permute.xlu0 %130
    %133 = vset.pattern.permute.xlu0 1
    %134 = vperm.xlu0 %133, %v56
    %v135 = vpop.permute.xlu0 %134
    %137 = vset.pattern.permute.xlu0 1
    %138 = vperm.xlu0 %137, %v57
    %v139 = vpop.permute.xlu0 %138
    %141 = vset.pattern.permute.xlu0 1
    %142 = vperm.xlu0 %141, %v58
    %v143 = vpop.permute.xlu0 %142
    %v145 = vmul.f32 %v115, %v103
    %v146 = vmul.f32 %v119, %v103
    %v147 = vmul.f32 %v123, %v103
    %v148 = vmul.f32 %v127, %v103
    %v149 = vmul.f32 %v131, %v103
    %v150 = vmul.f32 %v135, %v103
    %v151 = vmul.f32 %v139, %v103
    %v152 = vmul.f32 %v143, %v103
    %161 = vrot.lane.b32.xlu0 %v145, 127
    %v162 = vpop.permute.xlu0 %161
    %163 = vrot.lane.b32.xlu0 %v146, 127
    %v164 = vpop.permute.xlu0 %163
    %165 = vrot.lane.b32.xlu0 %v147, 127
    %v166 = vpop.permute.xlu0 %165
    %167 = vrot.lane.b32.xlu0 %v148, 127
    %v168 = vpop.permute.xlu0 %167
    %169 = vrot.lane.b32.xlu0 %v149, 127
    %v170 = vpop.permute.xlu0 %169
    %171 = vrot.lane.b32.xlu0 %v150, 127
    %v172 = vpop.permute.xlu0 %171
    %173 = vrot.lane.b32.xlu0 %v151, 127
    %v174 = vpop.permute.xlu0 %173
    %175 = vrot.lane.b32.xlu0 %v152, 127
    %v176 = vpop.permute.xlu0 %175
    %v185 = vadd.f32 %v105, %v162
    %v186 = vadd.f32 %v106, %v164
    %v187 = vadd.f32 %v107, %v166
    %v188 = vadd.f32 %v108, %v168
    %v189 = vadd.f32 %v109, %v170
    %v190 = vadd.f32 %v110, %v172
    %v191 = vadd.f32 %v111, %v174
    %v192 = vadd.f32 %v112, %v176
    %193 = vset.pattern.permute.xlu0 2
    %194 = vperm.xlu0 %193, %v51
    %v195 = vpop.permute.xlu0 %194
    %197 = vset.pattern.permute.xlu0 2
    %198 = vperm.xlu0 %197, %v52
    %v199 = vpop.permute.xlu0 %198
    %201 = vset.pattern.permute.xlu0 2
    %202 = vperm.xlu0 %201, %v53
    %v203 = vpop.permute.xlu0 %202
    %205 = vset.pattern.permute.xlu0 2
    %206 = vperm.xlu0 %205, %v54
    %v207 = vpop.permute.xlu0 %206
    %209 = vset.pattern.permute.xlu0 2
    %210 = vperm.xlu0 %209, %v55
    %v211 = vpop.permute.xlu0 %210
    %213 = vset.pattern.permute.xlu0 2
    %214 = vperm.xlu0 %213, %v56
    %v215 = vpop.permute.xlu0 %214
    %217 = vset.pattern.permute.xlu0 2
    %218 = vperm.xlu0 %217, %v57
    %v219 = vpop.permute.xlu0 %218
    %221 = vset.pattern.permute.xlu0 2
    %222 = vperm.xlu0 %221, %v58
    %v223 = vpop.permute.xlu0 %222
    %v225 = vmul.f32 %v195, %v103
    %v226 = vmul.f32 %v199, %v103
    %v227 = vmul.f32 %v203, %v103
    %v228 = vmul.f32 %v207, %v103
    %v229 = vmul.f32 %v211, %v103
    %v230 = vmul.f32 %v215, %v103
    %v231 = vmul.f32 %v219, %v103
    %v232 = vmul.f32 %v223, %v103
    %241 = vrot.lane.b32.xlu0 %v225, 126
    %v242 = vpop.permute.xlu0 %241
    %243 = vrot.lane.b32.xlu0 %v226, 126
    %v244 = vpop.permute.xlu0 %243
    %245 = vrot.lane.b32.xlu0 %v227, 126
    %v246 = vpop.permute.xlu0 %245
    %247 = vrot.lane.b32.xlu0 %v228, 126
    %v248 = vpop.permute.xlu0 %247
    %249 = vrot.lane.b32.xlu0 %v229, 126
    %v250 = vpop.permute.xlu0 %249
    %251 = vrot.lane.b32.xlu0 %v230, 126
    %v252 = vpop.permute.xlu0 %251
    %253 = vrot.lane.b32.xlu0 %v231, 126
    %v254 = vpop.permute.xlu0 %253
    %255 = vrot.lane.b32.xlu0 %v232, 126
    %v256 = vpop.permute.xlu0 %255
    %v265 = vadd.f32 %v185, %v242
    %v266 = vadd.f32 %v186, %v244
    %v267 = vadd.f32 %v187, %v246
    %v268 = vadd.f32 %v188, %v248
    %v269 = vadd.f32 %v189, %v250
    %v270 = vadd.f32 %v190, %v252
    %v271 = vadd.f32 %v191, %v254
    %v272 = vadd.f32 %v192, %v256
    %273 = vset.pattern.permute.xlu0 3
    %274 = vperm.xlu0 %273, %v51
    %v275 = vpop.permute.xlu0 %274
    %277 = vset.pattern.permute.xlu0 3
    %278 = vperm.xlu0 %277, %v52
    %v279 = vpop.permute.xlu0 %278
    %281 = vset.pattern.permute.xlu0 3
    %282 = vperm.xlu0 %281, %v53
    %v283 = vpop.permute.xlu0 %282
    %285 = vset.pattern.permute.xlu0 3
    %286 = vperm.xlu0 %285, %v54
    %v287 = vpop.permute.xlu0 %286
    %289 = vset.pattern.permute.xlu0 3
    %290 = vperm.xlu0 %289, %v55
    %v291 = vpop.permute.xlu0 %290
    %293 = vset.pattern.permute.xlu0 3
    %294 = vperm.xlu0 %293, %v56
    %v295 = vpop.permute.xlu0 %294
    %297 = vset.pattern.permute.xlu0 3
    %298 = vperm.xlu0 %297, %v57
    %v299 = vpop.permute.xlu0 %298
    %301 = vset.pattern.permute.xlu0 3
    %302 = vperm.xlu0 %301, %v58
    %v303 = vpop.permute.xlu0 %302
    %v305 = vmul.f32 %v275, %v103
    %v306 = vmul.f32 %v279, %v103
    %v307 = vmul.f32 %v283, %v103
    %v308 = vmul.f32 %v287, %v103
    %v309 = vmul.f32 %v291, %v103
    %v310 = vmul.f32 %v295, %v103
    %v311 = vmul.f32 %v299, %v103
    %v312 = vmul.f32 %v303, %v103
    %321 = vrot.lane.b32.xlu0 %v305, 125
    %v322 = vpop.permute.xlu0 %321
    %323 = vrot.lane.b32.xlu0 %v306, 125
    %v324 = vpop.permute.xlu0 %323
    %325 = vrot.lane.b32.xlu0 %v307, 125
    %v326 = vpop.permute.xlu0 %325
    %327 = vrot.lane.b32.xlu0 %v308, 125
    %v328 = vpop.permute.xlu0 %327
    %329 = vrot.lane.b32.xlu0 %v309, 125
    %v330 = vpop.permute.xlu0 %329
    %331 = vrot.lane.b32.xlu0 %v310, 125
    %v332 = vpop.permute.xlu0 %331
    %333 = vrot.lane.b32.xlu0 %v311, 125
    %v334 = vpop.permute.xlu0 %333
    %335 = vrot.lane.b32.xlu0 %v312, 125
    %v336 = vpop.permute.xlu0 %335
    %v345 = vadd.f32 %v265, %v322
    %v346 = vadd.f32 %v266, %v324
    %v347 = vadd.f32 %v267, %v326
    %v348 = vadd.f32 %v268, %v328
    %v349 = vadd.f32 %v269, %v330
    %v350 = vadd.f32 %v270, %v332
    %v351 = vadd.f32 %v271, %v334
    %v352 = vadd.f32 %v272, %v336
    %353 = vset.pattern.permute.xlu0 4
    %354 = vperm.xlu0 %353, %v51
    %v355 = vpop.permute.xlu0 %354
    %357 = vset.pattern.permute.xlu0 4
    %358 = vperm.xlu0 %357, %v52
    %v359 = vpop.permute.xlu0 %358
    %361 = vset.pattern.permute.xlu0 4
    %362 = vperm.xlu0 %361, %v53
    %v363 = vpop.permute.xlu0 %362
    %365 = vset.pattern.permute.xlu0 4
    %366 = vperm.xlu0 %365, %v54
    %v367 = vpop.permute.xlu0 %366
    %369 = vset.pattern.permute.xlu0 4
    %370 = vperm.xlu0 %369, %v55
    %v371 = vpop.permute.xlu0 %370
    %373 = vset.pattern.permute.xlu0 4
    %374 = vperm.xlu0 %373, %v56
    %v375 = vpop.permute.xlu0 %374
    %377 = vset.pattern.permute.xlu0 4
    %378 = vperm.xlu0 %377, %v57
    %v379 = vpop.permute.xlu0 %378
    %381 = vset.pattern.permute.xlu0 4
    %382 = vperm.xlu0 %381, %v58
    %v383 = vpop.permute.xlu0 %382
    %v385 = vmul.f32 %v355, %v103
    %v386 = vmul.f32 %v359, %v103
    %v387 = vmul.f32 %v363, %v103
    %v388 = vmul.f32 %v367, %v103
    %v389 = vmul.f32 %v371, %v103
    %v390 = vmul.f32 %v375, %v103
    %v391 = vmul.f32 %v379, %v103
    %v392 = vmul.f32 %v383, %v103
    %401 = vrot.lane.b32.xlu0 %v385, 124
    %v402 = vpop.permute.xlu0 %401
    %403 = vrot.lane.b32.xlu0 %v386, 124
    %v404 = vpop.permute.xlu0 %403
    %405 = vrot.lane.b32.xlu0 %v387, 124
    %v406 = vpop.permute.xlu0 %405
    %407 = vrot.lane.b32.xlu0 %v388, 124
    %v408 = vpop.permute.xlu0 %407
    %409 = vrot.lane.b32.xlu0 %v389, 124
    %v410 = vpop.permute.xlu0 %409
    %411 = vrot.lane.b32.xlu0 %v390, 124
    %v412 = vpop.permute.xlu0 %411
    %413 = vrot.lane.b32.xlu0 %v391, 124
    %v414 = vpop.permute.xlu0 %413
    %415 = vrot.lane.b32.xlu0 %v392, 124
    %v416 = vpop.permute.xlu0 %415
    %v425 = vadd.f32 %v345, %v402
    %v426 = vadd.f32 %v346, %v404
    %v427 = vadd.f32 %v347, %v406
    %v428 = vadd.f32 %v348, %v408
    %v429 = vadd.f32 %v349, %v410
    %v430 = vadd.f32 %v350, %v412
    %v431 = vadd.f32 %v351, %v414
    %v432 = vadd.f32 %v352, %v416
    %v433 = vld [vmem:[%s3] sm:$0xff]
    %v434 = vld [vmem:[%s3 + $0x8] sm:$0xff]
    %v435 = vld [vmem:[%s3 + $0x10] sm:$0xff]
    %v436 = vld [vmem:[%s3 + $0x18] sm:$0xff]
    %v437 = vld [vmem:[%s3 + $0x20] sm:$0xff]
    %v438 = vld [vmem:[%s3 + $0x28] sm:$0xff]
    %v439 = vld [vmem:[%s3 + $0x30] sm:$0xff]
    %v440 = vld [vmem:[%s3 + $0x38] sm:$0xff]
    %442 = vset.pattern.permute.xlu0 0
    %443 = vperm.xlu0 %442, %v433
    %v444 = vpop.permute.xlu0 %443
    %447 = vset.pattern.permute.xlu0 0
    %448 = vperm.xlu0 %447, %v434
    %v449 = vpop.permute.xlu0 %448
    %452 = vset.pattern.permute.xlu0 0
    %453 = vperm.xlu0 %452, %v435
    %v454 = vpop.permute.xlu0 %453
    %457 = vset.pattern.permute.xlu0 0
    %458 = vperm.xlu0 %457, %v436
    %v459 = vpop.permute.xlu0 %458
    %462 = vset.pattern.permute.xlu0 0
    %463 = vperm.xlu0 %462, %v437
    %v464 = vpop.permute.xlu0 %463
    %467 = vset.pattern.permute.xlu0 0
    %468 = vperm.xlu0 %467, %v438
    %v469 = vpop.permute.xlu0 %468
    %472 = vset.pattern.permute.xlu0 0
    %473 = vperm.xlu0 %472, %v439
    %v474 = vpop.permute.xlu0 %473
    %477 = vset.pattern.permute.xlu0 0
    %478 = vperm.xlu0 %477, %v440
    %v479 = vpop.permute.xlu0 %478
    %v481 = vadd.f32 %v425, %v444
    %v482 = vadd.f32 %v426, %v449
    %v483 = vadd.f32 %v427, %v454
    %v484 = vadd.f32 %v428, %v459
    %v485 = vadd.f32 %v429, %v464
    %v486 = vadd.f32 %v430, %v469
    %v487 = vadd.f32 %v431, %v474
    %v488 = vadd.f32 %v432, %v479
    %vm489 = vcmask 326656
    %490 = vst.msk [vmem:[#allocation2] sm:$0xff] %vm489, 0.0
    %491 = vst.msk [vmem:[#allocation2 + $0x8] sm:$0xff] %vm489, 0.0
    %492 = vst.msk [vmem:[#allocation2 + $0x10] sm:$0xff] %vm489, 0.0
    %493 = vst.msk [vmem:[#allocation2 + $0x18] sm:$0xff] %vm489, 0.0
    %494 = vst.msk [vmem:[#allocation2 + $0x20] sm:$0xff] %vm489, 0.0
    %495 = vst.msk [vmem:[#allocation2 + $0x28] sm:$0xff] %vm489, 0.0
    %496 = vst.msk [vmem:[#allocation2 + $0x30] sm:$0xff] %vm489, 0.0
    %497 = vst.msk [vmem:[#allocation2 + $0x38] sm:$0xff] %vm489, 0.0
    %v498 = vmul.f32 %v481, 0.5
    %v499 = vmul.f32 %v482, 0.5
    %v500 = vmul.f32 %v483, 0.5
    %v501 = vmul.f32 %v484, 0.5
    %v502 = vmul.f32 %v485, 0.5
    %v503 = vmul.f32 %v486, 0.5
    %v504 = vmul.f32 %v487, 0.5
    %v505 = vmul.f32 %v488, 0.5
    %v506 = vtanh.pop %v498
    %v507 = vtanh.pop %v499
    %v508 = vtanh.pop %v500
    %v509 = vtanh.pop %v501
    %v510 = vtanh.pop %v502
    %v511 = vtanh.pop %v503
    %v512 = vtanh.pop %v504
    %v513 = vtanh.pop %v505
    %v514 = vmul.f32 %v506, 0.5
    %v515 = vmul.f32 %v507, 0.5
    %v516 = vmul.f32 %v508, 0.5
    %v517 = vmul.f32 %v509, 0.5
    %v518 = vmul.f32 %v510, 0.5
    %v519 = vmul.f32 %v511, 0.5
    %v520 = vmul.f32 %v512, 0.5
    %v521 = vmul.f32 %v513, 0.5
    %v522 = vadd.f32 %v514, 0.5
    %v523 = vadd.f32 %v515, 0.5
    %v524 = vadd.f32 %v516, 0.5
    %v525 = vadd.f32 %v517, 0.5
    %v526 = vadd.f32 %v518, 0.5
    %v527 = vadd.f32 %v519, 0.5
    %v528 = vadd.f32 %v520, 0.5
    %v529 = vadd.f32 %v521, 0.5
    %v530 = vld [vmem:[%s1] sm:$0x1]
    %v532 = vlaneseq
    %v533 = vshrl.u32 %v532, 7
    %v534 = vsub.s32 0, %v533
    %v535 = vrot.slane %v530, %v534
    %v537 = vmul.f32 %v522, %v535
    %v538 = vmul.f32 %v523, %v535
    %v539 = vmul.f32 %v524, %v535
    %v540 = vmul.f32 %v525, %v535
    %v541 = vmul.f32 %v526, %v535
    %v542 = vmul.f32 %v527, %v535
    %v543 = vmul.f32 %v528, %v535
    %v544 = vmul.f32 %v529, %v535
    %553 = vrot.lane.b32.xlu0 %v537, 2
    %v554 = vpop.permute.xlu0 %553
    %555 = vrot.lane.b32.xlu0 %v538, 2
    %v556 = vpop.permute.xlu0 %555
    %557 = vrot.lane.b32.xlu0 %v539, 2
    %v558 = vpop.permute.xlu0 %557
    %559 = vrot.lane.b32.xlu0 %v540, 2
    %v560 = vpop.permute.xlu0 %559
    %561 = vrot.lane.b32.xlu0 %v541, 2
    %v562 = vpop.permute.xlu0 %561
    %563 = vrot.lane.b32.xlu0 %v542, 2
    %v564 = vpop.permute.xlu0 %563
    %565 = vrot.lane.b32.xlu0 %v543, 2
    %v566 = vpop.permute.xlu0 %565
    %567 = vrot.lane.b32.xlu0 %v544, 2
    %v568 = vpop.permute.xlu0 %567
    %vm577 = vcmask 310288
    %578 = vst.msk [vmem:[#allocation2] sm:$0xff] %vm577, %v554
    %579 = vst.msk [vmem:[#allocation2 + $0x8] sm:$0xff] %vm577, %v556
    %580 = vst.msk [vmem:[#allocation2 + $0x10] sm:$0xff] %vm577, %v558
    %581 = vst.msk [vmem:[#allocation2 + $0x18] sm:$0xff] %vm577, %v560
    %582 = vst.msk [vmem:[#allocation2 + $0x20] sm:$0xff] %vm577, %v562
    %583 = vst.msk [vmem:[#allocation2 + $0x28] sm:$0xff] %vm577, %v564
    %584 = vst.msk [vmem:[#allocation2 + $0x30] sm:$0xff] %vm577, %v566
    %585 = vst.msk [vmem:[#allocation2 + $0x38] sm:$0xff] %vm577, %v568
    %v586 = vld [vmem:[%s4] sm:$0xff]
    %v587 = vld [vmem:[%s4 + $0x8] sm:$0xff]
    %v588 = vld [vmem:[%s4 + $0x10] sm:$0xff]
    %v589 = vld [vmem:[%s4 + $0x18] sm:$0xff]
    %v590 = vld [vmem:[%s4 + $0x20] sm:$0xff]
    %v591 = vld [vmem:[%s4 + $0x28] sm:$0xff]
    %v592 = vld [vmem:[%s4 + $0x30] sm:$0xff]
    %v593 = vld [vmem:[%s4 + $0x38] sm:$0xff]
    %v594 = vld [vmem:[#allocation2] sm:$0xff]
    %v595 = vld [vmem:[#allocation2 + $0x8] sm:$0xff]
    %v596 = vld [vmem:[#allocation2 + $0x10] sm:$0xff]
    %v597 = vld [vmem:[#allocation2 + $0x18] sm:$0xff]
    %v598 = vld [vmem:[#allocation2 + $0x20] sm:$0xff]
    %v599 = vld [vmem:[#allocation2 + $0x28] sm:$0xff]
    %v600 = vld [vmem:[#allocation2 + $0x30] sm:$0xff]
    %v601 = vld [vmem:[#allocation2 + $0x38] sm:$0xff]
    %s602 = scalar_lea.vmem %s4, 64
    %v603 = vld [vmem:[%s602] sm:$0xff]
    %v604 = vld [vmem:[%s602 + $0x8] sm:$0xff]
    %v605 = vld [vmem:[%s602 + $0x10] sm:$0xff]
    %v606 = vld [vmem:[%s602 + $0x18] sm:$0xff]
    %v607 = vld [vmem:[%s602 + $0x20] sm:$0xff]
    %v608 = vld [vmem:[%s602 + $0x28] sm:$0xff]
    %v609 = vld [vmem:[%s602 + $0x30] sm:$0xff]
    %v610 = vld [vmem:[%s602 + $0x38] sm:$0xff]
    %619 = vrot.lane.b32.xlu0 %v594, 127
    %v620 = vpop.permute.xlu0 %619
    %621 = vrot.lane.b32.xlu0 %v595, 127
    %v622 = vpop.permute.xlu0 %621
    %623 = vrot.lane.b32.xlu0 %v596, 127
    %v624 = vpop.permute.xlu0 %623
    %625 = vrot.lane.b32.xlu0 %v597, 127
    %v626 = vpop.permute.xlu0 %625
    %627 = vrot.lane.b32.xlu0 %v598, 127
    %v628 = vpop.permute.xlu0 %627
    %629 = vrot.lane.b32.xlu0 %v599, 127
    %v630 = vpop.permute.xlu0 %629
    %631 = vrot.lane.b32.xlu0 %v600, 127
    %v632 = vpop.permute.xlu0 %631
    %633 = vrot.lane.b32.xlu0 %v601, 127
    %v634 = vpop.permute.xlu0 %633
    %vm643 = vcmask 523264
    %v645 = vsel %vm643, %v603, 0
    %v648 = vsel %vm643, %v604, 0
    %v651 = vsel %vm643, %v605, 0
    %v654 = vsel %vm643, %v606, 0
    %v657 = vsel %vm643, %v607, 0
    %v660 = vsel %vm643, %v608, 0
    %v663 = vsel %vm643, %v609, 0
    %v666 = vsel %vm643, %v610, 0
    %668 = vmatprep.subr.mxu0 0.0
    %669 = vmatpush1.msra.mxu0 %v620
    %670 = vmatprep.subr.mxu0 0.0
    %671 = vmatpush1.msra.mxu0 %v622
    %672 = vmatprep.subr.mxu0 0.0
    %673 = vmatpush1.msra.mxu0 %v624
    %674 = vmatprep.subr.mxu0 0.0
    %675 = vmatpush1.msra.mxu0 %v626
    %676 = vmatprep.subr.mxu0 0.0
    %677 = vmatpush1.msra.mxu0 %v628
    %678 = vmatprep.subr.mxu0 0.0
    %679 = vmatpush1.msra.mxu0 %v630
    %680 = vmatprep.subr.mxu0 0.0
    %681 = vmatpush1.msra.mxu0 %v632
    %682 = vmatprep.subr.mxu0 0.0
    %683 = vmatpush1.msra.mxu0 %v634
    %684 = vmatprep.subr.mxu0 0.0
    %685 = vmatpush1.msra.mxu0 0.0
    %686 = vmatprep.subr.mxu0 0.0
    %687 = vmatpush1.msra.mxu0 0.0
    %688 = vmatprep.subr.mxu0 0.0
    %689 = vmatpush1.msra.mxu0 0.0
    %690 = vmatprep.subr.mxu0 0.0
    %691 = vmatpush1.msra.mxu0 0.0
    %692 = vmatprep.subr.mxu0 0.0
    %693 = vmatpush1.msra.mxu0 0.0
    %694 = vmatprep.subr.mxu0 0.0
    %695 = vmatpush1.msra.mxu0 0.0
    %696 = vmatprep.subr.mxu0 0.0
    %697 = vmatpush1.msra.mxu0 0.0
    %698 = vmatprep.subr.mxu0 0.0
    %699 = vmatpush1.msra.mxu0 0.0
    %700 = vmatprep.subr.mxu0 0.0
    %701 = vmatpush1.msra.mxu0 0.0
    %702 = vmatprep.subr.mxu0 0.0
    %703 = vmatpush1.msra.mxu0 0.0
    %704 = vmatprep.subr.mxu0 0.0
    %705 = vmatpush1.msra.mxu0 0.0
    %706 = vmatprep.subr.mxu0 0.0
    %707 = vmatpush1.msra.mxu0 0.0
    %708 = vmatprep.subr.mxu0 0.0
    %709 = vmatpush1.msra.mxu0 0.0
    %710 = vmatprep.subr.mxu0 0.0
    %711 = vmatpush1.msra.mxu0 0.0
    %712 = vmatprep.subr.mxu0 0.0
    %713 = vmatpush1.msra.mxu0 0.0
    %714 = vmatprep.subr.mxu0 0.0
    %715 = vmatpush1.msra.mxu0 0.0
    %716 = vmatprep.subr.mxu0 0.0
    %717 = vmatpush1.msra.mxu0 0.0
    %718 = vmatprep.subr.mxu0 0.0
    %719 = vmatpush1.msra.mxu0 0.0
    %720 = vmatprep.subr.mxu0 0.0
    %721 = vmatpush1.msra.mxu0 0.0
    %722 = vmatprep.subr.mxu0 0.0
    %723 = vmatpush1.msra.mxu0 0.0
    %724 = vmatprep.subr.mxu0 0.0
    %725 = vmatpush1.msra.mxu0 0.0
    %726 = vmatprep.subr.mxu0 0.0
    %727 = vmatpush1.msra.mxu0 0.0
    %728 = vmatprep.subr.mxu0 0.0
    %729 = vmatpush1.msra.mxu0 0.0
    %730 = vmatprep.subr.mxu0 0.0
    %731 = vmatpush1.msra.mxu0 0.0
    %732 = vmatprep.mubr.f32.mxu0 0.0
    %733 = vmatmul.mubr.f32.gmra.mrb[0].mxu0 %v645
    %v734 = vpop.f32.mrb[0].mxu0
    %v735 = vadd.f32 0.0, %v734
    %v736 = vpop.f32.mrb[0].mxu0
    %737 = vmatprep.mubr.f32.mxu0 0.0
    %738 = vmatmul.mubr.f32.gmra.mrb[0].mxu0 %v648
    %v739 = vpop.f32.mrb[0].mxu0
    %v740 = vadd.f32 0.0, %v739
    %v741 = vpop.f32.mrb[0].mxu0
    %742 = vmatprep.mubr.f32.mxu0 0.0
    %743 = vmatmul.mubr.f32.gmra.mrb[0].mxu0 %v651
    %v744 = vpop.f32.mrb[0].mxu0
    %v745 = vadd.f32 0.0, %v744
    %v746 = vpop.f32.mrb[0].mxu0
    %747 = vmatprep.mubr.f32.mxu0 0.0
    %748 = vmatmul.mubr.f32.gmra.mrb[0].mxu0 %v654
    %v749 = vpop.f32.mrb[0].mxu0
    %v750 = vadd.f32 0.0, %v749
    %v751 = vpop.f32.mrb[0].mxu0
    %752 = vmatprep.mubr.f32.mxu0 0.0
    %753 = vmatmul.mubr.f32.gmra.mrb[0].mxu0 %v657
    %v754 = vpop.f32.mrb[0].mxu0
    %v755 = vadd.f32 0.0, %v754
    %v756 = vpop.f32.mrb[0].mxu0
    %757 = vmatprep.mubr.f32.mxu0 0.0
    %758 = vmatmul.mubr.f32.gmra.mrb[0].mxu0 %v660
    %v759 = vpop.f32.mrb[0].mxu0
    %v760 = vadd.f32 0.0, %v759
    %v761 = vpop.f32.mrb[0].mxu0
    %762 = vmatprep.mubr.f32.mxu0 0.0
    %763 = vmatmul.mubr.f32.gmra.mrb[0].mxu0 %v663
    %v764 = vpop.f32.mrb[0].mxu0
    %v765 = vadd.f32 0.0, %v764
    %v766 = vpop.f32.mrb[0].mxu0
    %767 = vmatprep.mubr.f32.mxu0 0.0
    %768 = vmatmul.mubr.f32.gmra.mrb[0].mxu0 %v666
    %v769 = vpop.f32.mrb[0].mxu0
    %v770 = vadd.f32 0.0, %v769
    %v771 = vpop.f32.mrb[0].mxu0
    %772 = vdwg.mxu0
    %v774 = vsel %vm643, %v586, 0
    %v777 = vsel %vm643, %v587, 0
    %v780 = vsel %vm643, %v588, 0
    %v783 = vsel %vm643, %v589, 0
    %v786 = vsel %vm643, %v590, 0
    %v789 = vsel %vm643, %v591, 0
    %v792 = vsel %vm643, %v592, 0
    %v795 = vsel %vm643, %v593, 0
    %797 = vmatprep.subr.mxu0 0.0
    %798 = vmatpush1.msra.mxu0 %v594
    %799 = vmatprep.subr.mxu0 0.0
    %800 = vmatpush1.msra.mxu0 %v595
    %801 = vmatprep.subr.mxu0 0.0
    %802 = vmatpush1.msra.mxu0 %v596
    %803 = vmatprep.subr.mxu0 0.0
    %804 = vmatpush1.msra.mxu0 %v597
    %805 = vmatprep.subr.mxu0 0.0
    %806 = vmatpush1.msra.mxu0 %v598
    %807 = vmatprep.subr.mxu0 0.0
    %808 = vmatpush1.msra.mxu0 %v599
    %809 = vmatprep.subr.mxu0 0.0
    %810 = vmatpush1.msra.mxu0 %v600
    %811 = vmatprep.subr.mxu0 0.0
    %812 = vmatpush1.msra.mxu0 %v601
    %813 = vmatprep.subr.mxu0 0.0
    %814 = vmatpush1.msra.mxu0 0.0
    %815 = vmatprep.subr.mxu0 0.0
    %816 = vmatpush1.msra.mxu0 0.0
    %817 = vmatprep.subr.mxu0 0.0
    %818 = vmatpush1.msra.mxu0 0.0
    %819 = vmatprep.subr.mxu0 0.0
    %820 = vmatpush1.msra.mxu0 0.0
    %821 = vmatprep.subr.mxu0 0.0
    %822 = vmatpush1.msra.mxu0 0.0
    %823 = vmatprep.subr.mxu0 0.0
    %824 = vmatpush1.msra.mxu0 0.0
    %825 = vmatprep.subr.mxu0 0.0
    %826 = vmatpush1.msra.mxu0 0.0
    %827 = vmatprep.subr.mxu0 0.0
    %828 = vmatpush1.msra.mxu0 0.0
    %829 = vmatprep.subr.mxu0 0.0
    %830 = vmatpush1.msra.mxu0 0.0
    %831 = vmatprep.subr.mxu0 0.0
    %832 = vmatpush1.msra.mxu0 0.0
    %833 = vmatprep.subr.mxu0 0.0
    %834 = vmatpush1.msra.mxu0 0.0
    %835 = vmatprep.subr.mxu0 0.0
    %836 = vmatpush1.msra.mxu0 0.0
    %837 = vmatprep.subr.mxu0 0.0
    %838 = vmatpush1.msra.mxu0 0.0
    %839 = vmatprep.subr.mxu0 0.0
    %840 = vmatpush1.msra.mxu0 0.0
    %841 = vmatprep.subr.mxu0 0.0
    %842 = vmatpush1.msra.mxu0 0.0
    %843 = vmatprep.subr.mxu0 0.0
    %844 = vmatpush1.msra.mxu0 0.0
    %845 = vmatprep.subr.mxu0 0.0
    %846 = vmatpush1.msra.mxu0 0.0
    %847 = vmatprep.subr.mxu0 0.0
    %848 = vmatpush1.msra.mxu0 0.0
    %849 = vmatprep.subr.mxu0 0.0
    %850 = vmatpush1.msra.mxu0 0.0
    %851 = vmatprep.subr.mxu0 0.0
    %852 = vmatpush1.msra.mxu0 0.0
    %853 = vmatprep.subr.mxu0 0.0
    %854 = vmatpush1.msra.mxu0 0.0
    %855 = vmatprep.subr.mxu0 0.0
    %856 = vmatpush1.msra.mxu0 0.0
    %857 = vmatprep.subr.mxu0 0.0
    %858 = vmatpush1.msra.mxu0 0.0
    %859 = vmatprep.subr.mxu0 0.0
    %860 = vmatpush1.msra.mxu0 0.0
    %861 = vmatprep.mubr.f32.mxu0 0.0
    %862 = vmatmul.mubr.f32.gmra.mrb[0].mxu0 %v774
    %v863 = vpop.f32.mrb[0].mxu0
    %v864 = vadd.f32 %v735, %v863
    %v865 = vpop.f32.mrb[0].mxu0
    %866 = vmatprep.mubr.f32.mxu0 0.0
    %867 = vmatmul.mubr.f32.gmra.mrb[0].mxu0 %v777
    %v868 = vpop.f32.mrb[0].mxu0
    %v869 = vadd.f32 %v740, %v868
    %v870 = vpop.f32.mrb[0].mxu0
    %871 = vmatprep.mubr.f32.mxu0 0.0
    %872 = vmatmul.mubr.f32.gmra.mrb[0].mxu0 %v780
    %v873 = vpop.f32.mrb[0].mxu0
    %v874 = vadd.f32 %v745, %v873
    %v875 = vpop.f32.mrb[0].mxu0
    %876 = vmatprep.mubr.f32.mxu0 0.0
    %877 = vmatmul.mubr.f32.gmra.mrb[0].mxu0 %v783
    %v878 = vpop.f32.mrb[0].mxu0
    %v879 = vadd.f32 %v750, %v878
    %v880 = vpop.f32.mrb[0].mxu0
    %881 = vmatprep.mubr.f32.mxu0 0.0
    %882 = vmatmul.mubr.f32.gmra.mrb[0].mxu0 %v786
    %v883 = vpop.f32.mrb[0].mxu0
    %v884 = vadd.f32 %v755, %v883
    %v885 = vpop.f32.mrb[0].mxu0
    %886 = vmatprep.mubr.f32.mxu0 0.0
    %887 = vmatmul.mubr.f32.gmra.mrb[0].mxu0 %v789
    %v888 = vpop.f32.mrb[0].mxu0
    %v889 = vadd.f32 %v760, %v888
    %v890 = vpop.f32.mrb[0].mxu0
    %891 = vmatprep.mubr.f32.mxu0 0.0
    %892 = vmatmul.mubr.f32.gmra.mrb[0].mxu0 %v792
    %v893 = vpop.f32.mrb[0].mxu0
    %v894 = vadd.f32 %v765, %v893
    %v895 = vpop.f32.mrb[0].mxu0
    %896 = vmatprep.mubr.f32.mxu0 0.0
    %897 = vmatmul.mubr.f32.gmra.mrb[0].mxu0 %v795
    %v898 = vpop.f32.mrb[0].mxu0
    %v899 = vadd.f32 %v770, %v898
    %v900 = vpop.f32.mrb[0].mxu0
    %901 = vdwg.mxu0
    %s902 = scalar_lea.vmem %s4, 128
    %v903 = vld [vmem:[%s902] sm:$0xff]
    %v904 = vld [vmem:[%s902 + $0x8] sm:$0xff]
    %v905 = vld [vmem:[%s902 + $0x10] sm:$0xff]
    %v906 = vld [vmem:[%s902 + $0x18] sm:$0xff]
    %v907 = vld [vmem:[%s902 + $0x20] sm:$0xff]
    %v908 = vld [vmem:[%s902 + $0x28] sm:$0xff]
    %v909 = vld [vmem:[%s902 + $0x30] sm:$0xff]
    %v910 = vld [vmem:[%s902 + $0x38] sm:$0xff]
    %911 = vrot.lane.b32.xlu0 %v594, 126
    %v912 = vpop.permute.xlu0 %911
    %913 = vrot.lane.b32.xlu0 %v595, 126
    %v914 = vpop.permute.xlu0 %913
    %915 = vrot.lane.b32.xlu0 %v596, 126
    %v916 = vpop.permute.xlu0 %915
    %917 = vrot.lane.b32.xlu0 %v597, 126
    %v918 = vpop.permute.xlu0 %917
    %919 = vrot.lane.b32.xlu0 %v598, 126
    %v920 = vpop.permute.xlu0 %919
    %921 = vrot.lane.b32.xlu0 %v599, 126
    %v922 = vpop.permute.xlu0 %921
    %923 = vrot.lane.b32.xlu0 %v600, 126
    %v924 = vpop.permute.xlu0 %923
    %925 = vrot.lane.b32.xlu0 %v601, 126
    %v926 = vpop.permute.xlu0 %925
    %v936 = vsel %vm643, %v903, 0
    %v939 = vsel %vm643, %v904, 0
    %v942 = vsel %vm643, %v905, 0
    %v945 = vsel %vm643, %v906, 0
    %v948 = vsel %vm643, %v907, 0
    %v951 = vsel %vm643, %v908, 0
    %v954 = vsel %vm643, %v909, 0
    %v957 = vsel %vm643, %v910, 0
    %959 = vmatprep.subr.mxu0 0.0
    %960 = vmatpush1.msra.mxu0 %v912
    %961 = vmatprep.subr.mxu0 0.0
    %962 = vmatpush1.msra.mxu0 %v914
    %963 = vmatprep.subr.mxu0 0.0
    %964 = vmatpush1.msra.mxu0 %v916
    %965 = vmatprep.subr.mxu0 0.0
    %966 = vmatpush1.msra.mxu0 %v918
    %967 = vmatprep.subr.mxu0 0.0
    %968 = vmatpush1.msra.mxu0 %v920
    %969 = vmatprep.subr.mxu0 0.0
    %970 = vmatpush1.msra.mxu0 %v922
    %971 = vmatprep.subr.mxu0 0.0
    %972 = vmatpush1.msra.mxu0 %v924
    %973 = vmatprep.subr.mxu0 0.0
    %974 = vmatpush1.msra.mxu0 %v926
    %975 = vmatprep.subr.mxu0 0.0
    %976 = vmatpush1.msra.mxu0 0.0
    %977 = vmatprep.subr.mxu0 0.0
    %978 = vmatpush1.msra.mxu0 0.0
    %979 = vmatprep.subr.mxu0 0.0
    %980 = vmatpush1.msra.mxu0 0.0
    %981 = vmatprep.subr.mxu0 0.0
    %982 = vmatpush1.msra.mxu0 0.0
    %983 = vmatprep.subr.mxu0 0.0
    %984 = vmatpush1.msra.mxu0 0.0
    %985 = vmatprep.subr.mxu0 0.0
    %986 = vmatpush1.msra.mxu0 0.0
    %987 = vmatprep.subr.mxu0 0.0
    %988 = vmatpush1.msra.mxu0 0.0
    %989 = vmatprep.subr.mxu0 0.0
    %990 = vmatpush1.msra.mxu0 0.0
    %991 = vmatprep.subr.mxu0 0.0
    %992 = vmatpush1.msra.mxu0 0.0
    %993 = vmatprep.subr.mxu0 0.0
    %994 = vmatpush1.msra.mxu0 0.0
    %995 = vmatprep.subr.mxu0 0.0
    %996 = vmatpush1.msra.mxu0 0.0
    %997 = vmatprep.subr.mxu0 0.0
    %998 = vmatpush1.msra.mxu0 0.0
    %999 = vmatprep.subr.mxu0 0.0
    %1000 = vmatpush1.msra.mxu0 0.0
    %1001 = vmatprep.subr.mxu0 0.0
    %1002 = vmatpush1.msra.mxu0 0.0
    %1003 = vmatprep.subr.mxu0 0.0
    %1004 = vmatpush1.msra.mxu0 0.0
    %1005 = vmatprep.subr.mxu0 0.0
    %1006 = vmatpush1.msra.mxu0 0.0
    %1007 = vmatprep.subr.mxu0 0.0
    %1008 = vmatpush1.msra.mxu0 0.0
    %1009 = vmatprep.subr.mxu0 0.0
    %1010 = vmatpush1.msra.mxu0 0.0
    %1011 = vmatprep.subr.mxu0 0.0
    %1012 = vmatpush1.msra.mxu0 0.0
    %1013 = vmatprep.subr.mxu0 0.0
    %1014 = vmatpush1.msra.mxu0 0.0
    %1015 = vmatprep.subr.mxu0 0.0
    %1016 = vmatpush1.msra.mxu0 0.0
    %1017 = vmatprep.subr.mxu0 0.0
    %1018 = vmatpush1.msra.mxu0 0.0
    %1019 = vmatprep.subr.mxu0 0.0
    %1020 = vmatpush1.msra.mxu0 0.0
    %1021 = vmatprep.subr.mxu0 0.0
    %1022 = vmatpush1.msra.mxu0 0.0
    %1023 = vmatprep.mubr.f32.mxu0 0.0
    %1024 = vmatmul.mubr.f32.gmra.mrb[0].mxu0 %v936
    %v1025 = vpop.f32.mrb[0].mxu0
    %v1026 = vadd.f32 0.0, %v1025
    %v1027 = vpop.f32.mrb[0].mxu0
    %1028 = vmatprep.mubr.f32.mxu0 0.0
    %1029 = vmatmul.mubr.f32.gmra.mrb[0].mxu0 %v939
    %v1030 = vpop.f32.mrb[0].mxu0
    %v1031 = vadd.f32 0.0, %v1030
    %v1032 = vpop.f32.mrb[0].mxu0
    %1033 = vmatprep.mubr.f32.mxu0 0.0
    %1034 = vmatmul.mubr.f32.gmra.mrb[0].mxu0 %v942
    %v1035 = vpop.f32.mrb[0].mxu0
    %v1036 = vadd.f32 0.0, %v1035
    %v1037 = vpop.f32.mrb[0].mxu0
    %1038 = vmatprep.mubr.f32.mxu0 0.0
    %1039 = vmatmul.mubr.f32.gmra.mrb[0].mxu0 %v945
    %v1040 = vpop.f32.mrb[0].mxu0
    %v1041 = vadd.f32 0.0, %v1040
    %v1042 = vpop.f32.mrb[0].mxu0
    %1043 = vmatprep.mubr.f32.mxu0 0.0
    %1044 = vmatmul.mubr.f32.gmra.mrb[0].mxu0 %v948
    %v1045 = vpop.f32.mrb[0].mxu0
    %v1046 = vadd.f32 0.0, %v1045
    %v1047 = vpop.f32.mrb[0].mxu0
    %1048 = vmatprep.mubr.f32.mxu0 0.0
    %1049 = vmatmul.mubr.f32.gmra.mrb[0].mxu0 %v951
    %v1050 = vpop.f32.mrb[0].mxu0
    %v1051 = vadd.f32 0.0, %v1050
    %v1052 = vpop.f32.mrb[0].mxu0
    %1053 = vmatprep.mubr.f32.mxu0 0.0
    %1054 = vmatmul.mubr.f32.gmra.mrb[0].mxu0 %v954
    %v1055 = vpop.f32.mrb[0].mxu0
    %v1056 = vadd.f32 0.0, %v1055
    %v1057 = vpop.f32.mrb[0].mxu0
    %1058 = vmatprep.mubr.f32.mxu0 0.0
    %1059 = vmatmul.mubr.f32.gmra.mrb[0].mxu0 %v957
    %v1060 = vpop.f32.mrb[0].mxu0
    %v1061 = vadd.f32 0.0, %v1060
    %v1062 = vpop.f32.mrb[0].mxu0
    %1063 = vdwg.mxu0
    %v1064 = vadd.f32 %v864, %v1026
    %v1065 = vadd.f32 %v869, %v1031
    %v1066 = vadd.f32 %v874, %v1036
    %v1067 = vadd.f32 %v879, %v1041
    %v1068 = vadd.f32 %v884, %v1046
    %v1069 = vadd.f32 %v889, %v1051
    %v1070 = vadd.f32 %v894, %v1056
    %v1071 = vadd.f32 %v899, %v1061
    %s1072 = scalar_lea.vmem %s4, 192
    %v1073 = vld [vmem:[%s1072] sm:$0xff]
    %v1074 = vld [vmem:[%s1072 + $0x8] sm:$0xff]
    %v1075 = vld [vmem:[%s1072 + $0x10] sm:$0xff]
    %v1076 = vld [vmem:[%s1072 + $0x18] sm:$0xff]
    %v1077 = vld [vmem:[%s1072 + $0x20] sm:$0xff]
    %v1078 = vld [vmem:[%s1072 + $0x28] sm:$0xff]
    %v1079 = vld [vmem:[%s1072 + $0x30] sm:$0xff]
    %v1080 = vld [vmem:[%s1072 + $0x38] sm:$0xff]
    %1081 = vrot.lane.b32.xlu0 %v594, 125
    %v1082 = vpop.permute.xlu0 %1081
    %1083 = vrot.lane.b32.xlu0 %v595, 125
    %v1084 = vpop.permute.xlu0 %1083
    %1085 = vrot.lane.b32.xlu0 %v596, 125
    %v1086 = vpop.permute.xlu0 %1085
    %1087 = vrot.lane.b32.xlu0 %v597, 125
    %v1088 = vpop.permute.xlu0 %1087
    %1089 = vrot.lane.b32.xlu0 %v598, 125
    %v1090 = vpop.permute.xlu0 %1089
    %1091 = vrot.lane.b32.xlu0 %v599, 125
    %v1092 = vpop.permute.xlu0 %1091
    %1093 = vrot.lane.b32.xlu0 %v600, 125
    %v1094 = vpop.permute.xlu0 %1093
    %1095 = vrot.lane.b32.xlu0 %v601, 125
    %v1096 = vpop.permute.xlu0 %1095
    %v1106 = vsel %vm643, %v1073, 0
    %v1109 = vsel %vm643, %v1074, 0
    %v1112 = vsel %vm643, %v1075, 0
    %v1115 = vsel %vm643, %v1076, 0
    %v1118 = vsel %vm643, %v1077, 0
    %v1121 = vsel %vm643, %v1078, 0
    %v1124 = vsel %vm643, %v1079, 0
    %v1127 = vsel %vm643, %v1080, 0
    %1129 = vmatprep.subr.mxu0 0.0
    %1130 = vmatpush1.msra.mxu0 %v1082
    %1131 = vmatprep.subr.mxu0 0.0
    %1132 = vmatpush1.msra.mxu0 %v1084
    %1133 = vmatprep.subr.mxu0 0.0
    %1134 = vmatpush1.msra.mxu0 %v1086
    %1135 = vmatprep.subr.mxu0 0.0
    %1136 = vmatpush1.msra.mxu0 %v1088
    %1137 = vmatprep.subr.mxu0 0.0
    %1138 = vmatpush1.msra.mxu0 %v1090
    %1139 = vmatprep.subr.mxu0 0.0
    %1140 = vmatpush1.msra.mxu0 %v1092
    %1141 = vmatprep.subr.mxu0 0.0
    %1142 = vmatpush1.msra.mxu0 %v1094
    %1143 = vmatprep.subr.mxu0 0.0
    %1144 = vmatpush1.msra.mxu0 %v1096
    %1145 = vmatprep.subr.mxu0 0.0
    %1146 = vmatpush1.msra.mxu0 0.0
    %1147 = vmatprep.subr.mxu0 0.0
    %1148 = vmatpush1.msra.mxu0 0.0
    %1149 = vmatprep.subr.mxu0 0.0
    %1150 = vmatpush1.msra.mxu0 0.0
    %1151 = vmatprep.subr.mxu0 0.0
    %1152 = vmatpush1.msra.mxu0 0.0
    %1153 = vmatprep.subr.mxu0 0.0
    %1154 = vmatpush1.msra.mxu0 0.0
    %1155 = vmatprep.subr.mxu0 0.0
    %1156 = vmatpush1.msra.mxu0 0.0
    %1157 = vmatprep.subr.mxu0 0.0
    %1158 = vmatpush1.msra.mxu0 0.0
    %1159 = vmatprep.subr.mxu0 0.0
    %1160 = vmatpush1.msra.mxu0 0.0
    %1161 = vmatprep.subr.mxu0 0.0
    %1162 = vmatpush1.msra.mxu0 0.0
    %1163 = vmatprep.subr.mxu0 0.0
    %1164 = vmatpush1.msra.mxu0 0.0
    %1165 = vmatprep.subr.mxu0 0.0
    %1166 = vmatpush1.msra.mxu0 0.0
    %1167 = vmatprep.subr.mxu0 0.0
    %1168 = vmatpush1.msra.mxu0 0.0
    %1169 = vmatprep.subr.mxu0 0.0
    %1170 = vmatpush1.msra.mxu0 0.0
    %1171 = vmatprep.subr.mxu0 0.0
    %1172 = vmatpush1.msra.mxu0 0.0
    %1173 = vmatprep.subr.mxu0 0.0
    %1174 = vmatpush1.msra.mxu0 0.0
    %1175 = vmatprep.subr.mxu0 0.0
    %1176 = vmatpush1.msra.mxu0 0.0
    %1177 = vmatprep.subr.mxu0 0.0
    %1178 = vmatpush1.msra.mxu0 0.0
    %1179 = vmatprep.subr.mxu0 0.0
    %1180 = vmatpush1.msra.mxu0 0.0
    %1181 = vmatprep.subr.mxu0 0.0
    %1182 = vmatpush1.msra.mxu0 0.0
    %1183 = vmatprep.subr.mxu0 0.0
    %1184 = vmatpush1.msra.mxu0 0.0
    %1185 = vmatprep.subr.mxu0 0.0
    %1186 = vmatpush1.msra.mxu0 0.0
    %1187 = vmatprep.subr.mxu0 0.0
    %1188 = vmatpush1.msra.mxu0 0.0
    %1189 = vmatprep.subr.mxu0 0.0
    %1190 = vmatpush1.msra.mxu0 0.0
    %1191 = vmatprep.subr.mxu0 0.0
    %1192 = vmatpush1.msra.mxu0 0.0
    %1193 = vmatprep.mubr.f32.mxu0 0.0
    %1194 = vmatmul.mubr.f32.gmra.mrb[0].mxu0 %v1106
    %v1195 = vpop.f32.mrb[0].mxu0
    %v1196 = vadd.f32 0.0, %v1195
    %v1197 = vpop.f32.mrb[0].mxu0
    %1198 = vmatprep.mubr.f32.mxu0 0.0
    %1199 = vmatmul.mubr.f32.gmra.mrb[0].mxu0 %v1109
    %v1200 = vpop.f32.mrb[0].mxu0
    %v1201 = vadd.f32 0.0, %v1200
    %v1202 = vpop.f32.mrb[0].mxu0
    %1203 = vmatprep.mubr.f32.mxu0 0.0
    %1204 = vmatmul.mubr.f32.gmra.mrb[0].mxu0 %v1112
    %v1205 = vpop.f32.mrb[0].mxu0
    %v1206 = vadd.f32 0.0, %v1205
    %v1207 = vpop.f32.mrb[0].mxu0
    %1208 = vmatprep.mubr.f32.mxu0 0.0
    %1209 = vmatmul.mubr.f32.gmra.mrb[0].mxu0 %v1115
    %v1210 = vpop.f32.mrb[0].mxu0
    %v1211 = vadd.f32 0.0, %v1210
    %v1212 = vpop.f32.mrb[0].mxu0
    %1213 = vmatprep.mubr.f32.mxu0 0.0
    %1214 = vmatmul.mubr.f32.gmra.mrb[0].mxu0 %v1118
    %v1215 = vpop.f32.mrb[0].mxu0
    %v1216 = vadd.f32 0.0, %v1215
    %v1217 = vpop.f32.mrb[0].mxu0
    %1218 = vmatprep.mubr.f32.mxu0 0.0
    %1219 = vmatmul.mubr.f32.gmra.mrb[0].mxu0 %v1121
    %v1220 = vpop.f32.mrb[0].mxu0
    %v1221 = vadd.f32 0.0, %v1220
    %v1222 = vpop.f32.mrb[0].mxu0
    %1223 = vmatprep.mubr.f32.mxu0 0.0
    %1224 = vmatmul.mubr.f32.gmra.mrb[0].mxu0 %v1124
    %v1225 = vpop.f32.mrb[0].mxu0
    %v1226 = vadd.f32 0.0, %v1225
    %v1227 = vpop.f32.mrb[0].mxu0
    %1228 = vmatprep.mubr.f32.mxu0 0.0
    %1229 = vmatmul.mubr.f32.gmra.mrb[0].mxu0 %v1127
    %v1230 = vpop.f32.mrb[0].mxu0
    %v1231 = vadd.f32 0.0, %v1230
    %v1232 = vpop.f32.mrb[0].mxu0
    %1233 = vdwg.mxu0
    %v1234 = vadd.f32 %v1064, %v1196
    %v1235 = vadd.f32 %v1065, %v1201
    %v1236 = vadd.f32 %v1066, %v1206
    %v1237 = vadd.f32 %v1067, %v1211
    %v1238 = vadd.f32 %v1068, %v1216
    %v1239 = vadd.f32 %v1069, %v1221
    %v1240 = vadd.f32 %v1070, %v1226
    %v1241 = vadd.f32 %v1071, %v1231
    %s1242 = scalar_lea.vmem %s4, 256
    %v1243 = vld [vmem:[%s1242] sm:$0xff]
    %v1244 = vld [vmem:[%s1242 + $0x8] sm:$0xff]
    %v1245 = vld [vmem:[%s1242 + $0x10] sm:$0xff]
    %v1246 = vld [vmem:[%s1242 + $0x18] sm:$0xff]
    %v1247 = vld [vmem:[%s1242 + $0x20] sm:$0xff]
    %v1248 = vld [vmem:[%s1242 + $0x28] sm:$0xff]
    %v1249 = vld [vmem:[%s1242 + $0x30] sm:$0xff]
    %v1250 = vld [vmem:[%s1242 + $0x38] sm:$0xff]
    %1251 = vrot.lane.b32.xlu0 %v594, 124
    %v1252 = vpop.permute.xlu0 %1251
    %1253 = vrot.lane.b32.xlu0 %v595, 124
    %v1254 = vpop.permute.xlu0 %1253
    %1255 = vrot.lane.b32.xlu0 %v596, 124
    %v1256 = vpop.permute.xlu0 %1255
    %1257 = vrot.lane.b32.xlu0 %v597, 124
    %v1258 = vpop.permute.xlu0 %1257
    %1259 = vrot.lane.b32.xlu0 %v598, 124
    %v1260 = vpop.permute.xlu0 %1259
    %1261 = vrot.lane.b32.xlu0 %v599, 124
    %v1262 = vpop.permute.xlu0 %1261
    %1263 = vrot.lane.b32.xlu0 %v600, 124
    %v1264 = vpop.permute.xlu0 %1263
    %1265 = vrot.lane.b32.xlu0 %v601, 124
    %v1266 = vpop.permute.xlu0 %1265
    %v1276 = vsel %vm643, %v1243, 0
    %v1279 = vsel %vm643, %v1244, 0
    %v1282 = vsel %vm643, %v1245, 0
    %v1285 = vsel %vm643, %v1246, 0
    %v1288 = vsel %vm643, %v1247, 0
    %v1291 = vsel %vm643, %v1248, 0
    %v1294 = vsel %vm643, %v1249, 0
    %v1297 = vsel %vm643, %v1250, 0
    %1299 = vmatprep.subr.mxu0 0.0
    %1300 = vmatpush1.msra.mxu0 %v1252
    %1301 = vmatprep.subr.mxu0 0.0
    %1302 = vmatpush1.msra.mxu0 %v1254
    %1303 = vmatprep.subr.mxu0 0.0
    %1304 = vmatpush1.msra.mxu0 %v1256
    %1305 = vmatprep.subr.mxu0 0.0
    %1306 = vmatpush1.msra.mxu0 %v1258
    %1307 = vmatprep.subr.mxu0 0.0
    %1308 = vmatpush1.msra.mxu0 %v1260
    %1309 = vmatprep.subr.mxu0 0.0
    %1310 = vmatpush1.msra.mxu0 %v1262
    %1311 = vmatprep.subr.mxu0 0.0
    %1312 = vmatpush1.msra.mxu0 %v1264
    %1313 = vmatprep.subr.mxu0 0.0
    %1314 = vmatpush1.msra.mxu0 %v1266
    %1315 = vmatprep.subr.mxu0 0.0
    %1316 = vmatpush1.msra.mxu0 0.0
    %1317 = vmatprep.subr.mxu0 0.0
    %1318 = vmatpush1.msra.mxu0 0.0
    %1319 = vmatprep.subr.mxu0 0.0
    %1320 = vmatpush1.msra.mxu0 0.0
    %1321 = vmatprep.subr.mxu0 0.0
    %1322 = vmatpush1.msra.mxu0 0.0
    %1323 = vmatprep.subr.mxu0 0.0
    %1324 = vmatpush1.msra.mxu0 0.0
    %1325 = vmatprep.subr.mxu0 0.0
    %1326 = vmatpush1.msra.mxu0 0.0
    %1327 = vmatprep.subr.mxu0 0.0
    %1328 = vmatpush1.msra.mxu0 0.0
    %1329 = vmatprep.subr.mxu0 0.0
    %1330 = vmatpush1.msra.mxu0 0.0
    %1331 = vmatprep.subr.mxu0 0.0
    %1332 = vmatpush1.msra.mxu0 0.0
    %1333 = vmatprep.subr.mxu0 0.0
    %1334 = vmatpush1.msra.mxu0 0.0
    %1335 = vmatprep.subr.mxu0 0.0
    %1336 = vmatpush1.msra.mxu0 0.0
    %1337 = vmatprep.subr.mxu0 0.0
    %1338 = vmatpush1.msra.mxu0 0.0
    %1339 = vmatprep.subr.mxu0 0.0
    %1340 = vmatpush1.msra.mxu0 0.0
    %1341 = vmatprep.subr.mxu0 0.0
    %1342 = vmatpush1.msra.mxu0 0.0
    %1343 = vmatprep.subr.mxu0 0.0
    %1344 = vmatpush1.msra.mxu0 0.0
    %1345 = vmatprep.subr.mxu0 0.0
    %1346 = vmatpush1.msra.mxu0 0.0
    %1347 = vmatprep.subr.mxu0 0.0
    %1348 = vmatpush1.msra.mxu0 0.0
    %1349 = vmatprep.subr.mxu0 0.0
    %1350 = vmatpush1.msra.mxu0 0.0
    %1351 = vmatprep.subr.mxu0 0.0
    %1352 = vmatpush1.msra.mxu0 0.0
    %1353 = vmatprep.subr.mxu0 0.0
    %1354 = vmatpush1.msra.mxu0 0.0
    %1355 = vmatprep.subr.mxu0 0.0
    %1356 = vmatpush1.msra.mxu0 0.0
    %1357 = vmatprep.subr.mxu0 0.0
    %1358 = vmatpush1.msra.mxu0 0.0
    %1359 = vmatprep.subr.mxu0 0.0
    %1360 = vmatpush1.msra.mxu0 0.0
    %1361 = vmatprep.subr.mxu0 0.0
    %1362 = vmatpush1.msra.mxu0 0.0
    %1363 = vmatprep.mubr.f32.mxu0 0.0
    %1364 = vmatmul.mubr.f32.gmra.mrb[0].mxu0 %v1276
    %v1365 = vpop.f32.mrb[0].mxu0
    %v1366 = vadd.f32 0.0, %v1365
    %v1367 = vpop.f32.mrb[0].mxu0
    %1368 = vmatprep.mubr.f32.mxu0 0.0
    %1369 = vmatmul.mubr.f32.gmra.mrb[0].mxu0 %v1279
    %v1370 = vpop.f32.mrb[0].mxu0
    %v1371 = vadd.f32 0.0, %v1370
    %v1372 = vpop.f32.mrb[0].mxu0
    %1373 = vmatprep.mubr.f32.mxu0 0.0
    %1374 = vmatmul.mubr.f32.gmra.mrb[0].mxu0 %v1282
    %v1375 = vpop.f32.mrb[0].mxu0
    %v1376 = vadd.f32 0.0, %v1375
    %v1377 = vpop.f32.mrb[0].mxu0
    %1378 = vmatprep.mubr.f32.mxu0 0.0
    %1379 = vmatmul.mubr.f32.gmra.mrb[0].mxu0 %v1285
    %v1380 = vpop.f32.mrb[0].mxu0
    %v1381 = vadd.f32 0.0, %v1380
    %v1382 = vpop.f32.mrb[0].mxu0
    %1383 = vmatprep.mubr.f32.mxu0 0.0
    %1384 = vmatmul.mubr.f32.gmra.mrb[0].mxu0 %v1288
    %v1385 = vpop.f32.mrb[0].mxu0
    %v1386 = vadd.f32 0.0, %v1385
    %v1387 = vpop.f32.mrb[0].mxu0
    %1388 = vmatprep.mubr.f32.mxu0 0.0
    %1389 = vmatmul.mubr.f32.gmra.mrb[0].mxu0 %v1291
    %v1390 = vpop.f32.mrb[0].mxu0
    %v1391 = vadd.f32 0.0, %v1390
    %v1392 = vpop.f32.mrb[0].mxu0
    %1393 = vmatprep.mubr.f32.mxu0 0.0
    %1394 = vmatmul.mubr.f32.gmra.mrb[0].mxu0 %v1294
    %v1395 = vpop.f32.mrb[0].mxu0
    %v1396 = vadd.f32 0.0, %v1395
    %v1397 = vpop.f32.mrb[0].mxu0
    %1398 = vmatprep.mubr.f32.mxu0 0.0
    %1399 = vmatmul.mubr.f32.gmra.mrb[0].mxu0 %v1297
    %v1400 = vpop.f32.mrb[0].mxu0
    %v1401 = vadd.f32 0.0, %v1400
    %v1402 = vpop.f32.mrb[0].mxu0
    %1403 = vdwg.mxu0
    %v1404 = vadd.f32 %v1234, %v1366
    %v1405 = vadd.f32 %v1235, %v1371
    %v1406 = vadd.f32 %v1236, %v1376
    %v1407 = vadd.f32 %v1237, %v1381
    %v1408 = vadd.f32 %v1238, %v1386
    %v1409 = vadd.f32 %v1239, %v1391
    %v1410 = vadd.f32 %v1240, %v1396
    %v1411 = vadd.f32 %v1241, %v1401
    %v1412 = vld [vmem:[%s5] sm:$0xff]
    %v1413 = vld [vmem:[%s5 + $0x8] sm:$0xff]
    %v1414 = vld [vmem:[%s5 + $0x10] sm:$0xff]
    %v1415 = vld [vmem:[%s5 + $0x18] sm:$0xff]
    %v1416 = vld [vmem:[%s5 + $0x20] sm:$0xff]
    %v1417 = vld [vmem:[%s5 + $0x28] sm:$0xff]
    %v1418 = vld [vmem:[%s5 + $0x30] sm:$0xff]
    %v1419 = vld [vmem:[%s5 + $0x38] sm:$0xff]
    %1421 = vset.pattern.permute.xlu0 0
    %1422 = vperm.xlu0 %1421, %v1412
    %v1423 = vpop.permute.xlu0 %1422
    %1426 = vset.pattern.permute.xlu0 0
    %1427 = vperm.xlu0 %1426, %v1413
    %v1428 = vpop.permute.xlu0 %1427
    %1431 = vset.pattern.permute.xlu0 0
    %1432 = vperm.xlu0 %1431, %v1414
    %v1433 = vpop.permute.xlu0 %1432
    %1436 = vset.pattern.permute.xlu0 0
    %1437 = vperm.xlu0 %1436, %v1415
    %v1438 = vpop.permute.xlu0 %1437
    %1441 = vset.pattern.permute.xlu0 0
    %1442 = vperm.xlu0 %1441, %v1416
    %v1443 = vpop.permute.xlu0 %1442
    %1446 = vset.pattern.permute.xlu0 0
    %1447 = vperm.xlu0 %1446, %v1417
    %v1448 = vpop.permute.xlu0 %1447
    %1451 = vset.pattern.permute.xlu0 0
    %1452 = vperm.xlu0 %1451, %v1418
    %v1453 = vpop.permute.xlu0 %1452
    %1456 = vset.pattern.permute.xlu0 0
    %1457 = vperm.xlu0 %1456, %v1419
    %v1458 = vpop.permute.xlu0 %1457
    %v1460 = vadd.f32 %v1404, %v1423
    %v1461 = vadd.f32 %v1405, %v1428
    %v1462 = vadd.f32 %v1406, %v1433
    %v1463 = vadd.f32 %v1407, %v1438
    %v1464 = vadd.f32 %v1408, %v1443
    %v1465 = vadd.f32 %v1409, %v1448
    %v1466 = vadd.f32 %v1410, %v1453
    %v1467 = vadd.f32 %v1411, %v1458
    %v1468 = vmul.f32 %v1460, 0.5
    %v1469 = vmul.f32 %v1461, 0.5
    %v1470 = vmul.f32 %v1462, 0.5
    %v1471 = vmul.f32 %v1463, 0.5
    %v1472 = vmul.f32 %v1464, 0.5
    %v1473 = vmul.f32 %v1465, 0.5
    %v1474 = vmul.f32 %v1466, 0.5
    %v1475 = vmul.f32 %v1467, 0.5
    %v1476 = vtanh.pop %v1468
    %v1477 = vtanh.pop %v1469
    %v1478 = vtanh.pop %v1470
    %v1479 = vtanh.pop %v1471
    %v1480 = vtanh.pop %v1472
    %v1481 = vtanh.pop %v1473
    %v1482 = vtanh.pop %v1474
    %v1483 = vtanh.pop %v1475
    %v1484 = vmul.f32 %v1476, 0.5
    %v1485 = vmul.f32 %v1477, 0.5
    %v1486 = vmul.f32 %v1478, 0.5
    %v1487 = vmul.f32 %v1479, 0.5
    %v1488 = vmul.f32 %v1480, 0.5
    %v1489 = vmul.f32 %v1481, 0.5
    %v1490 = vmul.f32 %v1482, 0.5
    %v1491 = vmul.f32 %v1483, 0.5
    %v1492 = vadd.f32 %v1484, 0.5
    %v1493 = vadd.f32 %v1485, 0.5
    %v1494 = vadd.f32 %v1486, 0.5
    %v1495 = vadd.f32 %v1487, 0.5
    %v1496 = vadd.f32 %v1488, 0.5
    %v1497 = vadd.f32 %v1489, 0.5
    %v1498 = vadd.f32 %v1490, 0.5
    %v1499 = vadd.f32 %v1491, 0.5
    %vm1500 = vcmask 293888
    %1501 = vst.msk [vmem:[#allocation3] sm:$0xff] %vm1500, %v1492
    %1502 = vst.msk [vmem:[#allocation3 + $0x8] sm:$0xff] %vm1500, %v1493
    %1503 = vst.msk [vmem:[#allocation3 + $0x10] sm:$0xff] %vm1500, %v1494
    %1504 = vst.msk [vmem:[#allocation3 + $0x18] sm:$0xff] %vm1500, %v1495
    %1505 = vst.msk [vmem:[#allocation3 + $0x20] sm:$0xff] %vm1500, %v1496
    %1506 = vst.msk [vmem:[#allocation3 + $0x28] sm:$0xff] %vm1500, %v1497
    %1507 = vst.msk [vmem:[#allocation3 + $0x30] sm:$0xff] %vm1500, %v1498
    %1508 = vst.msk [vmem:[#allocation3 + $0x38] sm:$0xff] %vm1500, %v1499
    %v1509 = vld [vmem:[#allocation3] sm:$0x1]
    %vm1510 = vcmask 122880
    %1511 = vst.msk [vmem:[#allocation4] sm:$0x1] %vm1510, %v1509
    %v1512 = vld [vmem:[#allocation3 + $0x1] sm:$0x1]
    %v1515 = vunpack.c.l.s4 1983009808
    %v1516 = vunpack.c.0.s8 %v1515
    %v1517 = vlaneseq
    %v1518 = vshrl.u32 %v1517, 7
    %v1519 = vsub.s32 %v1516, %v1518
    %v1520 = vrot.slane %v1512, %v1519
    %1521 = vrot.lane.b32.xlu0 %v1520, 16
    %v1522 = vpop.permute.xlu0 %1521
    %vm1524 = vcmask 254080
    %1525 = vst.msk [vmem:[#allocation4] sm:$0x1] %vm1524, %v1522
    %v1526 = vld [vmem:[#allocation3 + $0x2] sm:$0x1]
    %v1529 = vunpack.c.l.s4 1983009808
    %v1530 = vunpack.c.0.s8 %v1529
    %v1531 = vlaneseq
    %v1532 = vshrl.u32 %v1531, 7
    %v1533 = vsub.s32 %v1530, %v1532
    %v1534 = vrot.slane %v1526, %v1533
    %1535 = vrot.lane.b32.xlu0 %v1534, 32
    %v1536 = vpop.permute.xlu0 %1535
    %vm1538 = vcmask 385280
    %1539 = vst.msk [vmem:[#allocation4] sm:$0x1] %vm1538, %v1536
    %v1540 = vld [vmem:[#allocation3 + $0x3] sm:$0x1]
    %v1543 = vunpack.c.l.s4 1983009808
    %v1544 = vunpack.c.0.s8 %v1543
    %v1545 = vlaneseq
    %v1546 = vshrl.u32 %v1545, 7
    %v1547 = vsub.s32 %v1544, %v1546
    %v1548 = vrot.slane %v1540, %v1547
    %1549 = vrot.lane.b32.xlu0 %v1548, 48
    %v1550 = vpop.permute.xlu0 %1549
    %vm1552 = vcmask 516480
    %1553 = vst.msk [vmem:[#allocation4] sm:$0x1] %vm1552, %v1550
    %v1554 = vld [vmem:[#allocation3 + $0x4] sm:$0x1]
    %v1557 = vunpack.c.l.s4 1983009808
    %v1558 = vunpack.c.0.s8 %v1557
    %v1559 = vlaneseq
    %v1560 = vshrl.u32 %v1559, 7
    %v1561 = vsub.s32 %v1558, %v1560
    %v1562 = vrot.slane %v1554, %v1561
    %1563 = vrot.lane.b32.xlu0 %v1562, 64
    %v1564 = vpop.permute.xlu0 %1563
    %vm1566 = vcmask 647680
    %1567 = vst.msk [vmem:[#allocation4] sm:$0x1] %vm1566, %v1564
    %v1568 = vld [vmem:[#allocation3 + $0x5] sm:$0x1]
    %v1571 = vunpack.c.l.s4 1983009808
    %v1572 = vunpack.c.0.s8 %v1571
    %v1573 = vlaneseq
    %v1574 = vshrl.u32 %v1573, 7
    %v1575 = vsub.s32 %v1572, %v1574
    %v1576 = vrot.slane %v1568, %v1575
    %1577 = vrot.lane.b32.xlu0 %v1576, 80
    %v1578 = vpop.permute.xlu0 %1577
    %vm1580 = vcmask 778880
    %1581 = vst.msk [vmem:[#allocation4] sm:$0x1] %vm1580, %v1578
    %v1582 = vld [vmem:[#allocation3 + $0x6] sm:$0x1]
    %v1585 = vunpack.c.l.s4 1983009808
    %v1586 = vunpack.c.0.s8 %v1585
    %v1587 = vlaneseq
    %v1588 = vshrl.u32 %v1587, 7
    %v1589 = vsub.s32 %v1586, %v1588
    %v1590 = vrot.slane %v1582, %v1589
    %1591 = vrot.lane.b32.xlu0 %v1590, 96
    %v1592 = vpop.permute.xlu0 %1591
    %vm1594 = vcmask 910080
    %1595 = vst.msk [vmem:[#allocation4] sm:$0x1] %vm1594, %v1592
    %v1596 = vld [vmem:[#allocation3 + $0x7] sm:$0x1]
    %v1599 = vunpack.c.l.s4 1983009808
    %v1600 = vunpack.c.0.s8 %v1599
    %v1601 = vlaneseq
    %v1602 = vshrl.u32 %v1601, 7
    %v1603 = vsub.s32 %v1600, %v1602
    %v1604 = vrot.slane %v1596, %v1603
    %1605 = vrot.lane.b32.xlu0 %v1604, 112
    %v1606 = vpop.permute.xlu0 %1605
    %vm1608 = vcmask 1041280
    %1609 = vst.msk [vmem:[#allocation4] sm:$0x1] %vm1608, %v1606
    %v1610 = vld [vmem:[#allocation3 + $0x8] sm:$0x1]
    %1611 = vst.msk [vmem:[#allocation4 + $0x2] sm:$0x1] %vm1510, %v1610
    %v1612 = vld [vmem:[#allocation3 + $0x9] sm:$0x1]
    %v1615 = vunpack.c.l.s4 1983009808
    %v1616 = vunpack.c.0.s8 %v1615
    %v1617 = vlaneseq
    %v1618 = vshrl.u32 %v1617, 7
    %v1619 = vsub.s32 %v1616, %v1618
    %v1620 = vrot.slane %v1612, %v1619
    %1621 = vrot.lane.b32.xlu0 %v1620, 16
    %v1622 = vpop.permute.xlu0 %1621
    %1624 = vst.msk [vmem:[#allocation4 + $0x2] sm:$0x1] %vm1524, %v1622
    %v1625 = vld [vmem:[#allocation3 + $0xa] sm:$0x1]
    %v1628 = vunpack.c.l.s4 1983009808
    %v1629 = vunpack.c.0.s8 %v1628
    %v1630 = vlaneseq
    %v1631 = vshrl.u32 %v1630, 7
    %v1632 = vsub.s32 %v1629, %v1631
    %v1633 = vrot.slane %v1625, %v1632
    %1634 = vrot.lane.b32.xlu0 %v1633, 32
    %v1635 = vpop.permute.xlu0 %1634
    %1637 = vst.msk [vmem:[#allocation4 + $0x2] sm:$0x1] %vm1538, %v1635
    %v1638 = vld [vmem:[#allocation3 + $0xb] sm:$0x1]
    %v1641 = vunpack.c.l.s4 1983009808
    %v1642 = vunpack.c.0.s8 %v1641
    %v1643 = vlaneseq
    %v1644 = vshrl.u32 %v1643, 7
    %v1645 = vsub.s32 %v1642, %v1644
    %v1646 = vrot.slane %v1638, %v1645
    %1647 = vrot.lane.b32.xlu0 %v1646, 48
    %v1648 = vpop.permute.xlu0 %1647
    %1650 = vst.msk [vmem:[#allocation4 + $0x2] sm:$0x1] %vm1552, %v1648
    %v1651 = vld [vmem:[#allocation3 + $0xc] sm:$0x1]
    %v1654 = vunpack.c.l.s4 1983009808
    %v1655 = vunpack.c.0.s8 %v1654
    %v1656 = vlaneseq
    %v1657 = vshrl.u32 %v1656, 7
    %v1658 = vsub.s32 %v1655, %v1657
    %v1659 = vrot.slane %v1651, %v1658
    %1660 = vrot.lane.b32.xlu0 %v1659, 64
    %v1661 = vpop.permute.xlu0 %1660
    %1663 = vst.msk [vmem:[#allocation4 + $0x2] sm:$0x1] %vm1566, %v1661
    %v1664 = vld [vmem:[#allocation3 + $0xd] sm:$0x1]
    %v1667 = vunpack.c.l.s4 1983009808
    %v1668 = vunpack.c.0.s8 %v1667
    %v1669 = vlaneseq
    %v1670 = vshrl.u32 %v1669, 7
    %v1671 = vsub.s32 %v1668, %v1670
    %v1672 = vrot.slane %v1664, %v1671
    %1673 = vrot.lane.b32.xlu0 %v1672, 80
    %v1674 = vpop.permute.xlu0 %1673
    %1676 = vst.msk [vmem:[#allocation4 + $0x2] sm:$0x1] %vm1580, %v1674
    %v1677 = vld [vmem:[#allocation3 + $0xe] sm:$0x1]
    %v1680 = vunpack.c.l.s4 1983009808
    %v1681 = vunpack.c.0.s8 %v1680
    %v1682 = vlaneseq
    %v1683 = vshrl.u32 %v1682, 7
    %v1684 = vsub.s32 %v1681, %v1683
    %v1685 = vrot.slane %v1677, %v1684
    %1686 = vrot.lane.b32.xlu0 %v1685, 96
    %v1687 = vpop.permute.xlu0 %1686
    %1689 = vst.msk [vmem:[#allocation4 + $0x2] sm:$0x1] %vm1594, %v1687
    %v1690 = vld [vmem:[#allocation3 + $0xf] sm:$0x1]
    %v1693 = vunpack.c.l.s4 1983009808
    %v1694 = vunpack.c.0.s8 %v1693
    %v1695 = vlaneseq
    %v1696 = vshrl.u32 %v1695, 7
    %v1697 = vsub.s32 %v1694, %v1696
    %v1698 = vrot.slane %v1690, %v1697
    %1699 = vrot.lane.b32.xlu0 %v1698, 112
    %v1700 = vpop.permute.xlu0 %1699
    %1702 = vst.msk [vmem:[#allocation4 + $0x2] sm:$0x1] %vm1608, %v1700
    %v1703 = vld [vmem:[#allocation3 + $0x10] sm:$0x1]
    %1704 = vst.msk [vmem:[#allocation4 + $0x4] sm:$0x1] %vm1510, %v1703
    %v1705 = vld [vmem:[#allocation3 + $0x11] sm:$0x1]
    %v1708 = vunpack.c.l.s4 1983009808
    %v1709 = vunpack.c.0.s8 %v1708
    %v1710 = vlaneseq
    %v1711 = vshrl.u32 %v1710, 7
    %v1712 = vsub.s32 %v1709, %v1711
    %v1713 = vrot.slane %v1705, %v1712
    %1714 = vrot.lane.b32.xlu0 %v1713, 16
    %v1715 = vpop.permute.xlu0 %1714
    %1717 = vst.msk [vmem:[#allocation4 + $0x4] sm:$0x1] %vm1524, %v1715
    %v1718 = vld [vmem:[#allocation3 + $0x12] sm:$0x1]
    %v1721 = vunpack.c.l.s4 1983009808
    %v1722 = vunpack.c.0.s8 %v1721
    %v1723 = vlaneseq
    %v1724 = vshrl.u32 %v1723, 7
    %v1725 = vsub.s32 %v1722, %v1724
    %v1726 = vrot.slane %v1718, %v1725
    %1727 = vrot.lane.b32.xlu0 %v1726, 32
    %v1728 = vpop.permute.xlu0 %1727
    %1730 = vst.msk [vmem:[#allocation4 + $0x4] sm:$0x1] %vm1538, %v1728
    %v1731 = vld [vmem:[#allocation3 + $0x13] sm:$0x1]
    %v1734 = vunpack.c.l.s4 1983009808
    %v1735 = vunpack.c.0.s8 %v1734
    %v1736 = vlaneseq
    %v1737 = vshrl.u32 %v1736, 7
    %v1738 = vsub.s32 %v1735, %v1737
    %v1739 = vrot.slane %v1731, %v1738
    %1740 = vrot.lane.b32.xlu0 %v1739, 48
    %v1741 = vpop.permute.xlu0 %1740
    %1743 = vst.msk [vmem:[#allocation4 + $0x4] sm:$0x1] %vm1552, %v1741
    %v1744 = vld [vmem:[#allocation3 + $0x14] sm:$0x1]
    %v1747 = vunpack.c.l.s4 1983009808
    %v1748 = vunpack.c.0.s8 %v1747
    %v1749 = vlaneseq
    %v1750 = vshrl.u32 %v1749, 7
    %v1751 = vsub.s32 %v1748, %v1750
    %v1752 = vrot.slane %v1744, %v1751
    %1753 = vrot.lane.b32.xlu0 %v1752, 64
    %v1754 = vpop.permute.xlu0 %1753
    %1756 = vst.msk [vmem:[#allocation4 + $0x4] sm:$0x1] %vm1566, %v1754
    %v1757 = vld [vmem:[#allocation3 + $0x15] sm:$0x1]
    %v1760 = vunpack.c.l.s4 1983009808
    %v1761 = vunpack.c.0.s8 %v1760
    %v1762 = vlaneseq
    %v1763 = vshrl.u32 %v1762, 7
    %v1764 = vsub.s32 %v1761, %v1763
    %v1765 = vrot.slane %v1757, %v1764
    %1766 = vrot.lane.b32.xlu0 %v1765, 80
    %v1767 = vpop.permute.xlu0 %1766
    %1769 = vst.msk [vmem:[#allocation4 + $0x4] sm:$0x1] %vm1580, %v1767
    %v1770 = vld [vmem:[#allocation3 + $0x16] sm:$0x1]
    %v1773 = vunpack.c.l.s4 1983009808
    %v1774 = vunpack.c.0.s8 %v1773
    %v1775 = vlaneseq
    %v1776 = vshrl.u32 %v1775, 7
    %v1777 = vsub.s32 %v1774, %v1776
    %v1778 = vrot.slane %v1770, %v1777
    %1779 = vrot.lane.b32.xlu0 %v1778, 96
    %v1780 = vpop.permute.xlu0 %1779
    %1782 = vst.msk [vmem:[#allocation4 + $0x4] sm:$0x1] %vm1594, %v1780
    %v1783 = vld [vmem:[#allocation3 + $0x17] sm:$0x1]
    %v1786 = vunpack.c.l.s4 1983009808
    %v1787 = vunpack.c.0.s8 %v1786
    %v1788 = vlaneseq
    %v1789 = vshrl.u32 %v1788, 7
    %v1790 = vsub.s32 %v1787, %v1789
    %v1791 = vrot.slane %v1783, %v1790
    %1792 = vrot.lane.b32.xlu0 %v1791, 112
    %v1793 = vpop.permute.xlu0 %1792
    %1795 = vst.msk [vmem:[#allocation4 + $0x4] sm:$0x1] %vm1608, %v1793
    %v1796 = vld [vmem:[#allocation3 + $0x18] sm:$0x1]
    %1797 = vst.msk [vmem:[#allocation4 + $0x6] sm:$0x1] %vm1510, %v1796
    %v1798 = vld [vmem:[#allocation3 + $0x19] sm:$0x1]
    %v1801 = vunpack.c.l.s4 1983009808
    %v1802 = vunpack.c.0.s8 %v1801
    %v1803 = vlaneseq
    %v1804 = vshrl.u32 %v1803, 7
    %v1805 = vsub.s32 %v1802, %v1804
    %v1806 = vrot.slane %v1798, %v1805
    %1807 = vrot.lane.b32.xlu0 %v1806, 16
    %v1808 = vpop.permute.xlu0 %1807
    %1810 = vst.msk [vmem:[#allocation4 + $0x6] sm:$0x1] %vm1524, %v1808
    %v1811 = vld [vmem:[#allocation3 + $0x1a] sm:$0x1]
    %v1814 = vunpack.c.l.s4 1983009808
    %v1815 = vunpack.c.0.s8 %v1814
    %v1816 = vlaneseq
    %v1817 = vshrl.u32 %v1816, 7
    %v1818 = vsub.s32 %v1815, %v1817
    %v1819 = vrot.slane %v1811, %v1818
    %1820 = vrot.lane.b32.xlu0 %v1819, 32
    %v1821 = vpop.permute.xlu0 %1820
    %1823 = vst.msk [vmem:[#allocation4 + $0x6] sm:$0x1] %vm1538, %v1821
    %v1824 = vld [vmem:[#allocation3 + $0x1b] sm:$0x1]
    %v1827 = vunpack.c.l.s4 1983009808
    %v1828 = vunpack.c.0.s8 %v1827
    %v1829 = vlaneseq
    %v1830 = vshrl.u32 %v1829, 7
    %v1831 = vsub.s32 %v1828, %v1830
    %v1832 = vrot.slane %v1824, %v1831
    %1833 = vrot.lane.b32.xlu0 %v1832, 48
    %v1834 = vpop.permute.xlu0 %1833
    %1836 = vst.msk [vmem:[#allocation4 + $0x6] sm:$0x1] %vm1552, %v1834
    %v1837 = vld [vmem:[#allocation3 + $0x1c] sm:$0x1]
    %v1840 = vunpack.c.l.s4 1983009808
    %v1841 = vunpack.c.0.s8 %v1840
    %v1842 = vlaneseq
    %v1843 = vshrl.u32 %v1842, 7
    %v1844 = vsub.s32 %v1841, %v1843
    %v1845 = vrot.slane %v1837, %v1844
    %1846 = vrot.lane.b32.xlu0 %v1845, 64
    %v1847 = vpop.permute.xlu0 %1846
    %1849 = vst.msk [vmem:[#allocation4 + $0x6] sm:$0x1] %vm1566, %v1847
    %v1850 = vld [vmem:[#allocation3 + $0x1d] sm:$0x1]
    %v1853 = vunpack.c.l.s4 1983009808
    %v1854 = vunpack.c.0.s8 %v1853
    %v1855 = vlaneseq
    %v1856 = vshrl.u32 %v1855, 7
    %v1857 = vsub.s32 %v1854, %v1856
    %v1858 = vrot.slane %v1850, %v1857
    %1859 = vrot.lane.b32.xlu0 %v1858, 80
    %v1860 = vpop.permute.xlu0 %1859
    %1862 = vst.msk [vmem:[#allocation4 + $0x6] sm:$0x1] %vm1580, %v1860
    %v1863 = vld [vmem:[#allocation3 + $0x1e] sm:$0x1]
    %v1866 = vunpack.c.l.s4 1983009808
    %v1867 = vunpack.c.0.s8 %v1866
    %v1868 = vlaneseq
    %v1869 = vshrl.u32 %v1868, 7
    %v1870 = vsub.s32 %v1867, %v1869
    %v1871 = vrot.slane %v1863, %v1870
    %1872 = vrot.lane.b32.xlu0 %v1871, 96
    %v1873 = vpop.permute.xlu0 %1872
    %1875 = vst.msk [vmem:[#allocation4 + $0x6] sm:$0x1] %vm1594, %v1873
    %v1876 = vld [vmem:[#allocation3 + $0x1f] sm:$0x1]
    %v1879 = vunpack.c.l.s4 1983009808
    %v1880 = vunpack.c.0.s8 %v1879
    %v1881 = vlaneseq
    %v1882 = vshrl.u32 %v1881, 7
    %v1883 = vsub.s32 %v1880, %v1882
    %v1884 = vrot.slane %v1876, %v1883
    %1885 = vrot.lane.b32.xlu0 %v1884, 112
    %v1886 = vpop.permute.xlu0 %1885
    %1888 = vst.msk [vmem:[#allocation4 + $0x6] sm:$0x1] %vm1608, %v1886
    %v1889 = vld [vmem:[#allocation3 + $0x20] sm:$0x1]
    %1890 = vst.msk [vmem:[#allocation4 + $0x8] sm:$0x1] %vm1510, %v1889
    %v1891 = vld [vmem:[#allocation3 + $0x21] sm:$0x1]
    %v1894 = vunpack.c.l.s4 1983009808
    %v1895 = vunpack.c.0.s8 %v1894
    %v1896 = vlaneseq
    %v1897 = vshrl.u32 %v1896, 7
    %v1898 = vsub.s32 %v1895, %v1897
    %v1899 = vrot.slane %v1891, %v1898
    %1900 = vrot.lane.b32.xlu0 %v1899, 16
    %v1901 = vpop.permute.xlu0 %1900
    %1903 = vst.msk [vmem:[#allocation4 + $0x8] sm:$0x1] %vm1524, %v1901
    %v1904 = vld [vmem:[#allocation3 + $0x22] sm:$0x1]
    %v1907 = vunpack.c.l.s4 1983009808
    %v1908 = vunpack.c.0.s8 %v1907
    %v1909 = vlaneseq
    %v1910 = vshrl.u32 %v1909, 7
    %v1911 = vsub.s32 %v1908, %v1910
    %v1912 = vrot.slane %v1904, %v1911
    %1913 = vrot.lane.b32.xlu0 %v1912, 32
    %v1914 = vpop.permute.xlu0 %1913
    %1916 = vst.msk [vmem:[#allocation4 + $0x8] sm:$0x1] %vm1538, %v1914
    %v1917 = vld [vmem:[#allocation3 + $0x23] sm:$0x1]
    %v1920 = vunpack.c.l.s4 1983009808
    %v1921 = vunpack.c.0.s8 %v1920
    %v1922 = vlaneseq
    %v1923 = vshrl.u32 %v1922, 7
    %v1924 = vsub.s32 %v1921, %v1923
    %v1925 = vrot.slane %v1917, %v1924
    %1926 = vrot.lane.b32.xlu0 %v1925, 48
    %v1927 = vpop.permute.xlu0 %1926
    %1929 = vst.msk [vmem:[#allocation4 + $0x8] sm:$0x1] %vm1552, %v1927
    %v1930 = vld [vmem:[#allocation3 + $0x24] sm:$0x1]
    %v1933 = vunpack.c.l.s4 1983009808
    %v1934 = vunpack.c.0.s8 %v1933
    %v1935 = vlaneseq
    %v1936 = vshrl.u32 %v1935, 7
    %v1937 = vsub.s32 %v1934, %v1936
    %v1938 = vrot.slane %v1930, %v1937
    %1939 = vrot.lane.b32.xlu0 %v1938, 64
    %v1940 = vpop.permute.xlu0 %1939
    %1942 = vst.msk [vmem:[#allocation4 + $0x8] sm:$0x1] %vm1566, %v1940
    %v1943 = vld [vmem:[#allocation3 + $0x25] sm:$0x1]
    %v1946 = vunpack.c.l.s4 1983009808
    %v1947 = vunpack.c.0.s8 %v1946
    %v1948 = vlaneseq
    %v1949 = vshrl.u32 %v1948, 7
    %v1950 = vsub.s32 %v1947, %v1949
    %v1951 = vrot.slane %v1943, %v1950
    %1952 = vrot.lane.b32.xlu0 %v1951, 80
    %v1953 = vpop.permute.xlu0 %1952
    %1955 = vst.msk [vmem:[#allocation4 + $0x8] sm:$0x1] %vm1580, %v1953
    %v1956 = vld [vmem:[#allocation3 + $0x26] sm:$0x1]
    %v1959 = vunpack.c.l.s4 1983009808
    %v1960 = vunpack.c.0.s8 %v1959
    %v1961 = vlaneseq
    %v1962 = vshrl.u32 %v1961, 7
    %v1963 = vsub.s32 %v1960, %v1962
    %v1964 = vrot.slane %v1956, %v1963
    %1965 = vrot.lane.b32.xlu0 %v1964, 96
    %v1966 = vpop.permute.xlu0 %1965
    %1968 = vst.msk [vmem:[#allocation4 + $0x8] sm:$0x1] %vm1594, %v1966
    %v1969 = vld [vmem:[#allocation3 + $0x27] sm:$0x1]
    %v1972 = vunpack.c.l.s4 1983009808
    %v1973 = vunpack.c.0.s8 %v1972
    %v1974 = vlaneseq
    %v1975 = vshrl.u32 %v1974, 7
    %v1976 = vsub.s32 %v1973, %v1975
    %v1977 = vrot.slane %v1969, %v1976
    %1978 = vrot.lane.b32.xlu0 %v1977, 112
    %v1979 = vpop.permute.xlu0 %1978
    %1981 = vst.msk [vmem:[#allocation4 + $0x8] sm:$0x1] %vm1608, %v1979
    %v1982 = vld [vmem:[#allocation3 + $0x28] sm:$0x1]
    %1983 = vst.msk [vmem:[#allocation4 + $0xa] sm:$0x1] %vm1510, %v1982
    %v1984 = vld [vmem:[#allocation3 + $0x29] sm:$0x1]
    %v1987 = vunpack.c.l.s4 1983009808
    %v1988 = vunpack.c.0.s8 %v1987
    %v1989 = vlaneseq
    %v1990 = vshrl.u32 %v1989, 7
    %v1991 = vsub.s32 %v1988, %v1990
    %v1992 = vrot.slane %v1984, %v1991
    %1993 = vrot.lane.b32.xlu0 %v1992, 16
    %v1994 = vpop.permute.xlu0 %1993
    %1996 = vst.msk [vmem:[#allocation4 + $0xa] sm:$0x1] %vm1524, %v1994
    %v1997 = vld [vmem:[#allocation3 + $0x2a] sm:$0x1]
    %v2000 = vunpack.c.l.s4 1983009808
    %v2001 = vunpack.c.0.s8 %v2000
    %v2002 = vlaneseq
    %v2003 = vshrl.u32 %v2002, 7
    %v2004 = vsub.s32 %v2001, %v2003
    %v2005 = vrot.slane %v1997, %v2004
    %2006 = vrot.lane.b32.xlu0 %v2005, 32
    %v2007 = vpop.permute.xlu0 %2006
    %2009 = vst.msk [vmem:[#allocation4 + $0xa] sm:$0x1] %vm1538, %v2007
    %v2010 = vld [vmem:[#allocation3 + $0x2b] sm:$0x1]
    %v2013 = vunpack.c.l.s4 1983009808
    %v2014 = vunpack.c.0.s8 %v2013
    %v2015 = vlaneseq
    %v2016 = vshrl.u32 %v2015, 7
    %v2017 = vsub.s32 %v2014, %v2016
    %v2018 = vrot.slane %v2010, %v2017
    %2019 = vrot.lane.b32.xlu0 %v2018, 48
    %v2020 = vpop.permute.xlu0 %2019
    %2022 = vst.msk [vmem:[#allocation4 + $0xa] sm:$0x1] %vm1552, %v2020
    %v2023 = vld [vmem:[#allocation3 + $0x2c] sm:$0x1]
    %v2026 = vunpack.c.l.s4 1983009808
    %v2027 = vunpack.c.0.s8 %v2026
    %v2028 = vlaneseq
    %v2029 = vshrl.u32 %v2028, 7
    %v2030 = vsub.s32 %v2027, %v2029
    %v2031 = vrot.slane %v2023, %v2030
    %2032 = vrot.lane.b32.xlu0 %v2031, 64
    %v2033 = vpop.permute.xlu0 %2032
    %2035 = vst.msk [vmem:[#allocation4 + $0xa] sm:$0x1] %vm1566, %v2033
    %v2036 = vld [vmem:[#allocation3 + $0x2d] sm:$0x1]
    %v2039 = vunpack.c.l.s4 1983009808
    %v2040 = vunpack.c.0.s8 %v2039
    %v2041 = vlaneseq
    %v2042 = vshrl.u32 %v2041, 7
    %v2043 = vsub.s32 %v2040, %v2042
    %v2044 = vrot.slane %v2036, %v2043
    %2045 = vrot.lane.b32.xlu0 %v2044, 80
    %v2046 = vpop.permute.xlu0 %2045
    %2048 = vst.msk [vmem:[#allocation4 + $0xa] sm:$0x1] %vm1580, %v2046
    %v2049 = vld [vmem:[#allocation3 + $0x2e] sm:$0x1]
    %v2052 = vunpack.c.l.s4 1983009808
    %v2053 = vunpack.c.0.s8 %v2052
    %v2054 = vlaneseq
    %v2055 = vshrl.u32 %v2054, 7
    %v2056 = vsub.s32 %v2053, %v2055
    %v2057 = vrot.slane %v2049, %v2056
    %2058 = vrot.lane.b32.xlu0 %v2057, 96
    %v2059 = vpop.permute.xlu0 %2058
    %2061 = vst.msk [vmem:[#allocation4 + $0xa] sm:$0x1] %vm1594, %v2059
    %v2062 = vld [vmem:[#allocation3 + $0x2f] sm:$0x1]
    %v2065 = vunpack.c.l.s4 1983009808
    %v2066 = vunpack.c.0.s8 %v2065
    %v2067 = vlaneseq
    %v2068 = vshrl.u32 %v2067, 7
    %v2069 = vsub.s32 %v2066, %v2068
    %v2070 = vrot.slane %v2062, %v2069
    %2071 = vrot.lane.b32.xlu0 %v2070, 112
    %v2072 = vpop.permute.xlu0 %2071
    %2074 = vst.msk [vmem:[#allocation4 + $0xa] sm:$0x1] %vm1608, %v2072
    %v2075 = vld [vmem:[#allocation3 + $0x30] sm:$0x1]
    %2076 = vst.msk [vmem:[#allocation4 + $0xc] sm:$0x1] %vm1510, %v2075
    %v2077 = vld [vmem:[#allocation3 + $0x31] sm:$0x1]
    %v2080 = vunpack.c.l.s4 1983009808
    %v2081 = vunpack.c.0.s8 %v2080
    %v2082 = vlaneseq
    %v2083 = vshrl.u32 %v2082, 7
    %v2084 = vsub.s32 %v2081, %v2083
    %v2085 = vrot.slane %v2077, %v2084
    %2086 = vrot.lane.b32.xlu0 %v2085, 16
    %v2087 = vpop.permute.xlu0 %2086
    %2089 = vst.msk [vmem:[#allocation4 + $0xc] sm:$0x1] %vm1524, %v2087
    %v2090 = vld [vmem:[#allocation3 + $0x32] sm:$0x1]
    %v2093 = vunpack.c.l.s4 1983009808
    %v2094 = vunpack.c.0.s8 %v2093
    %v2095 = vlaneseq
    %v2096 = vshrl.u32 %v2095, 7
    %v2097 = vsub.s32 %v2094, %v2096
    %v2098 = vrot.slane %v2090, %v2097
    %2099 = vrot.lane.b32.xlu0 %v2098, 32
    %v2100 = vpop.permute.xlu0 %2099
    %2102 = vst.msk [vmem:[#allocation4 + $0xc] sm:$0x1] %vm1538, %v2100
    %v2103 = vld [vmem:[#allocation3 + $0x33] sm:$0x1]
    %v2106 = vunpack.c.l.s4 1983009808
    %v2107 = vunpack.c.0.s8 %v2106
    %v2108 = vlaneseq
    %v2109 = vshrl.u32 %v2108, 7
    %v2110 = vsub.s32 %v2107, %v2109
    %v2111 = vrot.slane %v2103, %v2110
    %2112 = vrot.lane.b32.xlu0 %v2111, 48
    %v2113 = vpop.permute.xlu0 %2112
    %2115 = vst.msk [vmem:[#allocation4 + $0xc] sm:$0x1] %vm1552, %v2113
    %v2116 = vld [vmem:[#allocation3 + $0x34] sm:$0x1]
    %v2119 = vunpack.c.l.s4 1983009808
    %v2120 = vunpack.c.0.s8 %v2119
    %v2121 = vlaneseq
    %v2122 = vshrl.u32 %v2121, 7
    %v2123 = vsub.s32 %v2120, %v2122
    %v2124 = vrot.slane %v2116, %v2123
    %2125 = vrot.lane.b32.xlu0 %v2124, 64
    %v2126 = vpop.permute.xlu0 %2125
    %2128 = vst.msk [vmem:[#allocation4 + $0xc] sm:$0x1] %vm1566, %v2126
    %v2129 = vld [vmem:[#allocation3 + $0x35] sm:$0x1]
    %v2132 = vunpack.c.l.s4 1983009808
    %v2133 = vunpack.c.0.s8 %v2132
    %v2134 = vlaneseq
    %v2135 = vshrl.u32 %v2134, 7
    %v2136 = vsub.s32 %v2133, %v2135
    %v2137 = vrot.slane %v2129, %v2136
    %2138 = vrot.lane.b32.xlu0 %v2137, 80
    %v2139 = vpop.permute.xlu0 %2138
    %2141 = vst.msk [vmem:[#allocation4 + $0xc] sm:$0x1] %vm1580, %v2139
    %v2142 = vld [vmem:[#allocation3 + $0x36] sm:$0x1]
    %v2145 = vunpack.c.l.s4 1983009808
    %v2146 = vunpack.c.0.s8 %v2145
    %v2147 = vlaneseq
    %v2148 = vshrl.u32 %v2147, 7
    %v2149 = vsub.s32 %v2146, %v2148
    %v2150 = vrot.slane %v2142, %v2149
    %2151 = vrot.lane.b32.xlu0 %v2150, 96
    %v2152 = vpop.permute.xlu0 %2151
    %2154 = vst.msk [vmem:[#allocation4 + $0xc] sm:$0x1] %vm1594, %v2152
    %v2155 = vld [vmem:[#allocation3 + $0x37] sm:$0x1]
    %v2158 = vunpack.c.l.s4 1983009808
    %v2159 = vunpack.c.0.s8 %v2158
    %v2160 = vlaneseq
    %v2161 = vshrl.u32 %v2160, 7
    %v2162 = vsub.s32 %v2159, %v2161
    %v2163 = vrot.slane %v2155, %v2162
    %2164 = vrot.lane.b32.xlu0 %v2163, 112
    %v2165 = vpop.permute.xlu0 %2164
    %2167 = vst.msk [vmem:[#allocation4 + $0xc] sm:$0x1] %vm1608, %v2165
    %v2168 = vld [vmem:[#allocation3 + $0x38] sm:$0x1]
    %2169 = vst.msk [vmem:[#allocation4 + $0xe] sm:$0x1] %vm1510, %v2168
    %v2170 = vld [vmem:[#allocation3 + $0x39] sm:$0x1]
    %v2173 = vunpack.c.l.s4 1983009808
    %v2174 = vunpack.c.0.s8 %v2173
    %v2175 = vlaneseq
    %v2176 = vshrl.u32 %v2175, 7
    %v2177 = vsub.s32 %v2174, %v2176
    %v2178 = vrot.slane %v2170, %v2177
    %2179 = vrot.lane.b32.xlu0 %v2178, 16
    %v2180 = vpop.permute.xlu0 %2179
    %2182 = vst.msk [vmem:[#allocation4 + $0xe] sm:$0x1] %vm1524, %v2180
    %v2183 = vld [vmem:[#allocation3 + $0x3a] sm:$0x1]
    %v2186 = vunpack.c.l.s4 1983009808
    %v2187 = vunpack.c.0.s8 %v2186
    %v2188 = vlaneseq
    %v2189 = vshrl.u32 %v2188, 7
    %v2190 = vsub.s32 %v2187, %v2189
    %v2191 = vrot.slane %v2183, %v2190
    %2192 = vrot.lane.b32.xlu0 %v2191, 32
    %v2193 = vpop.permute.xlu0 %2192
    %2195 = vst.msk [vmem:[#allocation4 + $0xe] sm:$0x1] %vm1538, %v2193
    %v2196 = vld [vmem:[#allocation3 + $0x3b] sm:$0x1]
    %v2199 = vunpack.c.l.s4 1983009808
    %v2200 = vunpack.c.0.s8 %v2199
    %v2201 = vlaneseq
    %v2202 = vshrl.u32 %v2201, 7
    %v2203 = vsub.s32 %v2200, %v2202
    %v2204 = vrot.slane %v2196, %v2203
    %2205 = vrot.lane.b32.xlu0 %v2204, 48
    %v2206 = vpop.permute.xlu0 %2205
    %2208 = vst.msk [vmem:[#allocation4 + $0xe] sm:$0x1] %vm1552, %v2206
    %v2209 = vld [vmem:[#allocation3 + $0x3c] sm:$0x1]
    %v2212 = vunpack.c.l.s4 1983009808
    %v2213 = vunpack.c.0.s8 %v2212
    %v2214 = vlaneseq
    %v2215 = vshrl.u32 %v2214, 7
    %v2216 = vsub.s32 %v2213, %v2215
    %v2217 = vrot.slane %v2209, %v2216
    %2218 = vrot.lane.b32.xlu0 %v2217, 64
    %v2219 = vpop.permute.xlu0 %2218
    %2221 = vst.msk [vmem:[#allocation4 + $0xe] sm:$0x1] %vm1566, %v2219
    %v2222 = vld [vmem:[#allocation3 + $0x3d] sm:$0x1]
    %v2225 = vunpack.c.l.s4 1983009808
    %v2226 = vunpack.c.0.s8 %v2225
    %v2227 = vlaneseq
    %v2228 = vshrl.u32 %v2227, 7
    %v2229 = vsub.s32 %v2226, %v2228
    %v2230 = vrot.slane %v2222, %v2229
    %2231 = vrot.lane.b32.xlu0 %v2230, 80
    %v2232 = vpop.permute.xlu0 %2231
    %2234 = vst.msk [vmem:[#allocation4 + $0xe] sm:$0x1] %vm1580, %v2232
    %v2235 = vld [vmem:[#allocation3 + $0x3e] sm:$0x1]
    %v2238 = vunpack.c.l.s4 1983009808
    %v2239 = vunpack.c.0.s8 %v2238
    %v2240 = vlaneseq
    %v2241 = vshrl.u32 %v2240, 7
    %v2242 = vsub.s32 %v2239, %v2241
    %v2243 = vrot.slane %v2235, %v2242
    %2244 = vrot.lane.b32.xlu0 %v2243, 96
    %v2245 = vpop.permute.xlu0 %2244
    %2247 = vst.msk [vmem:[#allocation4 + $0xe] sm:$0x1] %vm1594, %v2245
    %v2248 = vld [vmem:[#allocation3 + $0x3f] sm:$0x1]
    %v2251 = vunpack.c.l.s4 1983009808
    %v2252 = vunpack.c.0.s8 %v2251
    %v2253 = vlaneseq
    %v2254 = vshrl.u32 %v2253, 7
    %v2255 = vsub.s32 %v2252, %v2254
    %v2256 = vrot.slane %v2248, %v2255
    %2257 = vrot.lane.b32.xlu0 %v2256, 112
    %v2258 = vpop.permute.xlu0 %2257
    %2260 = vst.msk [vmem:[#allocation4 + $0xe] sm:$0x1] %vm1608, %v2258
    %v2261 = vld [vmem:[#allocation3] sm:$0x1]
    %v2264 = vunpack.c.l.s4 1983009808
    %v2265 = vunpack.c.0.s8 %v2264
    %v2266 = vlaneseq
    %v2267 = vshrl.u32 %v2266, 7
    %v2268 = vsub.s32 %v2265, %v2267
    %v2269 = vrot.slane %v2261, %v2268
    %2270 = vrot.lane.b32.xlu0 %v2269, 108
    %v2271 = vpop.permute.xlu0 %2270
    %2273 = vst.msk [vmem:[#allocation4 + $0x1] sm:$0x1] %vm1510, %v2271
    %v2274 = vld [vmem:[#allocation3 + $0x1] sm:$0x1]
    %v2277 = vunpack.c.l.s4 1983009808
    %v2278 = vunpack.c.0.s8 %v2277
    %v2279 = vlaneseq
    %v2280 = vshrl.u32 %v2279, 7
    %v2281 = vsub.s32 %v2278, %v2280
    %v2282 = vrot.slane %v2274, %v2281
    %2283 = vrot.lane.b32.xlu0 %v2282, 124
    %v2284 = vpop.permute.xlu0 %2283
    %2286 = vst.msk [vmem:[#allocation4 + $0x1] sm:$0x1] %vm1524, %v2284
    %v2287 = vld [vmem:[#allocation3 + $0x2] sm:$0x1]
    %v2290 = vunpack.c.l.s4 1983009808
    %v2291 = vunpack.c.0.s8 %v2290
    %v2292 = vlaneseq
    %v2293 = vshrl.u32 %v2292, 7
    %v2294 = vsub.s32 %v2291, %v2293
    %v2295 = vrot.slane %v2287, %v2294
    %2296 = vrot.lane.b32.xlu0 %v2295, 12
    %v2297 = vpop.permute.xlu0 %2296
    %2299 = vst.msk [vmem:[#allocation4 + $0x1] sm:$0x1] %vm1538, %v2297
    %v2300 = vld [vmem:[#allocation3 + $0x3] sm:$0x1]
    %v2303 = vunpack.c.l.s4 1983009808
    %v2304 = vunpack.c.0.s8 %v2303
    %v2305 = vlaneseq
    %v2306 = vshrl.u32 %v2305, 7
    %v2307 = vsub.s32 %v2304, %v2306
    %v2308 = vrot.slane %v2300, %v2307
    %2309 = vrot.lane.b32.xlu0 %v2308, 28
    %v2310 = vpop.permute.xlu0 %2309
    %2312 = vst.msk [vmem:[#allocation4 + $0x1] sm:$0x1] %vm1552, %v2310
    %v2313 = vld [vmem:[#allocation3 + $0x4] sm:$0x1]
    %v2316 = vunpack.c.l.s4 1983009808
    %v2317 = vunpack.c.0.s8 %v2316
    %v2318 = vlaneseq
    %v2319 = vshrl.u32 %v2318, 7
    %v2320 = vsub.s32 %v2317, %v2319
    %v2321 = vrot.slane %v2313, %v2320
    %2322 = vrot.lane.b32.xlu0 %v2321, 44
    %v2323 = vpop.permute.xlu0 %2322
    %2325 = vst.msk [vmem:[#allocation4 + $0x1] sm:$0x1] %vm1566, %v2323
    %v2326 = vld [vmem:[#allocation3 + $0x5] sm:$0x1]
    %v2329 = vunpack.c.l.s4 1983009808
    %v2330 = vunpack.c.0.s8 %v2329
    %v2331 = vlaneseq
    %v2332 = vshrl.u32 %v2331, 7
    %v2333 = vsub.s32 %v2330, %v2332
    %v2334 = vrot.slane %v2326, %v2333
    %2335 = vrot.lane.b32.xlu0 %v2334, 60
    %v2336 = vpop.permute.xlu0 %2335
    %2338 = vst.msk [vmem:[#allocation4 + $0x1] sm:$0x1] %vm1580, %v2336
    %v2339 = vld [vmem:[#allocation3 + $0x6] sm:$0x1]
    %v2342 = vunpack.c.l.s4 1983009808
    %v2343 = vunpack.c.0.s8 %v2342
    %v2344 = vlaneseq
    %v2345 = vshrl.u32 %v2344, 7
    %v2346 = vsub.s32 %v2343, %v2345
    %v2347 = vrot.slane %v2339, %v2346
    %2348 = vrot.lane.b32.xlu0 %v2347, 76
    %v2349 = vpop.permute.xlu0 %2348
    %2351 = vst.msk [vmem:[#allocation4 + $0x1] sm:$0x1] %vm1594, %v2349
    %v2352 = vld [vmem:[#allocation3 + $0x7] sm:$0x1]
    %v2355 = vunpack.c.l.s4 1983009808
    %v2356 = vunpack.c.0.s8 %v2355
    %v2357 = vlaneseq
    %v2358 = vshrl.u32 %v2357, 7
    %v2359 = vsub.s32 %v2356, %v2358
    %v2360 = vrot.slane %v2352, %v2359
    %2361 = vrot.lane.b32.xlu0 %v2360, 92
    %v2362 = vpop.permute.xlu0 %2361
    %2364 = vst.msk [vmem:[#allocation4 + $0x1] sm:$0x1] %vm1608, %v2362
    %v2365 = vld [vmem:[#allocation3 + $0x8] sm:$0x1]
    %v2368 = vunpack.c.l.s4 1983009808
    %v2369 = vunpack.c.0.s8 %v2368
    %v2370 = vlaneseq
    %v2371 = vshrl.u32 %v2370, 7
    %v2372 = vsub.s32 %v2369, %v2371
    %v2373 = vrot.slane %v2365, %v2372
    %2374 = vrot.lane.b32.xlu0 %v2373, 108
    %v2375 = vpop.permute.xlu0 %2374
    %2377 = vst.msk [vmem:[#allocation4 + $0x3] sm:$0x1] %vm1510, %v2375
    %v2378 = vld [vmem:[#allocation3 + $0x9] sm:$0x1]
    %v2381 = vunpack.c.l.s4 1983009808
    %v2382 = vunpack.c.0.s8 %v2381
    %v2383 = vlaneseq
    %v2384 = vshrl.u32 %v2383, 7
    %v2385 = vsub.s32 %v2382, %v2384
    %v2386 = vrot.slane %v2378, %v2385
    %2387 = vrot.lane.b32.xlu0 %v2386, 124
    %v2388 = vpop.permute.xlu0 %2387
    %2390 = vst.msk [vmem:[#allocation4 + $0x3] sm:$0x1] %vm1524, %v2388
    %v2391 = vld [vmem:[#allocation3 + $0xa] sm:$0x1]
    %v2394 = vunpack.c.l.s4 1983009808
    %v2395 = vunpack.c.0.s8 %v2394
    %v2396 = vlaneseq
    %v2397 = vshrl.u32 %v2396, 7
    %v2398 = vsub.s32 %v2395, %v2397
    %v2399 = vrot.slane %v2391, %v2398
    %2400 = vrot.lane.b32.xlu0 %v2399, 12
    %v2401 = vpop.permute.xlu0 %2400
    %2403 = vst.msk [vmem:[#allocation4 + $0x3] sm:$0x1] %vm1538, %v2401
    %v2404 = vld [vmem:[#allocation3 + $0xb] sm:$0x1]
    %v2407 = vunpack.c.l.s4 1983009808
    %v2408 = vunpack.c.0.s8 %v2407
    %v2409 = vlaneseq
    %v2410 = vshrl.u32 %v2409, 7
    %v2411 = vsub.s32 %v2408, %v2410
    %v2412 = vrot.slane %v2404, %v2411
    %2413 = vrot.lane.b32.xlu0 %v2412, 28
    %v2414 = vpop.permute.xlu0 %2413
    %2416 = vst.msk [vmem:[#allocation4 + $0x3] sm:$0x1] %vm1552, %v2414
    %v2417 = vld [vmem:[#allocation3 + $0xc] sm:$0x1]
    %v2420 = vunpack.c.l.s4 1983009808
    %v2421 = vunpack.c.0.s8 %v2420
    %v2422 = vlaneseq
    %v2423 = vshrl.u32 %v2422, 7
    %v2424 = vsub.s32 %v2421, %v2423
    %v2425 = vrot.slane %v2417, %v2424
    %2426 = vrot.lane.b32.xlu0 %v2425, 44
    %v2427 = vpop.permute.xlu0 %2426
    %2429 = vst.msk [vmem:[#allocation4 + $0x3] sm:$0x1] %vm1566, %v2427
    %v2430 = vld [vmem:[#allocation3 + $0xd] sm:$0x1]
    %v2433 = vunpack.c.l.s4 1983009808
    %v2434 = vunpack.c.0.s8 %v2433
    %v2435 = vlaneseq
    %v2436 = vshrl.u32 %v2435, 7
    %v2437 = vsub.s32 %v2434, %v2436
    %v2438 = vrot.slane %v2430, %v2437
    %2439 = vrot.lane.b32.xlu0 %v2438, 60
    %v2440 = vpop.permute.xlu0 %2439
    %2442 = vst.msk [vmem:[#allocation4 + $0x3] sm:$0x1] %vm1580, %v2440
    %v2443 = vld [vmem:[#allocation3 + $0xe] sm:$0x1]
    %v2446 = vunpack.c.l.s4 1983009808
    %v2447 = vunpack.c.0.s8 %v2446
    %v2448 = vlaneseq
    %v2449 = vshrl.u32 %v2448, 7
    %v2450 = vsub.s32 %v2447, %v2449
    %v2451 = vrot.slane %v2443, %v2450
    %2452 = vrot.lane.b32.xlu0 %v2451, 76
    %v2453 = vpop.permute.xlu0 %2452
    %2455 = vst.msk [vmem:[#allocation4 + $0x3] sm:$0x1] %vm1594, %v2453
    %v2456 = vld [vmem:[#allocation3 + $0xf] sm:$0x1]
    %v2459 = vunpack.c.l.s4 1983009808
    %v2460 = vunpack.c.0.s8 %v2459
    %v2461 = vlaneseq
    %v2462 = vshrl.u32 %v2461, 7
    %v2463 = vsub.s32 %v2460, %v2462
    %v2464 = vrot.slane %v2456, %v2463
    %2465 = vrot.lane.b32.xlu0 %v2464, 92
    %v2466 = vpop.permute.xlu0 %2465
    %2468 = vst.msk [vmem:[#allocation4 + $0x3] sm:$0x1] %vm1608, %v2466
    %v2469 = vld [vmem:[#allocation3 + $0x10] sm:$0x1]
    %v2472 = vunpack.c.l.s4 1983009808
    %v2473 = vunpack.c.0.s8 %v2472
    %v2474 = vlaneseq
    %v2475 = vshrl.u32 %v2474, 7
    %v2476 = vsub.s32 %v2473, %v2475
    %v2477 = vrot.slane %v2469, %v2476
    %2478 = vrot.lane.b32.xlu0 %v2477, 108
    %v2479 = vpop.permute.xlu0 %2478
    %2481 = vst.msk [vmem:[#allocation4 + $0x5] sm:$0x1] %vm1510, %v2479
    %v2482 = vld [vmem:[#allocation3 + $0x11] sm:$0x1]
    %v2485 = vunpack.c.l.s4 1983009808
    %v2486 = vunpack.c.0.s8 %v2485
    %v2487 = vlaneseq
    %v2488 = vshrl.u32 %v2487, 7
    %v2489 = vsub.s32 %v2486, %v2488
    %v2490 = vrot.slane %v2482, %v2489
    %2491 = vrot.lane.b32.xlu0 %v2490, 124
    %v2492 = vpop.permute.xlu0 %2491
    %2494 = vst.msk [vmem:[#allocation4 + $0x5] sm:$0x1] %vm1524, %v2492
    %v2495 = vld [vmem:[#allocation3 + $0x12] sm:$0x1]
    %v2498 = vunpack.c.l.s4 1983009808
    %v2499 = vunpack.c.0.s8 %v2498
    %v2500 = vlaneseq
    %v2501 = vshrl.u32 %v2500, 7
    %v2502 = vsub.s32 %v2499, %v2501
    %v2503 = vrot.slane %v2495, %v2502
    %2504 = vrot.lane.b32.xlu0 %v2503, 12
    %v2505 = vpop.permute.xlu0 %2504
    %2507 = vst.msk [vmem:[#allocation4 + $0x5] sm:$0x1] %vm1538, %v2505
    %v2508 = vld [vmem:[#allocation3 + $0x13] sm:$0x1]
    %v2511 = vunpack.c.l.s4 1983009808
    %v2512 = vunpack.c.0.s8 %v2511
    %v2513 = vlaneseq
    %v2514 = vshrl.u32 %v2513, 7
    %v2515 = vsub.s32 %v2512, %v2514
    %v2516 = vrot.slane %v2508, %v2515
    %2517 = vrot.lane.b32.xlu0 %v2516, 28
    %v2518 = vpop.permute.xlu0 %2517
    %2520 = vst.msk [vmem:[#allocation4 + $0x5] sm:$0x1] %vm1552, %v2518
    %v2521 = vld [vmem:[#allocation3 + $0x14] sm:$0x1]
    %v2524 = vunpack.c.l.s4 1983009808
    %v2525 = vunpack.c.0.s8 %v2524
    %v2526 = vlaneseq
    %v2527 = vshrl.u32 %v2526, 7
    %v2528 = vsub.s32 %v2525, %v2527
    %v2529 = vrot.slane %v2521, %v2528
    %2530 = vrot.lane.b32.xlu0 %v2529, 44
    %v2531 = vpop.permute.xlu0 %2530
    %2533 = vst.msk [vmem:[#allocation4 + $0x5] sm:$0x1] %vm1566, %v2531
    %v2534 = vld [vmem:[#allocation3 + $0x15] sm:$0x1]
    %v2537 = vunpack.c.l.s4 1983009808
    %v2538 = vunpack.c.0.s8 %v2537
    %v2539 = vlaneseq
    %v2540 = vshrl.u32 %v2539, 7
    %v2541 = vsub.s32 %v2538, %v2540
    %v2542 = vrot.slane %v2534, %v2541
    %2543 = vrot.lane.b32.xlu0 %v2542, 60
    %v2544 = vpop.permute.xlu0 %2543
    %2546 = vst.msk [vmem:[#allocation4 + $0x5] sm:$0x1] %vm1580, %v2544
    %v2547 = vld [vmem:[#allocation3 + $0x16] sm:$0x1]
    %v2550 = vunpack.c.l.s4 1983009808
    %v2551 = vunpack.c.0.s8 %v2550
    %v2552 = vlaneseq
    %v2553 = vshrl.u32 %v2552, 7
    %v2554 = vsub.s32 %v2551, %v2553
    %v2555 = vrot.slane %v2547, %v2554
    %2556 = vrot.lane.b32.xlu0 %v2555, 76
    %v2557 = vpop.permute.xlu0 %2556
    %2559 = vst.msk [vmem:[#allocation4 + $0x5] sm:$0x1] %vm1594, %v2557
    %v2560 = vld [vmem:[#allocation3 + $0x17] sm:$0x1]
    %v2563 = vunpack.c.l.s4 1983009808
    %v2564 = vunpack.c.0.s8 %v2563
    %v2565 = vlaneseq
    %v2566 = vshrl.u32 %v2565, 7
    %v2567 = vsub.s32 %v2564, %v2566
    %v2568 = vrot.slane %v2560, %v2567
    %2569 = vrot.lane.b32.xlu0 %v2568, 92
    %v2570 = vpop.permute.xlu0 %2569
    %2572 = vst.msk [vmem:[#allocation4 + $0x5] sm:$0x1] %vm1608, %v2570
    %v2573 = vld [vmem:[#allocation3 + $0x18] sm:$0x1]
    %v2576 = vunpack.c.l.s4 1983009808
    %v2577 = vunpack.c.0.s8 %v2576
    %v2578 = vlaneseq
    %v2579 = vshrl.u32 %v2578, 7
    %v2580 = vsub.s32 %v2577, %v2579
    %v2581 = vrot.slane %v2573, %v2580
    %2582 = vrot.lane.b32.xlu0 %v2581, 108
    %v2583 = vpop.permute.xlu0 %2582
    %2585 = vst.msk [vmem:[#allocation4 + $0x7] sm:$0x1] %vm1510, %v2583
    %v2586 = vld [vmem:[#allocation3 + $0x19] sm:$0x1]
    %v2589 = vunpack.c.l.s4 1983009808
    %v2590 = vunpack.c.0.s8 %v2589
    %v2591 = vlaneseq
    %v2592 = vshrl.u32 %v2591, 7
    %v2593 = vsub.s32 %v2590, %v2592
    %v2594 = vrot.slane %v2586, %v2593
    %2595 = vrot.lane.b32.xlu0 %v2594, 124
    %v2596 = vpop.permute.xlu0 %2595
    %2598 = vst.msk [vmem:[#allocation4 + $0x7] sm:$0x1] %vm1524, %v2596
    %v2599 = vld [vmem:[#allocation3 + $0x1a] sm:$0x1]
    %v2602 = vunpack.c.l.s4 1983009808
    %v2603 = vunpack.c.0.s8 %v2602
    %v2604 = vlaneseq
    %v2605 = vshrl.u32 %v2604, 7
    %v2606 = vsub.s32 %v2603, %v2605
    %v2607 = vrot.slane %v2599, %v2606
    %2608 = vrot.lane.b32.xlu0 %v2607, 12
    %v2609 = vpop.permute.xlu0 %2608
    %2611 = vst.msk [vmem:[#allocation4 + $0x7] sm:$0x1] %vm1538, %v2609
    %v2612 = vld [vmem:[#allocation3 + $0x1b] sm:$0x1]
    %v2615 = vunpack.c.l.s4 1983009808
    %v2616 = vunpack.c.0.s8 %v2615
    %v2617 = vlaneseq
    %v2618 = vshrl.u32 %v2617, 7
    %v2619 = vsub.s32 %v2616, %v2618
    %v2620 = vrot.slane %v2612, %v2619
    %2621 = vrot.lane.b32.xlu0 %v2620, 28
    %v2622 = vpop.permute.xlu0 %2621
    %2624 = vst.msk [vmem:[#allocation4 + $0x7] sm:$0x1] %vm1552, %v2622
    %v2625 = vld [vmem:[#allocation3 + $0x1c] sm:$0x1]
    %v2628 = vunpack.c.l.s4 1983009808
    %v2629 = vunpack.c.0.s8 %v2628
    %v2630 = vlaneseq
    %v2631 = vshrl.u32 %v2630, 7
    %v2632 = vsub.s32 %v2629, %v2631
    %v2633 = vrot.slane %v2625, %v2632
    %2634 = vrot.lane.b32.xlu0 %v2633, 44
    %v2635 = vpop.permute.xlu0 %2634
    %2637 = vst.msk [vmem:[#allocation4 + $0x7] sm:$0x1] %vm1566, %v2635
    %v2638 = vld [vmem:[#allocation3 + $0x1d] sm:$0x1]
    %v2641 = vunpack.c.l.s4 1983009808
    %v2642 = vunpack.c.0.s8 %v2641
    %v2643 = vlaneseq
    %v2644 = vshrl.u32 %v2643, 7
    %v2645 = vsub.s32 %v2642, %v2644
    %v2646 = vrot.slane %v2638, %v2645
    %2647 = vrot.lane.b32.xlu0 %v2646, 60
    %v2648 = vpop.permute.xlu0 %2647
    %2650 = vst.msk [vmem:[#allocation4 + $0x7] sm:$0x1] %vm1580, %v2648
    %v2651 = vld [vmem:[#allocation3 + $0x1e] sm:$0x1]
    %v2654 = vunpack.c.l.s4 1983009808
    %v2655 = vunpack.c.0.s8 %v2654
    %v2656 = vlaneseq
    %v2657 = vshrl.u32 %v2656, 7
    %v2658 = vsub.s32 %v2655, %v2657
    %v2659 = vrot.slane %v2651, %v2658
    %2660 = vrot.lane.b32.xlu0 %v2659, 76
    %v2661 = vpop.permute.xlu0 %2660
    %2663 = vst.msk [vmem:[#allocation4 + $0x7] sm:$0x1] %vm1594, %v2661
    %v2664 = vld [vmem:[#allocation3 + $0x1f] sm:$0x1]
    %v2667 = vunpack.c.l.s4 1983009808
    %v2668 = vunpack.c.0.s8 %v2667
    %v2669 = vlaneseq
    %v2670 = vshrl.u32 %v2669, 7
    %v2671 = vsub.s32 %v2668, %v2670
    %v2672 = vrot.slane %v2664, %v2671
    %2673 = vrot.lane.b32.xlu0 %v2672, 92
    %v2674 = vpop.permute.xlu0 %2673
    %2676 = vst.msk [vmem:[#allocation4 + $0x7] sm:$0x1] %vm1608, %v2674
    %v2677 = vld [vmem:[#allocation3 + $0x20] sm:$0x1]
    %v2680 = vunpack.c.l.s4 1983009808
    %v2681 = vunpack.c.0.s8 %v2680
    %v2682 = vlaneseq
    %v2683 = vshrl.u32 %v2682, 7
    %v2684 = vsub.s32 %v2681, %v2683
    %v2685 = vrot.slane %v2677, %v2684
    %2686 = vrot.lane.b32.xlu0 %v2685, 108
    %v2687 = vpop.permute.xlu0 %2686
    %2689 = vst.msk [vmem:[#allocation4 + $0x9] sm:$0x1] %vm1510, %v2687
    %v2690 = vld [vmem:[#allocation3 + $0x21] sm:$0x1]
    %v2693 = vunpack.c.l.s4 1983009808
    %v2694 = vunpack.c.0.s8 %v2693
    %v2695 = vlaneseq
    %v2696 = vshrl.u32 %v2695, 7
    %v2697 = vsub.s32 %v2694, %v2696
    %v2698 = vrot.slane %v2690, %v2697
    %2699 = vrot.lane.b32.xlu0 %v2698, 124
    %v2700 = vpop.permute.xlu0 %2699
    %2702 = vst.msk [vmem:[#allocation4 + $0x9] sm:$0x1] %vm1524, %v2700
    %v2703 = vld [vmem:[#allocation3 + $0x22] sm:$0x1]
    %v2706 = vunpack.c.l.s4 1983009808
    %v2707 = vunpack.c.0.s8 %v2706
    %v2708 = vlaneseq
    %v2709 = vshrl.u32 %v2708, 7
    %v2710 = vsub.s32 %v2707, %v2709
    %v2711 = vrot.slane %v2703, %v2710
    %2712 = vrot.lane.b32.xlu0 %v2711, 12
    %v2713 = vpop.permute.xlu0 %2712
    %2715 = vst.msk [vmem:[#allocation4 + $0x9] sm:$0x1] %vm1538, %v2713
    %v2716 = vld [vmem:[#allocation3 + $0x23] sm:$0x1]
    %v2719 = vunpack.c.l.s4 1983009808
    %v2720 = vunpack.c.0.s8 %v2719
    %v2721 = vlaneseq
    %v2722 = vshrl.u32 %v2721, 7
    %v2723 = vsub.s32 %v2720, %v2722
    %v2724 = vrot.slane %v2716, %v2723
    %2725 = vrot.lane.b32.xlu0 %v2724, 28
    %v2726 = vpop.permute.xlu0 %2725
    %2728 = vst.msk [vmem:[#allocation4 + $0x9] sm:$0x1] %vm1552, %v2726
    %v2729 = vld [vmem:[#allocation3 + $0x24] sm:$0x1]
    %v2732 = vunpack.c.l.s4 1983009808
    %v2733 = vunpack.c.0.s8 %v2732
    %v2734 = vlaneseq
    %v2735 = vshrl.u32 %v2734, 7
    %v2736 = vsub.s32 %v2733, %v2735
    %v2737 = vrot.slane %v2729, %v2736
    %2738 = vrot.lane.b32.xlu0 %v2737, 44
    %v2739 = vpop.permute.xlu0 %2738
    %2741 = vst.msk [vmem:[#allocation4 + $0x9] sm:$0x1] %vm1566, %v2739
    %v2742 = vld [vmem:[#allocation3 + $0x25] sm:$0x1]
    %v2745 = vunpack.c.l.s4 1983009808
    %v2746 = vunpack.c.0.s8 %v2745
    %v2747 = vlaneseq
    %v2748 = vshrl.u32 %v2747, 7
    %v2749 = vsub.s32 %v2746, %v2748
    %v2750 = vrot.slane %v2742, %v2749
    %2751 = vrot.lane.b32.xlu0 %v2750, 60
    %v2752 = vpop.permute.xlu0 %2751
    %2754 = vst.msk [vmem:[#allocation4 + $0x9] sm:$0x1] %vm1580, %v2752
    %v2755 = vld [vmem:[#allocation3 + $0x26] sm:$0x1]
    %v2758 = vunpack.c.l.s4 1983009808
    %v2759 = vunpack.c.0.s8 %v2758
    %v2760 = vlaneseq
    %v2761 = vshrl.u32 %v2760, 7
    %v2762 = vsub.s32 %v2759, %v2761
    %v2763 = vrot.slane %v2755, %v2762
    %2764 = vrot.lane.b32.xlu0 %v2763, 76
    %v2765 = vpop.permute.xlu0 %2764
    %2767 = vst.msk [vmem:[#allocation4 + $0x9] sm:$0x1] %vm1594, %v2765
    %v2768 = vld [vmem:[#allocation3 + $0x27] sm:$0x1]
    %v2771 = vunpack.c.l.s4 1983009808
    %v2772 = vunpack.c.0.s8 %v2771
    %v2773 = vlaneseq
    %v2774 = vshrl.u32 %v2773, 7
    %v2775 = vsub.s32 %v2772, %v2774
    %v2776 = vrot.slane %v2768, %v2775
    %2777 = vrot.lane.b32.xlu0 %v2776, 92
    %v2778 = vpop.permute.xlu0 %2777
    %2780 = vst.msk [vmem:[#allocation4 + $0x9] sm:$0x1] %vm1608, %v2778
    %v2781 = vld [vmem:[#allocation3 + $0x28] sm:$0x1]
    %v2784 = vunpack.c.l.s4 1983009808
    %v2785 = vunpack.c.0.s8 %v2784
    %v2786 = vlaneseq
    %v2787 = vshrl.u32 %v2786, 7
    %v2788 = vsub.s32 %v2785, %v2787
    %v2789 = vrot.slane %v2781, %v2788
    %2790 = vrot.lane.b32.xlu0 %v2789, 108
    %v2791 = vpop.permute.xlu0 %2790
    %2793 = vst.msk [vmem:[#allocation4 + $0xb] sm:$0x1] %vm1510, %v2791
    %v2794 = vld [vmem:[#allocation3 + $0x29] sm:$0x1]
    %v2797 = vunpack.c.l.s4 1983009808
    %v2798 = vunpack.c.0.s8 %v2797
    %v2799 = vlaneseq
    %v2800 = vshrl.u32 %v2799, 7
    %v2801 = vsub.s32 %v2798, %v2800
    %v2802 = vrot.slane %v2794, %v2801
    %2803 = vrot.lane.b32.xlu0 %v2802, 124
    %v2804 = vpop.permute.xlu0 %2803
    %2806 = vst.msk [vmem:[#allocation4 + $0xb] sm:$0x1] %vm1524, %v2804
    %v2807 = vld [vmem:[#allocation3 + $0x2a] sm:$0x1]
    %v2810 = vunpack.c.l.s4 1983009808
    %v2811 = vunpack.c.0.s8 %v2810
    %v2812 = vlaneseq
    %v2813 = vshrl.u32 %v2812, 7
    %v2814 = vsub.s32 %v2811, %v2813
    %v2815 = vrot.slane %v2807, %v2814
    %2816 = vrot.lane.b32.xlu0 %v2815, 12
    %v2817 = vpop.permute.xlu0 %2816
    %2819 = vst.msk [vmem:[#allocation4 + $0xb] sm:$0x1] %vm1538, %v2817
    %v2820 = vld [vmem:[#allocation3 + $0x2b] sm:$0x1]
    %v2823 = vunpack.c.l.s4 1983009808
    %v2824 = vunpack.c.0.s8 %v2823
    %v2825 = vlaneseq
    %v2826 = vshrl.u32 %v2825, 7
    %v2827 = vsub.s32 %v2824, %v2826
    %v2828 = vrot.slane %v2820, %v2827
    %2829 = vrot.lane.b32.xlu0 %v2828, 28
    %v2830 = vpop.permute.xlu0 %2829
    %2832 = vst.msk [vmem:[#allocation4 + $0xb] sm:$0x1] %vm1552, %v2830
    %v2833 = vld [vmem:[#allocation3 + $0x2c] sm:$0x1]
    %v2836 = vunpack.c.l.s4 1983009808
    %v2837 = vunpack.c.0.s8 %v2836
    %v2838 = vlaneseq
    %v2839 = vshrl.u32 %v2838, 7
    %v2840 = vsub.s32 %v2837, %v2839
    %v2841 = vrot.slane %v2833, %v2840
    %2842 = vrot.lane.b32.xlu0 %v2841, 44
    %v2843 = vpop.permute.xlu0 %2842
    %2845 = vst.msk [vmem:[#allocation4 + $0xb] sm:$0x1] %vm1566, %v2843
    %v2846 = vld [vmem:[#allocation3 + $0x2d] sm:$0x1]
    %v2849 = vunpack.c.l.s4 1983009808
    %v2850 = vunpack.c.0.s8 %v2849
    %v2851 = vlaneseq
    %v2852 = vshrl.u32 %v2851, 7
    %v2853 = vsub.s32 %v2850, %v2852
    %v2854 = vrot.slane %v2846, %v2853
    %2855 = vrot.lane.b32.xlu0 %v2854, 60
    %v2856 = vpop.permute.xlu0 %2855
    %2858 = vst.msk [vmem:[#allocation4 + $0xb] sm:$0x1] %vm1580, %v2856
    %v2859 = vld [vmem:[#allocation3 + $0x2e] sm:$0x1]
    %v2862 = vunpack.c.l.s4 1983009808
    %v2863 = vunpack.c.0.s8 %v2862
    %v2864 = vlaneseq
    %v2865 = vshrl.u32 %v2864, 7
    %v2866 = vsub.s32 %v2863, %v2865
    %v2867 = vrot.slane %v2859, %v2866
    %2868 = vrot.lane.b32.xlu0 %v2867, 76
    %v2869 = vpop.permute.xlu0 %2868
    %2871 = vst.msk [vmem:[#allocation4 + $0xb] sm:$0x1] %vm1594, %v2869
    %v2872 = vld [vmem:[#allocation3 + $0x2f] sm:$0x1]
    %v2875 = vunpack.c.l.s4 1983009808
    %v2876 = vunpack.c.0.s8 %v2875
    %v2877 = vlaneseq
    %v2878 = vshrl.u32 %v2877, 7
    %v2879 = vsub.s32 %v2876, %v2878
    %v2880 = vrot.slane %v2872, %v2879
    %2881 = vrot.lane.b32.xlu0 %v2880, 92
    %v2882 = vpop.permute.xlu0 %2881
    %2884 = vst.msk [vmem:[#allocation4 + $0xb] sm:$0x1] %vm1608, %v2882
    %v2885 = vld [vmem:[#allocation3 + $0x30] sm:$0x1]
    %v2888 = vunpack.c.l.s4 1983009808
    %v2889 = vunpack.c.0.s8 %v2888
    %v2890 = vlaneseq
    %v2891 = vshrl.u32 %v2890, 7
    %v2892 = vsub.s32 %v2889, %v2891
    %v2893 = vrot.slane %v2885, %v2892
    %2894 = vrot.lane.b32.xlu0 %v2893, 108
    %v2895 = vpop.permute.xlu0 %2894
    %2897 = vst.msk [vmem:[#allocation4 + $0xd] sm:$0x1] %vm1510, %v2895
    %v2898 = vld [vmem:[#allocation3 + $0x31] sm:$0x1]
    %v2901 = vunpack.c.l.s4 1983009808
    %v2902 = vunpack.c.0.s8 %v2901
    %v2903 = vlaneseq
    %v2904 = vshrl.u32 %v2903, 7
    %v2905 = vsub.s32 %v2902, %v2904
    %v2906 = vrot.slane %v2898, %v2905
    %2907 = vrot.lane.b32.xlu0 %v2906, 124
    %v2908 = vpop.permute.xlu0 %2907
    %2910 = vst.msk [vmem:[#allocation4 + $0xd] sm:$0x1] %vm1524, %v2908
    %v2911 = vld [vmem:[#allocation3 + $0x32] sm:$0x1]
    %v2914 = vunpack.c.l.s4 1983009808
    %v2915 = vunpack.c.0.s8 %v2914
    %v2916 = vlaneseq
    %v2917 = vshrl.u32 %v2916, 7
    %v2918 = vsub.s32 %v2915, %v2917
    %v2919 = vrot.slane %v2911, %v2918
    %2920 = vrot.lane.b32.xlu0 %v2919, 12
    %v2921 = vpop.permute.xlu0 %2920
    %2923 = vst.msk [vmem:[#allocation4 + $0xd] sm:$0x1] %vm1538, %v2921
    %v2924 = vld [vmem:[#allocation3 + $0x33] sm:$0x1]
    %v2927 = vunpack.c.l.s4 1983009808
    %v2928 = vunpack.c.0.s8 %v2927
    %v2929 = vlaneseq
    %v2930 = vshrl.u32 %v2929, 7
    %v2931 = vsub.s32 %v2928, %v2930
    %v2932 = vrot.slane %v2924, %v2931
    %2933 = vrot.lane.b32.xlu0 %v2932, 28
    %v2934 = vpop.permute.xlu0 %2933
    %2936 = vst.msk [vmem:[#allocation4 + $0xd] sm:$0x1] %vm1552, %v2934
    %v2937 = vld [vmem:[#allocation3 + $0x34] sm:$0x1]
    %v2940 = vunpack.c.l.s4 1983009808
    %v2941 = vunpack.c.0.s8 %v2940
    %v2942 = vlaneseq
    %v2943 = vshrl.u32 %v2942, 7
    %v2944 = vsub.s32 %v2941, %v2943
    %v2945 = vrot.slane %v2937, %v2944
    %2946 = vrot.lane.b32.xlu0 %v2945, 44
    %v2947 = vpop.permute.xlu0 %2946
    %2949 = vst.msk [vmem:[#allocation4 + $0xd] sm:$0x1] %vm1566, %v2947
    %v2950 = vld [vmem:[#allocation3 + $0x35] sm:$0x1]
    %v2953 = vunpack.c.l.s4 1983009808
    %v2954 = vunpack.c.0.s8 %v2953
    %v2955 = vlaneseq
    %v2956 = vshrl.u32 %v2955, 7
    %v2957 = vsub.s32 %v2954, %v2956
    %v2958 = vrot.slane %v2950, %v2957
    %2959 = vrot.lane.b32.xlu0 %v2958, 60
    %v2960 = vpop.permute.xlu0 %2959
    %2962 = vst.msk [vmem:[#allocation4 + $0xd] sm:$0x1] %vm1580, %v2960
    %v2963 = vld [vmem:[#allocation3 + $0x36] sm:$0x1]
    %v2966 = vunpack.c.l.s4 1983009808
    %v2967 = vunpack.c.0.s8 %v2966
    %v2968 = vlaneseq
    %v2969 = vshrl.u32 %v2968, 7
    %v2970 = vsub.s32 %v2967, %v2969
    %v2971 = vrot.slane %v2963, %v2970
    %2972 = vrot.lane.b32.xlu0 %v2971, 76
    %v2973 = vpop.permute.xlu0 %2972
    %2975 = vst.msk [vmem:[#allocation4 + $0xd] sm:$0x1] %vm1594, %v2973
    %v2976 = vld [vmem:[#allocation3 + $0x37] sm:$0x1]
    %v2979 = vunpack.c.l.s4 1983009808
    %v2980 = vunpack.c.0.s8 %v2979
    %v2981 = vlaneseq
    %v2982 = vshrl.u32 %v2981, 7
    %v2983 = vsub.s32 %v2980, %v2982
    %v2984 = vrot.slane %v2976, %v2983
    %2985 = vrot.lane.b32.xlu0 %v2984, 92
    %v2986 = vpop.permute.xlu0 %2985
    %2988 = vst.msk [vmem:[#allocation4 + $0xd] sm:$0x1] %vm1608, %v2986
    %v2989 = vld [vmem:[#allocation3 + $0x38] sm:$0x1]
    %v2992 = vunpack.c.l.s4 1983009808
    %v2993 = vunpack.c.0.s8 %v2992
    %v2994 = vlaneseq
    %v2995 = vshrl.u32 %v2994, 7
    %v2996 = vsub.s32 %v2993, %v2995
    %v2997 = vrot.slane %v2989, %v2996
    %2998 = vrot.lane.b32.xlu0 %v2997, 108
    %v2999 = vpop.permute.xlu0 %2998
    %3001 = vst.msk [vmem:[#allocation4 + $0xf] sm:$0x1] %vm1510, %v2999
    %v3002 = vld [vmem:[#allocation3 + $0x39] sm:$0x1]
    %v3005 = vunpack.c.l.s4 1983009808
    %v3006 = vunpack.c.0.s8 %v3005
    %v3007 = vlaneseq
    %v3008 = vshrl.u32 %v3007, 7
    %v3009 = vsub.s32 %v3006, %v3008
    %v3010 = vrot.slane %v3002, %v3009
    %3011 = vrot.lane.b32.xlu0 %v3010, 124
    %v3012 = vpop.permute.xlu0 %3011
    %3014 = vst.msk [vmem:[#allocation4 + $0xf] sm:$0x1] %vm1524, %v3012
    %v3015 = vld [vmem:[#allocation3 + $0x3a] sm:$0x1]
    %v3018 = vunpack.c.l.s4 1983009808
    %v3019 = vunpack.c.0.s8 %v3018
    %v3020 = vlaneseq
    %v3021 = vshrl.u32 %v3020, 7
    %v3022 = vsub.s32 %v3019, %v3021
    %v3023 = vrot.slane %v3015, %v3022
    %3024 = vrot.lane.b32.xlu0 %v3023, 12
    %v3025 = vpop.permute.xlu0 %3024
    %3027 = vst.msk [vmem:[#allocation4 + $0xf] sm:$0x1] %vm1538, %v3025
    %v3028 = vld [vmem:[#allocation3 + $0x3b] sm:$0x1]
    %v3031 = vunpack.c.l.s4 1983009808
    %v3032 = vunpack.c.0.s8 %v3031
    %v3033 = vlaneseq
    %v3034 = vshrl.u32 %v3033, 7
    %v3035 = vsub.s32 %v3032, %v3034
    %v3036 = vrot.slane %v3028, %v3035
    %3037 = vrot.lane.b32.xlu0 %v3036, 28
    %v3038 = vpop.permute.xlu0 %3037
    %3040 = vst.msk [vmem:[#allocation4 + $0xf] sm:$0x1] %vm1552, %v3038
    %v3041 = vld [vmem:[#allocation3 + $0x3c] sm:$0x1]
    %v3044 = vunpack.c.l.s4 1983009808
    %v3045 = vunpack.c.0.s8 %v3044
    %v3046 = vlaneseq
    %v3047 = vshrl.u32 %v3046, 7
    %v3048 = vsub.s32 %v3045, %v3047
    %v3049 = vrot.slane %v3041, %v3048
    %3050 = vrot.lane.b32.xlu0 %v3049, 44
    %v3051 = vpop.permute.xlu0 %3050
    %3053 = vst.msk [vmem:[#allocation4 + $0xf] sm:$0x1] %vm1566, %v3051
    %v3054 = vld [vmem:[#allocation3 + $0x3d] sm:$0x1]
    %v3057 = vunpack.c.l.s4 1983009808
    %v3058 = vunpack.c.0.s8 %v3057
    %v3059 = vlaneseq
    %v3060 = vshrl.u32 %v3059, 7
    %v3061 = vsub.s32 %v3058, %v3060
    %v3062 = vrot.slane %v3054, %v3061
    %3063 = vrot.lane.b32.xlu0 %v3062, 60
    %v3064 = vpop.permute.xlu0 %3063
    %3066 = vst.msk [vmem:[#allocation4 + $0xf] sm:$0x1] %vm1580, %v3064
    %v3067 = vld [vmem:[#allocation3 + $0x3e] sm:$0x1]
    %v3070 = vunpack.c.l.s4 1983009808
    %v3071 = vunpack.c.0.s8 %v3070
    %v3072 = vlaneseq
    %v3073 = vshrl.u32 %v3072, 7
    %v3074 = vsub.s32 %v3071, %v3073
    %v3075 = vrot.slane %v3067, %v3074
    %3076 = vrot.lane.b32.xlu0 %v3075, 76
    %v3077 = vpop.permute.xlu0 %3076
    %3079 = vst.msk [vmem:[#allocation4 + $0xf] sm:$0x1] %vm1594, %v3077
    %v3080 = vld [vmem:[#allocation3 + $0x3f] sm:$0x1]
    %v3083 = vunpack.c.l.s4 1983009808
    %v3084 = vunpack.c.0.s8 %v3083
    %v3085 = vlaneseq
    %v3086 = vshrl.u32 %v3085, 7
    %v3087 = vsub.s32 %v3084, %v3086
    %v3088 = vrot.slane %v3080, %v3087
    %3089 = vrot.lane.b32.xlu0 %v3088, 92
    %v3090 = vpop.permute.xlu0 %3089
    %3092 = vst.msk [vmem:[#allocation4 + $0xf] sm:$0x1] %vm1608, %v3090
    %v3093 = vld [vmem:[#allocation4] sm:$0xff]
    %v3094 = vld [vmem:[#allocation4 + $0x8] sm:$0xff]
    %v3095 = vld [vmem:[#allocation5] sm:$0xff]
    %v3096 = vld [vmem:[#allocation5 + $0x8] sm:$0xff]
    %v3097 = vld [vmem:[#allocation5 + $0x10] sm:$0xff]
    %v3098 = vld [vmem:[#allocation5 + $0x18] sm:$0xff]
    %v3099 = vld [vmem:[#allocation5 + $0x20] sm:$0xff]
    %v3100 = vld [vmem:[#allocation5 + $0x28] sm:$0xff]
    %v3101 = vld [vmem:[#allocation5 + $0x30] sm:$0xff]
    %v3102 = vld [vmem:[#allocation5 + $0x38] sm:$0xff]
    %v3103 = vld [vmem:[#allocation5 + $0x40] sm:$0xff]
    %v3104 = vld [vmem:[#allocation5 + $0x48] sm:$0xff]
    %v3105 = vld [vmem:[#allocation5 + $0x50] sm:$0xff]
    %v3106 = vld [vmem:[#allocation5 + $0x58] sm:$0xff]
    %v3107 = vld [vmem:[#allocation5 + $0x60] sm:$0xff]
    %v3108 = vld [vmem:[#allocation5 + $0x68] sm:$0xff]
    %v3109 = vld [vmem:[#allocation5 + $0x70] sm:$0xff]
    %v3110 = vld [vmem:[#allocation5 + $0x78] sm:$0xff]
    %v3111 = vld [vmem:[#allocation5 + $0x80] sm:$0xff]
    %v3112 = vld [vmem:[#allocation5 + $0x88] sm:$0xff]
    %v3113 = vld [vmem:[#allocation5 + $0x90] sm:$0xff]
    %v3114 = vld [vmem:[#allocation5 + $0x98] sm:$0xff]
    %v3115 = vld [vmem:[#allocation5 + $0xa0] sm:$0xff]
    %v3116 = vld [vmem:[#allocation5 + $0xa8] sm:$0xff]
    %v3117 = vld [vmem:[#allocation5 + $0xb0] sm:$0xff]
    %v3118 = vld [vmem:[#allocation5 + $0xb8] sm:$0xff]
    %v3119 = vld [vmem:[#allocation5 + $0xc0] sm:$0xff]
    %v3120 = vld [vmem:[#allocation5 + $0xc8] sm:$0xff]
    %v3121 = vld [vmem:[#allocation5 + $0xd0] sm:$0xff]
    %v3122 = vld [vmem:[#allocation5 + $0xd8] sm:$0xff]
    %v3123 = vld [vmem:[#allocation5 + $0xe0] sm:$0xff]
    %v3124 = vld [vmem:[#allocation5 + $0xe8] sm:$0xff]
    %v3125 = vld [vmem:[#allocation5 + $0xf0] sm:$0xff]
    %v3126 = vld [vmem:[#allocation5 + $0xf8] sm:$0xff]
    %v3127 = vld [vmem:[#allocation5 + $0x100] sm:$0xff]
    %v3128 = vld [vmem:[#allocation5 + $0x108] sm:$0xff]
    %v3129 = vld [vmem:[#allocation5 + $0x110] sm:$0xff]
    %v3130 = vld [vmem:[#allocation5 + $0x118] sm:$0xff]
    %v3131 = vld [vmem:[#allocation5 + $0x120] sm:$0xff]
    %v3132 = vld [vmem:[#allocation5 + $0x128] sm:$0xff]
    %v3133 = vld [vmem:[#allocation5 + $0x130] sm:$0xff]
    %v3134 = vld [vmem:[#allocation5 + $0x138] sm:$0xff]
    %v3135 = vld [vmem:[#allocation5 + $0x140] sm:$0xff]
    %v3136 = vld [vmem:[#allocation5 + $0x148] sm:$0xff]
    %v3137 = vld [vmem:[#allocation5 + $0x150] sm:$0xff]
    %v3138 = vld [vmem:[#allocation5 + $0x158] sm:$0xff]
    %v3139 = vld [vmem:[#allocation5 + $0x160] sm:$0xff]
    %v3140 = vld [vmem:[#allocation5 + $0x168] sm:$0xff]
    %v3141 = vld [vmem:[#allocation5 + $0x170] sm:$0xff]
    %v3142 = vld [vmem:[#allocation5 + $0x178] sm:$0xff]
    %v3143 = vld [vmem:[#allocation5 + $0x180] sm:$0xff]
    %v3144 = vld [vmem:[#allocation5 + $0x188] sm:$0xff]
    %v3145 = vld [vmem:[#allocation5 + $0x190] sm:$0xff]
    %v3146 = vld [vmem:[#allocation5 + $0x198] sm:$0xff]
    %v3147 = vld [vmem:[#allocation5 + $0x1a0] sm:$0xff]
    %v3148 = vld [vmem:[#allocation5 + $0x1a8] sm:$0xff]
    %v3149 = vld [vmem:[#allocation5 + $0x1b0] sm:$0xff]
    %v3150 = vld [vmem:[#allocation5 + $0x1b8] sm:$0xff]
    %v3151 = vld [vmem:[#allocation5 + $0x1c0] sm:$0xff]
    %v3152 = vld [vmem:[#allocation5 + $0x1c8] sm:$0xff]
    %v3153 = vld [vmem:[#allocation5 + $0x1d0] sm:$0xff]
    %v3154 = vld [vmem:[#allocation5 + $0x1d8] sm:$0xff]
    %v3155 = vld [vmem:[#allocation5 + $0x1e0] sm:$0xff]
    %v3156 = vld [vmem:[#allocation5 + $0x1e8] sm:$0xff]
    %v3157 = vld [vmem:[#allocation5 + $0x1f0] sm:$0xff]
    %v3158 = vld [vmem:[#allocation5 + $0x1f8] sm:$0xff]
    %v3159 = vld [vmem:[#allocation5 + $0x200] sm:$0xff]
    %v3160 = vld [vmem:[#allocation5 + $0x208] sm:$0xff]
    %v3161 = vld [vmem:[#allocation5 + $0x210] sm:$0xff]
    %v3162 = vld [vmem:[#allocation5 + $0x218] sm:$0xff]
    %v3163 = vld [vmem:[#allocation5 + $0x220] sm:$0xff]
    %v3164 = vld [vmem:[#allocation5 + $0x228] sm:$0xff]
    %v3165 = vld [vmem:[#allocation5 + $0x230] sm:$0xff]
    %v3166 = vld [vmem:[#allocation5 + $0x238] sm:$0xff]
    %v3167 = vld [vmem:[#allocation5 + $0x240] sm:$0xff]
    %v3168 = vld [vmem:[#allocation5 + $0x248] sm:$0xff]
    %v3169 = vld [vmem:[#allocation5 + $0x250] sm:$0xff]
    %v3170 = vld [vmem:[#allocation5 + $0x258] sm:$0xff]
    %v3171 = vld [vmem:[#allocation5 + $0x260] sm:$0xff]
    %v3172 = vld [vmem:[#allocation5 + $0x268] sm:$0xff]
    %v3173 = vld [vmem:[#allocation5 + $0x270] sm:$0xff]
    %v3174 = vld [vmem:[#allocation5 + $0x278] sm:$0xff]
    %v3175 = vld [vmem:[#allocation5 + $0x280] sm:$0xff]
    %v3176 = vld [vmem:[#allocation5 + $0x288] sm:$0xff]
    %v3177 = vld [vmem:[#allocation5 + $0x290] sm:$0xff]
    %v3178 = vld [vmem:[#allocation5 + $0x298] sm:$0xff]
    %v3179 = vld [vmem:[#allocation5 + $0x2a0] sm:$0xff]
    %v3180 = vld [vmem:[#allocation5 + $0x2a8] sm:$0xff]
    %v3181 = vld [vmem:[#allocation5 + $0x2b0] sm:$0xff]
    %v3182 = vld [vmem:[#allocation5 + $0x2b8] sm:$0xff]
    %v3183 = vld [vmem:[#allocation5 + $0x2c0] sm:$0xff]
    %v3184 = vld [vmem:[#allocation5 + $0x2c8] sm:$0xff]
    %v3185 = vld [vmem:[#allocation5 + $0x2d0] sm:$0xff]
    %v3186 = vld [vmem:[#allocation5 + $0x2d8] sm:$0xff]
    %v3187 = vld [vmem:[#allocation5 + $0x2e0] sm:$0xff]
    %v3188 = vld [vmem:[#allocation5 + $0x2e8] sm:$0xff]
    %v3189 = vld [vmem:[#allocation5 + $0x2f0] sm:$0xff]
    %v3190 = vld [vmem:[#allocation5 + $0x2f8] sm:$0xff]
    %v3191 = vld [vmem:[#allocation5 + $0x300] sm:$0xff]
    %v3192 = vld [vmem:[#allocation5 + $0x308] sm:$0xff]
    %v3193 = vld [vmem:[#allocation5 + $0x310] sm:$0xff]
    %v3194 = vld [vmem:[#allocation5 + $0x318] sm:$0xff]
    %v3195 = vld [vmem:[#allocation5 + $0x320] sm:$0xff]
    %v3196 = vld [vmem:[#allocation5 + $0x328] sm:$0xff]
    %v3197 = vld [vmem:[#allocation5 + $0x330] sm:$0xff]
    %v3198 = vld [vmem:[#allocation5 + $0x338] sm:$0xff]
    %v3199 = vld [vmem:[#allocation5 + $0x340] sm:$0xff]
    %v3200 = vld [vmem:[#allocation5 + $0x348] sm:$0xff]
    %v3201 = vld [vmem:[#allocation5 + $0x350] sm:$0xff]
    %v3202 = vld [vmem:[#allocation5 + $0x358] sm:$0xff]
    %v3203 = vld [vmem:[#allocation5 + $0x360] sm:$0xff]
    %v3204 = vld [vmem:[#allocation5 + $0x368] sm:$0xff]
    %v3205 = vld [vmem:[#allocation5 + $0x370] sm:$0xff]
    %v3206 = vld [vmem:[#allocation5 + $0x378] sm:$0xff]
    %v3207 = vld [vmem:[#allocation5 + $0x380] sm:$0xff]
    %v3208 = vld [vmem:[#allocation5 + $0x388] sm:$0xff]
    %v3209 = vld [vmem:[#allocation5 + $0x390] sm:$0xff]
    %v3210 = vld [vmem:[#allocation5 + $0x398] sm:$0xff]
    %v3211 = vld [vmem:[#allocation5 + $0x3a0] sm:$0xff]
    %v3212 = vld [vmem:[#allocation5 + $0x3a8] sm:$0xff]
    %v3213 = vld [vmem:[#allocation5 + $0x3b0] sm:$0xff]
    %v3214 = vld [vmem:[#allocation5 + $0x3b8] sm:$0xff]
    %v3215 = vld [vmem:[#allocation5 + $0x3c0] sm:$0xff]
    %v3216 = vld [vmem:[#allocation5 + $0x3c8] sm:$0xff]
    %v3217 = vld [vmem:[#allocation5 + $0x3d0] sm:$0xff]
    %v3218 = vld [vmem:[#allocation5 + $0x3d8] sm:$0xff]
    %v3219 = vld [vmem:[#allocation5 + $0x3e0] sm:$0xff]
    %v3220 = vld [vmem:[#allocation5 + $0x3e8] sm:$0xff]
    %v3221 = vld [vmem:[#allocation5 + $0x3f0] sm:$0xff]
    %v3222 = vld [vmem:[#allocation5 + $0x3f8] sm:$0xff]
    %v3223 = vld [vmem:[%s7] sm:$0x1]
    %v3225 = vlaneseq
    %v3226 = vshrl.u32 %v3225, 7
    %v3227 = vsub.s32 0, %v3226
    %v3228 = vrot.slane %v3223, %v3227
    %v3232 = vcombine.high %v3093, %v3093
    %v3234 = vunpack.c.l.s4 1983009808
    %v3235 = vunpack.c.0.s8 %v3234
    %v3236 = vlaneseq
    %v3237 = vshrl.u32 %v3236, 7
    %v3238 = vsub.s32 %v3235, %v3237
    %v3239 = vrot.slane %v3093, %v3238
    %v3241 = vunpack.c.l.s4 1983009808
    %v3242 = vunpack.c.0.s8 %v3241
    %v3243 = vlaneseq
    %v3244 = vshrl.u32 %v3243, 7
    %v3245 = vsub.s32 %v3242, %v3244
    %v3246 = vrot.slane %v3232, %v3245
    %v3247 = vcombine.high %v3239, %v3239
    %v3248 = vcombine.high %v3246, %v3246
    %v3249 = vcombine.high %v3094, %v3094
    %v3251 = vunpack.c.l.s4 1983009808
    %v3252 = vunpack.c.0.s8 %v3251
    %v3253 = vlaneseq
    %v3254 = vshrl.u32 %v3253, 7
    %v3255 = vsub.s32 %v3252, %v3254
    %v3256 = vrot.slane %v3094, %v3255
    %v3258 = vunpack.c.l.s4 1983009808
    %v3259 = vunpack.c.0.s8 %v3258
    %v3260 = vlaneseq
    %v3261 = vshrl.u32 %v3260, 7
    %v3262 = vsub.s32 %v3259, %v3261
    %v3263 = vrot.slane %v3249, %v3262
    %v3264 = vcombine.high %v3256, %v3256
    %v3265 = vcombine.high %v3263, %v3263
    %3274 = vmatprep.subr.mxu0 0.0
    %3275 = vmatpush1.msra.mxu0 %v3095
    %3276 = vmatprep.subr.mxu0 0.0
    %3277 = vmatpush1.msra.mxu0 %v3096
    %3278 = vmatprep.subr.mxu0 0.0
    %3279 = vmatpush1.msra.mxu0 %v3097
    %3280 = vmatprep.subr.mxu0 0.0
    %3281 = vmatpush1.msra.mxu0 %v3098
    %3282 = vmatprep.subr.mxu0 0.0
    %3283 = vmatpush1.msra.mxu0 %v3099
    %3284 = vmatprep.subr.mxu0 0.0
    %3285 = vmatpush1.msra.mxu0 %v3100
    %3286 = vmatprep.subr.mxu0 0.0
    %3287 = vmatpush1.msra.mxu0 %v3101
    %3288 = vmatprep.subr.mxu0 0.0
    %3289 = vmatpush1.msra.mxu0 %v3102
    %3290 = vmatprep.subr.mxu0 0.0
    %3291 = vmatpush1.msra.mxu0 %v3103
    %3292 = vmatprep.subr.mxu0 0.0
    %3293 = vmatpush1.msra.mxu0 %v3104
    %3294 = vmatprep.subr.mxu0 0.0
    %3295 = vmatpush1.msra.mxu0 %v3105
    %3296 = vmatprep.subr.mxu0 0.0
    %3297 = vmatpush1.msra.mxu0 %v3106
    %3298 = vmatprep.subr.mxu0 0.0
    %3299 = vmatpush1.msra.mxu0 %v3107
    %3300 = vmatprep.subr.mxu0 0.0
    %3301 = vmatpush1.msra.mxu0 %v3108
    %3302 = vmatprep.subr.mxu0 0.0
    %3303 = vmatpush1.msra.mxu0 %v3109
    %3304 = vmatprep.subr.mxu0 0.0
    %3305 = vmatpush1.msra.mxu0 %v3110
    %3306 = vmatprep.subr.mxu0 0.0
    %3307 = vmatpush1.msra.mxu0 %v3111
    %3308 = vmatprep.subr.mxu0 0.0
    %3309 = vmatpush1.msra.mxu0 %v3112
    %3310 = vmatprep.subr.mxu0 0.0
    %3311 = vmatpush1.msra.mxu0 %v3113
    %3312 = vmatprep.subr.mxu0 0.0
    %3313 = vmatpush1.msra.mxu0 %v3114
    %3314 = vmatprep.subr.mxu0 0.0
    %3315 = vmatpush1.msra.mxu0 %v3115
    %3316 = vmatprep.subr.mxu0 0.0
    %3317 = vmatpush1.msra.mxu0 %v3116
    %3318 = vmatprep.subr.mxu0 0.0
    %3319 = vmatpush1.msra.mxu0 %v3117
    %3320 = vmatprep.subr.mxu0 0.0
    %3321 = vmatpush1.msra.mxu0 %v3118
    %3322 = vmatprep.subr.mxu0 0.0
    %3323 = vmatpush1.msra.mxu0 %v3119
    %3324 = vmatprep.subr.mxu0 0.0
    %3325 = vmatpush1.msra.mxu0 %v3120
    %3326 = vmatprep.subr.mxu0 0.0
    %3327 = vmatpush1.msra.mxu0 %v3121
    %3328 = vmatprep.subr.mxu0 0.0
    %3329 = vmatpush1.msra.mxu0 %v3122
    %3330 = vmatprep.subr.mxu0 0.0
    %3331 = vmatpush1.msra.mxu0 %v3123
    %3332 = vmatprep.subr.mxu0 0.0
    %3333 = vmatpush1.msra.mxu0 %v3124
    %3334 = vmatprep.subr.mxu0 0.0
    %3335 = vmatpush1.msra.mxu0 %v3125
    %3336 = vmatprep.subr.mxu0 0.0
    %3337 = vmatpush1.msra.mxu0 %v3126
    %3338 = vmatprep.mubr.f32.mxu0 %v3247
    %3339 = vmatmul.mubr.f32.gmra.mrb[0].mxu0 %v3239
    %v3340 = vpop.f32.mrb[0].mxu0
    %v3341 = vadd.f32 %v3228, %v3340
    %v3342 = vpop.f32.mrb[0].mxu0
    %3343 = vdwg.mxu0
    %3344 = vmatprep.subr.mxu0 0.0
    %3345 = vmatpush1.msra.mxu0 %v3127
    %3346 = vmatprep.subr.mxu0 0.0
    %3347 = vmatpush1.msra.mxu0 %v3128
    %3348 = vmatprep.subr.mxu0 0.0
    %3349 = vmatpush1.msra.mxu0 %v3129
    %3350 = vmatprep.subr.mxu0 0.0
    %3351 = vmatpush1.msra.mxu0 %v3130
    %3352 = vmatprep.subr.mxu0 0.0
    %3353 = vmatpush1.msra.mxu0 %v3131
    %3354 = vmatprep.subr.mxu0 0.0
    %3355 = vmatpush1.msra.mxu0 %v3132
    %3356 = vmatprep.subr.mxu0 0.0
    %3357 = vmatpush1.msra.mxu0 %v3133
    %3358 = vmatprep.subr.mxu0 0.0
    %3359 = vmatpush1.msra.mxu0 %v3134
    %3360 = vmatprep.subr.mxu0 0.0
    %3361 = vmatpush1.msra.mxu0 %v3135
    %3362 = vmatprep.subr.mxu0 0.0
    %3363 = vmatpush1.msra.mxu0 %v3136
    %3364 = vmatprep.subr.mxu0 0.0
    %3365 = vmatpush1.msra.mxu0 %v3137
    %3366 = vmatprep.subr.mxu0 0.0
    %3367 = vmatpush1.msra.mxu0 %v3138
    %3368 = vmatprep.subr.mxu0 0.0
    %3369 = vmatpush1.msra.mxu0 %v3139
    %3370 = vmatprep.subr.mxu0 0.0
    %3371 = vmatpush1.msra.mxu0 %v3140
    %3372 = vmatprep.subr.mxu0 0.0
    %3373 = vmatpush1.msra.mxu0 %v3141
    %3374 = vmatprep.subr.mxu0 0.0
    %3375 = vmatpush1.msra.mxu0 %v3142
    %3376 = vmatprep.subr.mxu0 0.0
    %3377 = vmatpush1.msra.mxu0 %v3143
    %3378 = vmatprep.subr.mxu0 0.0
    %3379 = vmatpush1.msra.mxu0 %v3144
    %3380 = vmatprep.subr.mxu0 0.0
    %3381 = vmatpush1.msra.mxu0 %v3145
    %3382 = vmatprep.subr.mxu0 0.0
    %3383 = vmatpush1.msra.mxu0 %v3146
    %3384 = vmatprep.subr.mxu0 0.0
    %3385 = vmatpush1.msra.mxu0 %v3147
    %3386 = vmatprep.subr.mxu0 0.0
    %3387 = vmatpush1.msra.mxu0 %v3148
    %3388 = vmatprep.subr.mxu0 0.0
    %3389 = vmatpush1.msra.mxu0 %v3149
    %3390 = vmatprep.subr.mxu0 0.0
    %3391 = vmatpush1.msra.mxu0 %v3150
    %3392 = vmatprep.subr.mxu0 0.0
    %3393 = vmatpush1.msra.mxu0 %v3151
    %3394 = vmatprep.subr.mxu0 0.0
    %3395 = vmatpush1.msra.mxu0 %v3152
    %3396 = vmatprep.subr.mxu0 0.0
    %3397 = vmatpush1.msra.mxu0 %v3153
    %3398 = vmatprep.subr.mxu0 0.0
    %3399 = vmatpush1.msra.mxu0 %v3154
    %3400 = vmatprep.subr.mxu0 0.0
    %3401 = vmatpush1.msra.mxu0 %v3155
    %3402 = vmatprep.subr.mxu0 0.0
    %3403 = vmatpush1.msra.mxu0 %v3156
    %3404 = vmatprep.subr.mxu0 0.0
    %3405 = vmatpush1.msra.mxu0 %v3157
    %3406 = vmatprep.subr.mxu0 0.0
    %3407 = vmatpush1.msra.mxu0 %v3158
    %3408 = vmatprep.mubr.f32.mxu0 %v3248
    %3409 = vmatmul.mubr.f32.gmra.mrb[0].mxu0 %v3246
    %v3410 = vpop.f32.mrb[0].mxu0
    %v3411 = vadd.f32 %v3341, %v3410
    %v3412 = vpop.f32.mrb[0].mxu0
    %3413 = vdwg.mxu0
    %3414 = vmatprep.subr.mxu0 0.0
    %3415 = vmatpush1.msra.mxu0 %v3159
    %3416 = vmatprep.subr.mxu0 0.0
    %3417 = vmatpush1.msra.mxu0 %v3160
    %3418 = vmatprep.subr.mxu0 0.0
    %3419 = vmatpush1.msra.mxu0 %v3161
    %3420 = vmatprep.subr.mxu0 0.0
    %3421 = vmatpush1.msra.mxu0 %v3162
    %3422 = vmatprep.subr.mxu0 0.0
    %3423 = vmatpush1.msra.mxu0 %v3163
    %3424 = vmatprep.subr.mxu0 0.0
    %3425 = vmatpush1.msra.mxu0 %v3164
    %3426 = vmatprep.subr.mxu0 0.0
    %3427 = vmatpush1.msra.mxu0 %v3165
    %3428 = vmatprep.subr.mxu0 0.0
    %3429 = vmatpush1.msra.mxu0 %v3166
    %3430 = vmatprep.subr.mxu0 0.0
    %3431 = vmatpush1.msra.mxu0 %v3167
    %3432 = vmatprep.subr.mxu0 0.0
    %3433 = vmatpush1.msra.mxu0 %v3168
    %3434 = vmatprep.subr.mxu0 0.0
    %3435 = vmatpush1.msra.mxu0 %v3169
    %3436 = vmatprep.subr.mxu0 0.0
    %3437 = vmatpush1.msra.mxu0 %v3170
    %3438 = vmatprep.subr.mxu0 0.0
    %3439 = vmatpush1.msra.mxu0 %v3171
    %3440 = vmatprep.subr.mxu0 0.0
    %3441 = vmatpush1.msra.mxu0 %v3172
    %3442 = vmatprep.subr.mxu0 0.0
    %3443 = vmatpush1.msra.mxu0 %v3173
    %3444 = vmatprep.subr.mxu0 0.0
    %3445 = vmatpush1.msra.mxu0 %v3174
    %3446 = vmatprep.subr.mxu0 0.0
    %3447 = vmatpush1.msra.mxu0 %v3175
    %3448 = vmatprep.subr.mxu0 0.0
    %3449 = vmatpush1.msra.mxu0 %v3176
    %3450 = vmatprep.subr.mxu0 0.0
    %3451 = vmatpush1.msra.mxu0 %v3177
    %3452 = vmatprep.subr.mxu0 0.0
    %3453 = vmatpush1.msra.mxu0 %v3178
    %3454 = vmatprep.subr.mxu0 0.0
    %3455 = vmatpush1.msra.mxu0 %v3179
    %3456 = vmatprep.subr.mxu0 0.0
    %3457 = vmatpush1.msra.mxu0 %v3180
    %3458 = vmatprep.subr.mxu0 0.0
    %3459 = vmatpush1.msra.mxu0 %v3181
    %3460 = vmatprep.subr.mxu0 0.0
    %3461 = vmatpush1.msra.mxu0 %v3182
    %3462 = vmatprep.subr.mxu0 0.0
    %3463 = vmatpush1.msra.mxu0 %v3183
    %3464 = vmatprep.subr.mxu0 0.0
    %3465 = vmatpush1.msra.mxu0 %v3184
    %3466 = vmatprep.subr.mxu0 0.0
    %3467 = vmatpush1.msra.mxu0 %v3185
    %3468 = vmatprep.subr.mxu0 0.0
    %3469 = vmatpush1.msra.mxu0 %v3186
    %3470 = vmatprep.subr.mxu0 0.0
    %3471 = vmatpush1.msra.mxu0 %v3187
    %3472 = vmatprep.subr.mxu0 0.0
    %3473 = vmatpush1.msra.mxu0 %v3188
    %3474 = vmatprep.subr.mxu0 0.0
    %3475 = vmatpush1.msra.mxu0 %v3189
    %3476 = vmatprep.subr.mxu0 0.0
    %3477 = vmatpush1.msra.mxu0 %v3190
    %3478 = vmatprep.mubr.f32.mxu0 %v3264
    %3479 = vmatmul.mubr.f32.gmra.mrb[0].mxu0 %v3256
    %v3480 = vpop.f32.mrb[0].mxu0
    %v3481 = vadd.f32 %v3411, %v3480
    %v3482 = vpop.f32.mrb[0].mxu0
    %3483 = vdwg.mxu0
    %3484 = vmatprep.subr.mxu0 0.0
    %3485 = vmatpush1.msra.mxu0 %v3191
    %3486 = vmatprep.subr.mxu0 0.0
    %3487 = vmatpush1.msra.mxu0 %v3192
    %3488 = vmatprep.subr.mxu0 0.0
    %3489 = vmatpush1.msra.mxu0 %v3193
    %3490 = vmatprep.subr.mxu0 0.0
    %3491 = vmatpush1.msra.mxu0 %v3194
    %3492 = vmatprep.subr.mxu0 0.0
    %3493 = vmatpush1.msra.mxu0 %v3195
    %3494 = vmatprep.subr.mxu0 0.0
    %3495 = vmatpush1.msra.mxu0 %v3196
    %3496 = vmatprep.subr.mxu0 0.0
    %3497 = vmatpush1.msra.mxu0 %v3197
    %3498 = vmatprep.subr.mxu0 0.0
    %3499 = vmatpush1.msra.mxu0 %v3198
    %3500 = vmatprep.subr.mxu0 0.0
    %3501 = vmatpush1.msra.mxu0 %v3199
    %3502 = vmatprep.subr.mxu0 0.0
    %3503 = vmatpush1.msra.mxu0 %v3200
    %3504 = vmatprep.subr.mxu0 0.0
    %3505 = vmatpush1.msra.mxu0 %v3201
    %3506 = vmatprep.subr.mxu0 0.0
    %3507 = vmatpush1.msra.mxu0 %v3202
    %3508 = vmatprep.subr.mxu0 0.0
    %3509 = vmatpush1.msra.mxu0 %v3203
    %3510 = vmatprep.subr.mxu0 0.0
    %3511 = vmatpush1.msra.mxu0 %v3204
    %3512 = vmatprep.subr.mxu0 0.0
    %3513 = vmatpush1.msra.mxu0 %v3205
    %3514 = vmatprep.subr.mxu0 0.0
    %3515 = vmatpush1.msra.mxu0 %v3206
    %3516 = vmatprep.subr.mxu0 0.0
    %3517 = vmatpush1.msra.mxu0 %v3207
    %3518 = vmatprep.subr.mxu0 0.0
    %3519 = vmatpush1.msra.mxu0 %v3208
    %3520 = vmatprep.subr.mxu0 0.0
    %3521 = vmatpush1.msra.mxu0 %v3209
    %3522 = vmatprep.subr.mxu0 0.0
    %3523 = vmatpush1.msra.mxu0 %v3210
    %3524 = vmatprep.subr.mxu0 0.0
    %3525 = vmatpush1.msra.mxu0 %v3211
    %3526 = vmatprep.subr.mxu0 0.0
    %3527 = vmatpush1.msra.mxu0 %v3212
    %3528 = vmatprep.subr.mxu0 0.0
    %3529 = vmatpush1.msra.mxu0 %v3213
    %3530 = vmatprep.subr.mxu0 0.0
    %3531 = vmatpush1.msra.mxu0 %v3214
    %3532 = vmatprep.subr.mxu0 0.0
    %3533 = vmatpush1.msra.mxu0 %v3215
    %3534 = vmatprep.subr.mxu0 0.0
    %3535 = vmatpush1.msra.mxu0 %v3216
    %3536 = vmatprep.subr.mxu0 0.0
    %3537 = vmatpush1.msra.mxu0 %v3217
    %3538 = vmatprep.subr.mxu0 0.0
    %3539 = vmatpush1.msra.mxu0 %v3218
    %3540 = vmatprep.subr.mxu0 0.0
    %3541 = vmatpush1.msra.mxu0 %v3219
    %3542 = vmatprep.subr.mxu0 0.0
    %3543 = vmatpush1.msra.mxu0 %v3220
    %3544 = vmatprep.subr.mxu0 0.0
    %3545 = vmatpush1.msra.mxu0 %v3221
    %3546 = vmatprep.subr.mxu0 0.0
    %3547 = vmatpush1.msra.mxu0 %v3222
    %3548 = vmatprep.mubr.f32.mxu0 %v3265
    %3549 = vmatmul.mubr.f32.gmra.mrb[0].mxu0 %v3263
    %v3550 = vpop.f32.mrb[0].mxu0
    %v3551 = vadd.f32 %v3481, %v3550
    %v3552 = vpop.f32.mrb[0].mxu0
    %3553 = vdwg.mxu0
    %v3554 = vmul.f32 %v3551, 0.5
    %v3555 = vtanh.pop %v3554
    %v3556 = vmul.f32 %v3555, 0.5
    %v3557 = vadd.f32 %v3556, 0.5
    %v3558 = vld [vmem:[%s8] sm:$0xff]
    %v3559 = vld [vmem:[%s8 + $0x8] sm:$0xff]
    %v3560 = vld [vmem:[%s8 + $0x10] sm:$0xff]
    %v3561 = vld [vmem:[%s8 + $0x18] sm:$0xff]
    %v3562 = vld [vmem:[%s8 + $0x20] sm:$0xff]
    %v3563 = vld [vmem:[%s8 + $0x28] sm:$0xff]
    %v3564 = vld [vmem:[%s8 + $0x30] sm:$0xff]
    %v3565 = vld [vmem:[%s8 + $0x38] sm:$0xff]
    %v3566 = vld [vmem:[%s8 + $0x40] sm:$0xff]
    %v3567 = vld [vmem:[%s8 + $0x48] sm:$0xff]
    %v3568 = vld [vmem:[%s8 + $0x50] sm:$0xff]
    %v3569 = vld [vmem:[%s8 + $0x58] sm:$0xff]
    %v3570 = vld [vmem:[%s8 + $0x60] sm:$0xff]
    %v3571 = vld [vmem:[%s8 + $0x68] sm:$0xff]
    %v3572 = vld [vmem:[%s8 + $0x70] sm:$0xff]
    %v3573 = vld [vmem:[%s8 + $0x78] sm:$0xff]
    %v3574 = vld [vmem:[%s9] sm:$0x1]
    %v3576 = vlaneseq
    %v3577 = vshrl.u32 %v3576, 7
    %v3578 = vsub.s32 0, %v3577
    %v3579 = vrot.slane %v3574, %v3578
    %3581 = vmatprep.subr.mxu0 0.0
    %3582 = vmatpush1.msra.mxu0 %v3558
    %3583 = vmatprep.subr.mxu0 0.0
    %3584 = vmatpush1.msra.mxu0 %v3559
    %3585 = vmatprep.subr.mxu0 0.0
    %3586 = vmatpush1.msra.mxu0 %v3560
    %3587 = vmatprep.subr.mxu0 0.0
    %3588 = vmatpush1.msra.mxu0 %v3561
    %3589 = vmatprep.subr.mxu0 0.0
    %3590 = vmatpush1.msra.mxu0 %v3562
    %3591 = vmatprep.subr.mxu0 0.0
    %3592 = vmatpush1.msra.mxu0 %v3563
    %3593 = vmatprep.subr.mxu0 0.0
    %3594 = vmatpush1.msra.mxu0 %v3564
    %3595 = vmatprep.subr.mxu0 0.0
    %3596 = vmatpush1.msra.mxu0 %v3565
    %3597 = vmatprep.subr.mxu0 0.0
    %3598 = vmatpush1.msra.mxu0 %v3566
    %3599 = vmatprep.subr.mxu0 0.0
    %3600 = vmatpush1.msra.mxu0 %v3567
    %3601 = vmatprep.subr.mxu0 0.0
    %3602 = vmatpush1.msra.mxu0 %v3568
    %3603 = vmatprep.subr.mxu0 0.0
    %3604 = vmatpush1.msra.mxu0 %v3569
    %3605 = vmatprep.subr.mxu0 0.0
    %3606 = vmatpush1.msra.mxu0 %v3570
    %3607 = vmatprep.subr.mxu0 0.0
    %3608 = vmatpush1.msra.mxu0 %v3571
    %3609 = vmatprep.subr.mxu0 0.0
    %3610 = vmatpush1.msra.mxu0 %v3572
    %3611 = vmatprep.subr.mxu0 0.0
    %3612 = vmatpush1.msra.mxu0 %v3573
    %3613 = vmatprep.subr.mxu0 0.0
    %3614 = vmatpush1.msra.mxu0 0.0
    %3615 = vmatprep.subr.mxu0 0.0
    %3616 = vmatpush1.msra.mxu0 0.0
    %3617 = vmatprep.subr.mxu0 0.0
    %3618 = vmatpush1.msra.mxu0 0.0
    %3619 = vmatprep.subr.mxu0 0.0
    %3620 = vmatpush1.msra.mxu0 0.0
    %3621 = vmatprep.subr.mxu0 0.0
    %3622 = vmatpush1.msra.mxu0 0.0
    %3623 = vmatprep.subr.mxu0 0.0
    %3624 = vmatpush1.msra.mxu0 0.0
    %3625 = vmatprep.subr.mxu0 0.0
    %3626 = vmatpush1.msra.mxu0 0.0
    %3627 = vmatprep.subr.mxu0 0.0
    %3628 = vmatpush1.msra.mxu0 0.0
    %3629 = vmatprep.subr.mxu0 0.0
    %3630 = vmatpush1.msra.mxu0 0.0
    %3631 = vmatprep.subr.mxu0 0.0
    %3632 = vmatpush1.msra.mxu0 0.0
    %3633 = vmatprep.subr.mxu0 0.0
    %3634 = vmatpush1.msra.mxu0 0.0
    %3635 = vmatprep.subr.mxu0 0.0
    %3636 = vmatpush1.msra.mxu0 0.0
    %3637 = vmatprep.subr.mxu0 0.0
    %3638 = vmatpush1.msra.mxu0 0.0
    %3639 = vmatprep.subr.mxu0 0.0
    %3640 = vmatpush1.msra.mxu0 0.0
    %3641 = vmatprep.subr.mxu0 0.0
    %3642 = vmatpush1.msra.mxu0 0.0
    %3643 = vmatprep.subr.mxu0 0.0
    %3644 = vmatpush1.msra.mxu0 0.0
    %3645 = vmatprep.mubr.f32.mxu0 0.0
    %3646 = vmatmul.mubr.f32.gmra.mrb[0].mxu0 %v3557
    %v3647 = vpop.f32.mrb[0].mxu0
    %v3648 = vadd.f32 %v3579, %v3647
    %v3649 = vpop.f32.mrb[0].mxu0
    %3650 = vdwg.mxu0
    %vm3651 = vcmask 25600
    %3652 = vst.msk [vmem:[#allocation8] sm:$0x3] %vm3651, %v3648
    // Predicated region
    $region46: #{cnn_wen_forward.1} parent=1 // pred_check
      _
    $region47: #{cnn_wen_forward.1} parent=1 // pred_check_branch
      %3654 = sbr.rel (0) target = $region49
    $region48: #{cnn_wen_forward.1} parent=1 // pred_region
      %s3656 = ssub.s32 32, 32
      %3657 = vsyncadd [#allocation7], %s3656
      %s3659 = sshll.u32 [#allocation8], 4
      %s3660 = int_to_ptr.vmem [resolvable:$true] %s3659
      %3662 = dma.vmem_to_hbm [thread:$0]  %s3660, 32, %s10, [#allocation7]
    $region49: #{cnn_wen_forward.1} parent=1 // pred_fallthru
      _
    // Predicated region
    $region50: #{cnn_wen_forward.1} parent=1 // pred_check
      _
    $region51: #{cnn_wen_forward.1} parent=1 // pred_check_branch
      %3664 = sbr.rel (0) target = $region53
    $region52: #{cnn_wen_forward.1} parent=1 // pred_region
      %3665 = dma.done [#allocation7], 32
    $region53: #{cnn_wen_forward.1} parent=1 // pred_fallthru
      _
    %3666 = vsyncpa [#allocation6], 1
    %3667 = vsyncpa [#allocation7], 1

</llo_original>
